<compile_context>
chip_gen: v6e
topology: v6e:2x2x1
jax: 0.10.0
libtpu: 0.0.40
codegen_flags: <defaults>
</compile_context>

<pallas_src>
import functools

import jax
import jax.numpy as jnp
from jax import lax
from jax.experimental import pallas as pl
from jax.experimental.pallas import tpu as pltpu


def _gru_cell(gi, gh, h, Hp):
    # PyTorch gate order (r, z, n); slices are 128-lane aligned (Hp % 128 == 0).
    r = jax.nn.sigmoid(gi[:, 0:Hp] + gh[:, 0:Hp])
    z = jax.nn.sigmoid(gi[:, Hp:2 * Hp] + gh[:, Hp:2 * Hp])
    n = jnp.tanh(gi[:, 2 * Hp:3 * Hp] + r * gh[:, 2 * Hp:3 * Hp])
    return (1.0 - z) * n + z * h


# ---------------------------------------------------------------------------
# Kernel A (v5e / v6e / unknown): single program, fwd + bwd interleaved.
# ---------------------------------------------------------------------------
def gru_bidir_kernel(x_ref, lens_ref, wi_ref, wh_ref, bi_ref, bh_ref,
                     h_ref, gi_ref, *, fuse_hidden, unroll):
    # x_ref:    (T*Bp, Ep)        bf16 embedded inputs (time-major, batch folded)
    # lens_ref: (Bp, 1)           int32 sequence lengths
    # wi_ref:   (Ep, 6*Hp)        bf16 input weights  [fwd r|z|n , bwd r|z|n]
    # wh_ref:   (2, Hp, 3*Hp) bf16   (fuse_hidden=False)
    #           (2*Hp, 6*Hp) bf16   block-diagonal (fuse_hidden=True)
    # bi_ref:   (1, 6*Hp)         f32 input biases
    # bh_ref:   (2, 1, 3*Hp)      f32 hidden biases
    # h_ref:    (2, Bp, Hp)       f32 final hidden states (fwd, bwd)
    # gi_ref:   (T*Bp, 6*Hp)      bf16 scratch: precomputed input-side gates
    Bp = h_ref.shape[1]
    Hp = h_ref.shape[2]
    T = x_ref.shape[0] // Bp
    G = 3 * Hp

    # Hoisted input-side gates: one large MXU matmul for all timesteps, all 3
    # gates and both directions (does not depend on h). f32 accumulation, bf16
    # slab storage (halves VMEM footprint and per-step load bytes).
    gi_ref[...] = (
        jnp.dot(x_ref[...], wi_ref[...], preferred_element_type=jnp.float32)
        + bi_ref[...]).astype(jnp.bfloat16)

    lens = lens_ref[...]                  # (Bp, 1) int32, hoisted
    bh_f = bh_ref[0]                      # (1, G) f32
    bh_b = bh_ref[1]

    if not fuse_hidden:
        # Keep the hidden-weight RHS resident across the whole recurrence.
        wh_f = wh_ref[0]                  # (Hp, G) bf16
        wh_b = wh_ref[1]

    def step(i, carry):
        h_f, h_b = carry
        t_b = T - 1 - i

        row_f = pl.multiple_of(i * Bp, Bp)
        row_b = pl.multiple_of(t_b * Bp, Bp)
        # Lane-sliced loads: only this direction's G lanes (128-aligned slice).
        gi_f = gi_ref[pl.ds(row_f, Bp), 0:G].astype(jnp.float32)
        gi_b = gi_ref[pl.ds(row_b, Bp), G:2 * G].astype(jnp.float32)

        if fuse_hidden:
            # v6e/v7x-style: one block-diagonal matmul, K = 2*Hp fills the
            # 256-deep MXU, one push/pop instead of two.
            h_cat = jnp.concatenate([h_f, h_b], axis=1).astype(jnp.bfloat16)
            gh = jnp.dot(h_cat, wh_ref[...],
                         preferred_element_type=jnp.float32)
            gh_f = gh[:, 0:G] + bh_f
            gh_b = gh[:, G:2 * G] + bh_b
        else:
            # v5e: 128-deep MXU, keep separate fused-gate dots per direction.
            gh_f = jnp.dot(h_f.astype(jnp.bfloat16), wh_f,
                           preferred_element_type=jnp.float32) + bh_f
            gh_b = jnp.dot(h_b.astype(jnp.bfloat16), wh_b,
                           preferred_element_type=jnp.float32) + bh_b

        h_f_new = _gru_cell(gi_f, gh_f, h_f, Hp)
        h_b_new = _gru_cell(gi_b, gh_b, h_b, Hp)

        # pack_padded_sequence semantics: state only updates for t < length[b]
        # (reverse direction effectively starts, with h=0, at t = length-1).
        h_f = jnp.where(i < lens, h_f_new, h_f)
        h_b = jnp.where(t_b < lens, h_b_new, h_b)
        return (h_f, h_b)

    h0 = jnp.zeros((Bp, Hp), jnp.float32)
    h_f, h_b = lax.fori_loop(0, T, step, (h0, h0), unroll=unroll)
    h_ref[0] = h_f
    h_ref[1] = h_b


# ---------------------------------------------------------------------------
# Kernel B (v7x): one direction per grid program; grid=(2,) is "parallel" so
# the fwd / bwd recurrences run on the two TensorCores concurrently.
# ---------------------------------------------------------------------------
def gru_dir_kernel(x_ref, lens_ref, wi_ref, wh_ref, bi_ref, bh_ref,
                   h_ref, gi_ref, *, unroll):
    # x_ref:   (T*Bp, Ep) bf16   lens_ref: (Bp, 1) int32
    # wi_ref:  (1, Ep, 3Hp) bf16 wh_ref: (1, Hp, 3Hp) bf16
    # bi_ref:  (1, 1, 3Hp) f32   bh_ref: (1, 1, 3Hp) f32
    # h_ref:   (1, Bp, Hp) f32   gi_ref: (T*Bp, 3Hp) bf16 scratch
    d = pl.program_id(0)
    Bp = h_ref.shape[1]
    Hp = h_ref.shape[2]
    T = x_ref.shape[0] // Bp

    # Hoisted input-side gates for this direction, all timesteps.
    gi_ref[...] = (
        jnp.dot(x_ref[...], wi_ref[0], preferred_element_type=jnp.float32)
        + bi_ref[0]).astype(jnp.bfloat16)

    lens = lens_ref[...]          # (Bp, 1) int32
    wh = wh_ref[0]                # (Hp, 3Hp) bf16, hoisted out of the loop
    bh = bh_ref[0]                # (1, 3Hp) f32

    def step(i, h):
        # forward walks t = 0..T-1, backward walks t = T-1..0
        t = jnp.where(d == 0, i, T - 1 - i)
        row = pl.multiple_of(t * Bp, Bp)
        gi = gi_ref[pl.ds(row, Bp), :].astype(jnp.float32)
        gh = jnp.dot(h.astype(jnp.bfloat16), wh,
                     preferred_element_type=jnp.float32) + bh
        h_new = _gru_cell(gi, gh, h, Hp)
        # pack_padded_sequence: state only advances on valid timesteps.
        return jnp.where(t < lens, h_new, h)

    h0 = jnp.zeros((Bp, Hp), jnp.float32)
    h_ref[0] = lax.fori_loop(0, T, step, h0, unroll=unroll)


# ---------------------------------------------------------------------------
# Host-side packing / dispatch helpers.
# ---------------------------------------------------------------------------
def _round_up(x, m):
    return (x + m - 1) // m * m


def _tpu_generation():
    try:
        kind = jax.devices()[0].device_kind.lower()
    except Exception:
        return 0
    for g in (7, 6, 5, 4, 3, 2):
        if str(g) in kind:
            return g
    return 0


def _vmem_limit_bytes(buffer_bytes, gen):
    # Derive the scoped-VMEM limit from actual resident buffers (default scoped
    # limit is only 16 MiB on v5e); leave headroom for Mosaic internal scratch
    # and stay under physical VMEM (64 MiB on v7x, 128 MiB on v5e/v6e).
    phys = (64 if gen >= 7 else 128) * 1024 * 1024
    need = int(buffer_bytes * 1.5) + (4 << 20)
    return max(16 << 20, min(need, phys - (8 << 20)))


def _pack_gates(w, H, Hp, in_dim, in_pad):
    # w: (3H, in_dim) PyTorch GRU layout, gate order (r, z, n).
    # -> (in_pad, 3*Hp): transposed, per-gate zero-padded, gates concatenated.
    gates = []
    for g in range(3):
        wg = w[g * H:(g + 1) * H, :].T                       # (in_dim, H)
        wg = jnp.pad(wg, ((0, in_pad - in_dim), (0, Hp - H)))
        gates.append(wg)
    return jnp.concatenate(gates, axis=1)                     # (in_pad, 3Hp)


def _pack_bias(b, H, Hp):
    # b: (3H,) -> (3Hp,), per-gate zero-padded.
    return jnp.concatenate(
        [jnp.pad(b[g * H:(g + 1) * H], (0, Hp - H)) for g in range(3)])


def encoder_forward(embedding, w_ih, w_hh, b_ih, b_hh,
                    encoder_inputs, encoder_lengths):
    """Encoder.forward: embed -> pack -> bidirectional GRU -> final hidden h.

    embedding:        (V, E) f32
    w_ih / w_hh:      (2, 3H, E) / (2, 3H, H) f32   (PyTorch GRU layout, [fwd, bwd])
    b_ih / b_hh:      (2, 3H) f32
    encoder_inputs:   (T, B) int32
    encoder_lengths:  (B,)   int32
    returns h:        (2, B, H) f32  (num_layers * num_directions = 2)
    """
    T, B = encoder_inputs.shape
    E = embedding.shape[1]
    H = w_hh.shape[-1]

    gen = _tpu_generation()

    # Batch padded to 16 sublanes so row slices of the bf16 gi slab stay
    # aligned to its packed (16, 128) tile; hidden/embed lane-padded to 128.
    Bp = _round_up(max(B, 16), 16)
    Hp = _round_up(max(H, 128), 128)
    Ep = _round_up(max(E, 128), 128)
    G = 3 * Hp

    # Embedding lookup + padding (plain-JAX glue); matmul operands go to bf16.
    x = jnp.take(embedding, encoder_inputs, axis=0)                 # (T, B, E)
    x = jnp.pad(x, ((0, 0), (0, Bp - B), (0, Ep - E))).astype(jnp.bfloat16)
    x2d = x.reshape(T * Bp, Ep)

    lens = jnp.pad(encoder_lengths.astype(jnp.int32), (0, Bp - B))
    lens = lens.reshape(Bp, 1)                                      # (Bp, 1)

    # Repack PyTorch weights per direction: transpose, per-gate zero-pad,
    # fuse the 3 gates along lanes.
    wi_d = jnp.stack([_pack_gates(w_ih[d], H, Hp, E, Ep)
                      for d in range(2)]).astype(jnp.bfloat16)      # (2, Ep, G)
    wh_d = jnp.stack([_pack_gates(w_hh[d], H, Hp, H, Hp)
                      for d in range(2)]).astype(jnp.bfloat16)      # (2, Hp, G)
    bi_d = jnp.stack([_pack_bias(b_ih[d], H, Hp)
                      for d in range(2)]).reshape(2, 1, G).astype(jnp.float32)
    bh_d = jnp.stack([_pack_bias(b_hh[d], H, Hp)
                      for d in range(2)]).reshape(2, 1, G).astype(jnp.float32)

    unroll = True if T <= 16 else 4

    if gen >= 7:
        # v7x: shard the two independent directions across the 2 TensorCores.
        gi_bytes = T * Bp * G * 2
        buf_bytes = (sum(int(a.size) * a.dtype.itemsize
                         for a in (x2d, lens, wi_d, wh_d, bi_d, bh_d))
                     + 2 * Bp * Hp * 4 + gi_bytes)
        h = pl.pallas_call(
            functools.partial(gru_dir_kernel, unroll=unroll),
            out_shape=jax.ShapeDtypeStruct((2, Bp, Hp), jnp.float32),
            grid_spec=pltpu.PrefetchScalarGridSpec(
                num_scalar_prefetch=0,
                grid=(2,),
                in_specs=[
                    pl.BlockSpec((T * Bp, Ep), lambda d: (0, 0)),
                    pl.BlockSpec((Bp, 1), lambda d: (0, 0)),
                    pl.BlockSpec((1, Ep, G), lambda d: (d, 0, 0)),
                    pl.BlockSpec((1, Hp, G), lambda d: (d, 0, 0)),
                    pl.BlockSpec((1, 1, G), lambda d: (d, 0, 0)),
                    pl.BlockSpec((1, 1, G), lambda d: (d, 0, 0)),
                ],
                out_specs=pl.BlockSpec((1, Bp, Hp), lambda d: (d, 0, 0)),
                scratch_shapes=[pltpu.VMEM((T * Bp, G), jnp.bfloat16)]),
            compiler_params=pltpu.CompilerParams(
                dimension_semantics=("parallel",),
                vmem_limit_bytes=_vmem_limit_bytes(buf_bytes, gen)),
        )(x2d, lens, wi_d, wh_d, bi_d, bh_d)
    else:
        # v5e / v6e / unknown: single program, directions interleaved.
        fuse_hidden = gen >= 6   # 256-deep MXU: fill K with both directions
        wi_cat = jnp.concatenate([wi_d[0], wi_d[1]], axis=1)         # (Ep, 2G)
        bi_cat = jnp.concatenate([bi_d[0], bi_d[1]], axis=1)         # (1, 2G)
        if fuse_hidden:
            zero = jnp.zeros((Hp, G), jnp.bfloat16)
            wh_arg = jnp.concatenate(
                [jnp.concatenate([wh_d[0], zero], axis=1),
                 jnp.concatenate([zero, wh_d[1]], axis=1)],
                axis=0)                                               # (2Hp, 2G)
        else:
            wh_arg = wh_d                                             # (2, Hp, G)

        gi_bytes = T * Bp * 2 * G * 2
        buf_bytes = (sum(int(a.size) * a.dtype.itemsize
                         for a in (x2d, lens, wi_cat, wh_arg, bi_cat, bh_d))
                     + 2 * Bp * Hp * 4 + gi_bytes)
        h = pl.pallas_call(
            functools.partial(gru_bidir_kernel,
                              fuse_hidden=fuse_hidden, unroll=unroll),
            out_shape=jax.ShapeDtypeStruct((2, Bp, Hp), jnp.float32),
            in_specs=[pl.BlockSpec(memory_space=pltpu.MemorySpace.VMEM)] * 6,
            out_specs=pl.BlockSpec(memory_space=pltpu.MemorySpace.VMEM),
            scratch_shapes=[pltpu.VMEM((T * Bp, 2 * G), jnp.bfloat16)],
            compiler_params=pltpu.CompilerParams(
                vmem_limit_bytes=_vmem_limit_bytes(buf_bytes, gen)),
        )(x2d, lens, wi_cat, wh_arg, bi_cat, bh_d)

    return h[:, :B, :H]


if __name__ == "__main__":
    # Small, module-consistent shapes.
    vocab_size, embed_size, hidden_size = 50, 16, 32
    T, B = 8, 2

    key = jax.random.PRNGKey(0)
    k_emb, k_wi, k_wh, k_bi, k_bh, k_ids, k_len = jax.random.split(key, 7)

    # Deterministic synthetic parameters in PyTorch nn.GRU layout:
    # weight_ih_l0{,_reverse}: (3H, E), weight_hh: (3H, H), biases: (3H,).
    scale = 1.0 / (hidden_size ** 0.5)
    embedding = jax.random.normal(k_emb, (vocab_size, embed_size), jnp.float32)
    w_ih = jax.random.uniform(k_wi, (2, 3 * hidden_size, embed_size),
                              jnp.float32, -scale, scale)
    w_hh = jax.random.uniform(k_wh, (2, 3 * hidden_size, hidden_size),
                              jnp.float32, -scale, scale)
    b_ih = jax.random.uniform(k_bi, (2, 3 * hidden_size),
                              jnp.float32, -scale, scale)
    b_hh = jax.random.uniform(k_bh, (2, 3 * hidden_size),
                              jnp.float32, -scale, scale)

    # Batch: (T, B) token ids and per-sequence lengths (enforce_sorted=False).
    encoder_inputs = jax.random.randint(k_ids, (T, B), 0, vocab_size, jnp.int32)
    encoder_lengths = jnp.array([5, T], dtype=jnp.int32)

    h = encoder_forward(embedding, w_ih, w_hh, b_ih, b_hh,
                        encoder_inputs, encoder_lengths)
    h = jax.block_until_ready(h)
    assert h.shape == (2, B, hidden_size)
    assert bool(jnp.all(jnp.isfinite(h)))
    print("KERNEL_OK")
</pallas_src>

<mosaic_0001>
module attributes {stable_mosaic.version = 11 : i64} {
  func.func @gru_bidir_kernel(%arg0: memref<128x128xbf16, #tpu.memory_space<vmem>>, %arg1: memref<16x1xi32, #tpu.memory_space<vmem>>, %arg2: memref<128x768xbf16, #tpu.memory_space<vmem>>, %arg3: memref<2x128x384xbf16, #tpu.memory_space<vmem>>, %arg4: memref<1x768xf32, #tpu.memory_space<vmem>>, %arg5: memref<2x1x384xf32, #tpu.memory_space<vmem>>, %arg6: memref<2x16x128xf32, #tpu.memory_space<vmem>>, %arg7: memref<128x768xbf16, #tpu.memory_space<vmem>>) attributes {dimension_semantics = [], scalar_prefetch = 0 : i64, scratch_operands = 1 : i64, tpu.core_type = #tpu.core_type<tc>} {
    %c0 = arith.constant 0 : index
    %c0_0 = arith.constant 0 : index
    %0 = vector.load %arg0[%c0, %c0_0] : memref<128x128xbf16, #tpu.memory_space<vmem>>, vector<128x128xbf16>
    %c0_1 = arith.constant 0 : index
    %c0_2 = arith.constant 0 : index
    %1 = vector.load %arg2[%c0_1, %c0_2] : memref<128x768xbf16, #tpu.memory_space<vmem>>, vector<128x768xbf16>
    %cst = arith.constant dense<0.000000e+00> : vector<128x768xf32>
    %2 = tpu.matmul %0, %1, %cst {dimension_numbers = #tpu.dot_dimension_numbers<[1], [0], [0], [1], [0, 0, 1, 1], [], []>} : vector<128x128xbf16>, vector<128x768xbf16>, vector<128x768xf32> -> vector<128x768xf32>
    %c0_3 = arith.constant 0 : index
    %c0_4 = arith.constant 0 : index
    %3 = vector.load %arg4[%c0_3, %c0_4] : memref<1x768xf32, #tpu.memory_space<vmem>>, vector<1x768xf32>
    %4 = vector.broadcast %3 : vector<1x768xf32> to vector<128x768xf32>
    %5 = arith.addf %2, %4 : vector<128x768xf32>
    %6 = arith.truncf %5 : vector<128x768xf32> to vector<128x768xbf16>
    %c0_5 = arith.constant 0 : index
    %c0_6 = arith.constant 0 : index
    %7 = vector.load %arg7[%c0_5, %c0_6] : memref<128x768xbf16, #tpu.memory_space<vmem>>, vector<128x768xbf16>
    tpu.vector_store %arg7[%c0_5, %c0_6], %6 {strides = array<i32>} : memref<128x768xbf16, #tpu.memory_space<vmem>>, vector<128x768xbf16>,
    %c0_7 = arith.constant 0 : index
    %c0_8 = arith.constant 0 : index
    %8 = vector.load %arg1[%c0_7, %c0_8] : memref<16x1xi32, #tpu.memory_space<vmem>>, vector<16x1xi32>
    %c0_9 = arith.constant 0 : index
    %c0_10 = arith.constant 0 : index
    %c0_11 = arith.constant 0 : index
    %9 = vector.load %arg5[%c0_9, %c0_10, %c0_11] : memref<2x1x384xf32, #tpu.memory_space<vmem>>, vector<1x1x384xf32>
    %10 = vector.shape_cast %9 : vector<1x1x384xf32> to vector<1x384xf32>
    %c1 = arith.constant 1 : index
    %c0_12 = arith.constant 0 : index
    %c0_13 = arith.constant 0 : index
    %11 = vector.load %arg5[%c1, %c0_12, %c0_13] : memref<2x1x384xf32, #tpu.memory_space<vmem>>, vector<1x1x384xf32>
    %12 = vector.shape_cast %11 : vector<1x1x384xf32> to vector<1x384xf32>
    %c0_14 = arith.constant 0 : index
    %c0_15 = arith.constant 0 : index
    %c0_16 = arith.constant 0 : index
    %13 = vector.load %arg3[%c0_14, %c0_15, %c0_16] : memref<2x128x384xbf16, #tpu.memory_space<vmem>>, vector<1x128x384xbf16>
    %14 = vector.shape_cast %13 : vector<1x128x384xbf16> to vector<128x384xbf16>
    %c1_17 = arith.constant 1 : index
    %c0_18 = arith.constant 0 : index
    %c0_19 = arith.constant 0 : index
    %15 = vector.load %arg3[%c1_17, %c0_18, %c0_19] : memref<2x128x384xbf16, #tpu.memory_space<vmem>>, vector<1x128x384xbf16>
    %16 = vector.shape_cast %15 : vector<1x128x384xbf16> to vector<128x384xbf16>
    %cst_20 = arith.constant 0.000000e+00 : f32
    %17 = vector.broadcast %cst_20 : f32 to vector<16x128xf32>
    %c0_i32 = arith.constant 0 : i32
    %c7_i32 = arith.constant 7 : i32
    %18 = arith.subi %c7_i32, %c0_i32 : i32
    %c16_i32 = arith.constant 16 : i32
    %19 = arith.muli %c0_i32, %c16_i32 : i32
    %20 = tpu.assume_multiple %19, 16 : i32
    %c16_i32_21 = arith.constant 16 : i32
    %21 = arith.muli %18, %c16_i32_21 : i32
    %22 = tpu.assume_multiple %21, 16 : i32
    %23 = arith.index_cast %20 : i32 to index
    %c0_22 = arith.constant 0 : index
    %24 = vector.load %arg7[%23, %c0_22] : memref<128x768xbf16, #tpu.memory_space<vmem>>, vector<16x384xbf16>
    %25 = arith.extf %24 : vector<16x384xbf16> to vector<16x384xf32>
    %26 = arith.index_cast %22 : i32 to index
    %c384 = arith.constant 384 : index
    %27 = vector.load %arg7[%26, %c384] : memref<128x768xbf16, #tpu.memory_space<vmem>>, vector<16x384xbf16>
    %28 = arith.extf %27 : vector<16x384xbf16> to vector<16x384xf32>
    %29 = arith.truncf %17 : vector<16x128xf32> to vector<16x128xbf16>
    %cst_23 = arith.constant dense<0.000000e+00> : vector<16x384xf32>
    %30 = tpu.matmul %29, %14, %cst_23 {dimension_numbers = #tpu.dot_dimension_numbers<[1], [0], [0], [1], [0, 0, 1, 1], [], []>} : vector<16x128xbf16>, vector<128x384xbf16>, vector<16x384xf32> -> vector<16x384xf32>
    %31 = vector.broadcast %10 : vector<1x384xf32> to vector<16x384xf32>
    %32 = arith.addf %30, %31 : vector<16x384xf32>
    %33 = arith.truncf %17 : vector<16x128xf32> to vector<16x128xbf16>
    %cst_24 = arith.constant dense<0.000000e+00> : vector<16x384xf32>
    %34 = tpu.matmul %33, %16, %cst_24 {dimension_numbers = #tpu.dot_dimension_numbers<[1], [0], [0], [1], [0, 0, 1, 1], [], []>} : vector<16x128xbf16>, vector<128x384xbf16>, vector<16x384xf32> -> vector<16x384xf32>
    %35 = vector.broadcast %12 : vector<1x384xf32> to vector<16x384xf32>
    %36 = arith.addf %34, %35 : vector<16x384xf32>
    %37 = vector.extract_strided_slice %25 {offsets = [0, 0], sizes = [16, 128], strides = [1, 1]} : vector<16x384xf32> to vector<16x128xf32>
    %38 = vector.extract_strided_slice %32 {offsets = [0, 0], sizes = [16, 128], strides = [1, 1]} : vector<16x384xf32> to vector<16x128xf32>
    %39 = arith.addf %37, %38 : vector<16x128xf32>
    %40 = arith.negf %39 : vector<16x128xf32>
    %41 = math.exp %40 : vector<16x128xf32>
    %cst_25 = arith.constant 1.000000e+00 : f32
    %42 = vector.broadcast %cst_25 : f32 to vector<16x128xf32>
    %43 = arith.addf %42, %41 : vector<16x128xf32>
    %44 = arith.divf %42, %43 : vector<16x128xf32>
    %45 = vector.extract_strided_slice %25 {offsets = [0, 128], sizes = [16, 128], strides = [1, 1]} : vector<16x384xf32> to vector<16x128xf32>
    %46 = vector.extract_strided_slice %32 {offsets = [0, 128], sizes = [16, 128], strides = [1, 1]} : vector<16x384xf32> to vector<16x128xf32>
    %47 = arith.addf %45, %46 : vector<16x128xf32>
    %48 = arith.negf %47 : vector<16x128xf32>
    %49 = math.exp %48 : vector<16x128xf32>
    %cst_26 = arith.constant 1.000000e+00 : f32
    %50 = vector.broadcast %cst_26 : f32 to vector<16x128xf32>
    %51 = arith.addf %50, %49 : vector<16x128xf32>
    %52 = arith.divf %50, %51 : vector<16x128xf32>
    %53 = vector.extract_strided_slice %25 {offsets = [0, 256], sizes = [16, 128], strides = [1, 1]} : vector<16x384xf32> to vector<16x128xf32>
    %54 = vector.extract_strided_slice %32 {offsets = [0, 256], sizes = [16, 128], strides = [1, 1]} : vector<16x384xf32> to vector<16x128xf32>
    %55 = arith.mulf %44, %54 : vector<16x128xf32>
    %56 = arith.addf %53, %55 : vector<16x128xf32>
    %57 = math.tanh %56 : vector<16x128xf32>
    %cst_27 = arith.constant 1.000000e+00 : f32
    %58 = vector.broadcast %cst_27 : f32 to vector<16x128xf32>
    %59 = arith.subf %58, %52 : vector<16x128xf32>
    %60 = arith.mulf %59, %57 : vector<16x128xf32>
    %61 = arith.mulf %52, %17 : vector<16x128xf32>
    %62 = arith.addf %60, %61 : vector<16x128xf32>
    %63 = vector.extract_strided_slice %28 {offsets = [0, 0], sizes = [16, 128], strides = [1, 1]} : vector<16x384xf32> to vector<16x128xf32>
    %64 = vector.extract_strided_slice %36 {offsets = [0, 0], sizes = [16, 128], strides = [1, 1]} : vector<16x384xf32> to vector<16x128xf32>
    %65 = arith.addf %63, %64 : vector<16x128xf32>
    %66 = arith.negf %65 : vector<16x128xf32>
    %67 = math.exp %66 : vector<16x128xf32>
    %cst_28 = arith.constant 1.000000e+00 : f32
    %68 = vector.broadcast %cst_28 : f32 to vector<16x128xf32>
    %69 = arith.addf %68, %67 : vector<16x128xf32>
    %70 = arith.divf %68, %69 : vector<16x128xf32>
    %71 = vector.extract_strided_slice %28 {offsets = [0, 128], sizes = [16, 128], strides = [1, 1]} : vector<16x384xf32> to vector<16x128xf32>
    %72 = vector.extract_strided_slice %36 {offsets = [0, 128], sizes = [16, 128], strides = [1, 1]} : vector<16x384xf32> to vector<16x128xf32>
    %73 = arith.addf %71, %72 : vector<16x128xf32>
    %74 = arith.negf %73 : vector<16x128xf32>
    %75 = math.exp %74 : vector<16x128xf32>
    %cst_29 = arith.constant 1.000000e+00 : f32
    %76 = vector.broadcast %cst_29 : f32 to vector<16x128xf32>
    %77 = arith.addf %76, %75 : vector<16x128xf32>
    %78 = arith.divf %76, %77 : vector<16x128xf32>
    %79 = vector.extract_strided_slice %28 {offsets = [0, 256], sizes = [16, 128], strides = [1, 1]} : vector<16x384xf32> to vector<16x128xf32>
    %80 = vector.extract_strided_slice %36 {offsets = [0, 256], sizes = [16, 128], strides = [1, 1]} : vector<16x384xf32> to vector<16x128xf32>
    %81 = arith.mulf %70, %80 : vector<16x128xf32>
    %82 = arith.addf %79, %81 : vector<16x128xf32>
    %83 = math.tanh %82 : vector<16x128xf32>
    %cst_30 = arith.constant 1.000000e+00 : f32
    %84 = vector.broadcast %cst_30 : f32 to vector<16x128xf32>
    %85 = arith.subf %84, %78 : vector<16x128xf32>
    %86 = arith.mulf %85, %83 : vector<16x128xf32>
    %87 = arith.mulf %78, %17 : vector<16x128xf32>
    %88 = arith.addf %86, %87 : vector<16x128xf32>
    %89 = vector.broadcast %c0_i32 : i32 to vector<16x1xi32>
    %90 = arith.cmpi slt, %89, %8 : vector<16x1xi32>
    %91 = vector.shape_cast %90 : vector<16x1xi1> to vector<16x1xi1>
    %92 = vector.broadcast %91 : vector<16x1xi1> to vector<16x128xi1>
    %93 = arith.select %92, %62, %17 : vector<16x128xi1>, vector<16x128xf32>
    %94 = vector.broadcast %18 : i32 to vector<16x1xi32>
    %95 = arith.cmpi slt, %94, %8 : vector<16x1xi32>
    %96 = vector.shape_cast %95 : vector<16x1xi1> to vector<16x1xi1>
    %97 = vector.broadcast %96 : vector<16x1xi1> to vector<16x128xi1>
    %98 = arith.select %97, %88, %17 : vector<16x128xi1>, vector<16x128xf32>
    %c1_i32 = arith.constant 1 : i32
    %c7_i32_31 = arith.constant 7 : i32
    %99 = arith.subi %c7_i32_31, %c1_i32 : i32
    %c16_i32_32 = arith.constant 16 : i32
    %100 = arith.muli %c1_i32, %c16_i32_32 : i32
    %101 = tpu.assume_multiple %100, 16 : i32
    %c16_i32_33 = arith.constant 16 : i32
    %102 = arith.muli %99, %c16_i32_33 : i32
    %103 = tpu.assume_multiple %102, 16 : i32
    %104 = arith.index_cast %101 : i32 to index
    %c0_34 = arith.constant 0 : index
    %105 = vector.load %arg7[%104, %c0_34] : memref<128x768xbf16, #tpu.memory_space<vmem>>, vector<16x384xbf16>
    %106 = arith.extf %105 : vector<16x384xbf16> to vector<16x384xf32>
    %107 = arith.index_cast %103 : i32 to index
    %c384_35 = arith.constant 384 : index
    %108 = vector.load %arg7[%107, %c384_35] : memref<128x768xbf16, #tpu.memory_space<vmem>>, vector<16x384xbf16>
    %109 = arith.extf %108 : vector<16x384xbf16> to vector<16x384xf32>
    %110 = arith.truncf %93 : vector<16x128xf32> to vector<16x128xbf16>
    %cst_36 = arith.constant dense<0.000000e+00> : vector<16x384xf32>
    %111 = tpu.matmul %110, %14, %cst_36 {dimension_numbers = #tpu.dot_dimension_numbers<[1], [0], [0], [1], [0, 0, 1, 1], [], []>} : vector<16x128xbf16>, vector<128x384xbf16>, vector<16x384xf32> -> vector<16x384xf32>
    %112 = vector.broadcast %10 : vector<1x384xf32> to vector<16x384xf32>
    %113 = arith.addf %111, %112 : vector<16x384xf32>
    %114 = arith.truncf %98 : vector<16x128xf32> to vector<16x128xbf16>
    %cst_37 = arith.constant dense<0.000000e+00> : vector<16x384xf32>
    %115 = tpu.matmul %114, %16, %cst_37 {dimension_numbers = #tpu.dot_dimension_numbers<[1], [0], [0], [1], [0, 0, 1, 1], [], []>} : vector<16x128xbf16>, vector<128x384xbf16>, vector<16x384xf32> -> vector<16x384xf32>
    %116 = vector.broadcast %12 : vector<1x384xf32> to vector<16x384xf32>
    %117 = arith.addf %115, %116 : vector<16x384xf32>
    %118 = vector.extract_strided_slice %106 {offsets = [0, 0], sizes = [16, 128], strides = [1, 1]} : vector<16x384xf32> to vector<16x128xf32>
    %119 = vector.extract_strided_slice %113 {offsets = [0, 0], sizes = [16, 128], strides = [1, 1]} : vector<16x384xf32> to vector<16x128xf32>
    %120 = arith.addf %118, %119 : vector<16x128xf32>
    %121 = arith.negf %120 : vector<16x128xf32>
    %122 = math.exp %121 : vector<16x128xf32>
    %cst_38 = arith.constant 1.000000e+00 : f32
    %123 = vector.broadcast %cst_38 : f32 to vector<16x128xf32>
    %124 = arith.addf %123, %122 : vector<16x128xf32>
    %125 = arith.divf %123, %124 : vector<16x128xf32>
    %126 = vector.extract_strided_slice %106 {offsets = [0, 128], sizes = [16, 128], strides = [1, 1]} : vector<16x384xf32> to vector<16x128xf32>
    %127 = vector.extract_strided_slice %113 {offsets = [0, 128], sizes = [16, 128], strides = [1, 1]} : vector<16x384xf32> to vector<16x128xf32>
    %128 = arith.addf %126, %127 : vector<16x128xf32>
    %129 = arith.negf %128 : vector<16x128xf32>
    %130 = math.exp %129 : vector<16x128xf32>
    %cst_39 = arith.constant 1.000000e+00 : f32
    %131 = vector.broadcast %cst_39 : f32 to vector<16x128xf32>
    %132 = arith.addf %131, %130 : vector<16x128xf32>
    %133 = arith.divf %131, %132 : vector<16x128xf32>
    %134 = vector.extract_strided_slice %106 {offsets = [0, 256], sizes = [16, 128], strides = [1, 1]} : vector<16x384xf32> to vector<16x128xf32>
    %135 = vector.extract_strided_slice %113 {offsets = [0, 256], sizes = [16, 128], strides = [1, 1]} : vector<16x384xf32> to vector<16x128xf32>
    %136 = arith.mulf %125, %135 : vector<16x128xf32>
    %137 = arith.addf %134, %136 : vector<16x128xf32>
    %138 = math.tanh %137 : vector<16x128xf32>
    %cst_40 = arith.constant 1.000000e+00 : f32
    %139 = vector.broadcast %cst_40 : f32 to vector<16x128xf32>
    %140 = arith.subf %139, %133 : vector<16x128xf32>
    %141 = arith.mulf %140, %138 : vector<16x128xf32>
    %142 = arith.mulf %133, %93 : vector<16x128xf32>
    %143 = arith.addf %141, %142 : vector<16x128xf32>
    %144 = vector.extract_strided_slice %109 {offsets = [0, 0], sizes = [16, 128], strides = [1, 1]} : vector<16x384xf32> to vector<16x128xf32>
    %145 = vector.extract_strided_slice %117 {offsets = [0, 0], sizes = [16, 128], strides = [1, 1]} : vector<16x384xf32> to vector<16x128xf32>
    %146 = arith.addf %144, %145 : vector<16x128xf32>
    %147 = arith.negf %146 : vector<16x128xf32>
    %148 = math.exp %147 : vector<16x128xf32>
    %cst_41 = arith.constant 1.000000e+00 : f32
    %149 = vector.broadcast %cst_41 : f32 to vector<16x128xf32>
    %150 = arith.addf %149, %148 : vector<16x128xf32>
    %151 = arith.divf %149, %150 : vector<16x128xf32>
    %152 = vector.extract_strided_slice %109 {offsets = [0, 128], sizes = [16, 128], strides = [1, 1]} : vector<16x384xf32> to vector<16x128xf32>
    %153 = vector.extract_strided_slice %117 {offsets = [0, 128], sizes = [16, 128], strides = [1, 1]} : vector<16x384xf32> to vector<16x128xf32>
    %154 = arith.addf %152, %153 : vector<16x128xf32>
    %155 = arith.negf %154 : vector<16x128xf32>
    %156 = math.exp %155 : vector<16x128xf32>
    %cst_42 = arith.constant 1.000000e+00 : f32
    %157 = vector.broadcast %cst_42 : f32 to vector<16x128xf32>
    %158 = arith.addf %157, %156 : vector<16x128xf32>
    %159 = arith.divf %157, %158 : vector<16x128xf32>
    %160 = vector.extract_strided_slice %109 {offsets = [0, 256], sizes = [16, 128], strides = [1, 1]} : vector<16x384xf32> to vector<16x128xf32>
    %161 = vector.extract_strided_slice %117 {offsets = [0, 256], sizes = [16, 128], strides = [1, 1]} : vector<16x384xf32> to vector<16x128xf32>
    %162 = arith.mulf %151, %161 : vector<16x128xf32>
    %163 = arith.addf %160, %162 : vector<16x128xf32>
    %164 = math.tanh %163 : vector<16x128xf32>
    %cst_43 = arith.constant 1.000000e+00 : f32
    %165 = vector.broadcast %cst_43 : f32 to vector<16x128xf32>
    %166 = arith.subf %165, %159 : vector<16x128xf32>
    %167 = arith.mulf %166, %164 : vector<16x128xf32>
    %168 = arith.mulf %159, %98 : vector<16x128xf32>
    %169 = arith.addf %167, %168 : vector<16x128xf32>
    %170 = vector.broadcast %c1_i32 : i32 to vector<16x1xi32>
    %171 = arith.cmpi slt, %170, %8 : vector<16x1xi32>
    %172 = vector.shape_cast %171 : vector<16x1xi1> to vector<16x1xi1>
    %173 = vector.broadcast %172 : vector<16x1xi1> to vector<16x128xi1>
    %174 = arith.select %173, %143, %93 : vector<16x128xi1>, vector<16x128xf32>
    %175 = vector.broadcast %99 : i32 to vector<16x1xi32>
    %176 = arith.cmpi slt, %175, %8 : vector<16x1xi32>
    %177 = vector.shape_cast %176 : vector<16x1xi1> to vector<16x1xi1>
    %178 = vector.broadcast %177 : vector<16x1xi1> to vector<16x128xi1>
    %179 = arith.select %178, %169, %98 : vector<16x128xi1>, vector<16x128xf32>
    %c2_i32 = arith.constant 2 : i32
    %c7_i32_44 = arith.constant 7 : i32
    %180 = arith.subi %c7_i32_44, %c2_i32 : i32
    %c16_i32_45 = arith.constant 16 : i32
    %181 = arith.muli %c2_i32, %c16_i32_45 : i32
    %182 = tpu.assume_multiple %181, 16 : i32
    %c16_i32_46 = arith.constant 16 : i32
    %183 = arith.muli %180, %c16_i32_46 : i32
    %184 = tpu.assume_multiple %183, 16 : i32
    %185 = arith.index_cast %182 : i32 to index
    %c0_47 = arith.constant 0 : index
    %186 = vector.load %arg7[%185, %c0_47] : memref<128x768xbf16, #tpu.memory_space<vmem>>, vector<16x384xbf16>
    %187 = arith.extf %186 : vector<16x384xbf16> to vector<16x384xf32>
    %188 = arith.index_cast %184 : i32 to index
    %c384_48 = arith.constant 384 : index
    %189 = vector.load %arg7[%188, %c384_48] : memref<128x768xbf16, #tpu.memory_space<vmem>>, vector<16x384xbf16>
    %190 = arith.extf %189 : vector<16x384xbf16> to vector<16x384xf32>
    %191 = arith.truncf %174 : vector<16x128xf32> to vector<16x128xbf16>
    %cst_49 = arith.constant dense<0.000000e+00> : vector<16x384xf32>
    %192 = tpu.matmul %191, %14, %cst_49 {dimension_numbers = #tpu.dot_dimension_numbers<[1], [0], [0], [1], [0, 0, 1, 1], [], []>} : vector<16x128xbf16>, vector<128x384xbf16>, vector<16x384xf32> -> vector<16x384xf32>
    %193 = vector.broadcast %10 : vector<1x384xf32> to vector<16x384xf32>
    %194 = arith.addf %192, %193 : vector<16x384xf32>
    %195 = arith.truncf %179 : vector<16x128xf32> to vector<16x128xbf16>
    %cst_50 = arith.constant dense<0.000000e+00> : vector<16x384xf32>
    %196 = tpu.matmul %195, %16, %cst_50 {dimension_numbers = #tpu.dot_dimension_numbers<[1], [0], [0], [1], [0, 0, 1, 1], [], []>} : vector<16x128xbf16>, vector<128x384xbf16>, vector<16x384xf32> -> vector<16x384xf32>
    %197 = vector.broadcast %12 : vector<1x384xf32> to vector<16x384xf32>
    %198 = arith.addf %196, %197 : vector<16x384xf32>
    %199 = vector.extract_strided_slice %187 {offsets = [0, 0], sizes = [16, 128], strides = [1, 1]} : vector<16x384xf32> to vector<16x128xf32>
    %200 = vector.extract_strided_slice %194 {offsets = [0, 0], sizes = [16, 128], strides = [1, 1]} : vector<16x384xf32> to vector<16x128xf32>
    %201 = arith.addf %199, %200 : vector<16x128xf32>
    %202 = arith.negf %201 : vector<16x128xf32>
    %203 = math.exp %202 : vector<16x128xf32>
    %cst_51 = arith.constant 1.000000e+00 : f32
    %204 = vector.broadcast %cst_51 : f32 to vector<16x128xf32>
    %205 = arith.addf %204, %203 : vector<16x128xf32>
    %206 = arith.divf %204, %205 : vector<16x128xf32>
    %207 = vector.extract_strided_slice %187 {offsets = [0, 128], sizes = [16, 128], strides = [1, 1]} : vector<16x384xf32> to vector<16x128xf32>
    %208 = vector.extract_strided_slice %194 {offsets = [0, 128], sizes = [16, 128], strides = [1, 1]} : vector<16x384xf32> to vector<16x128xf32>
    %209 = arith.addf %207, %208 : vector<16x128xf32>
    %210 = arith.negf %209 : vector<16x128xf32>
    %211 = math.exp %210 : vector<16x128xf32>
    %cst_52 = arith.constant 1.000000e+00 : f32
    %212 = vector.broadcast %cst_52 : f32 to vector<16x128xf32>
    %213 = arith.addf %212, %211 : vector<16x128xf32>
    %214 = arith.divf %212, %213 : vector<16x128xf32>
    %215 = vector.extract_strided_slice %187 {offsets = [0, 256], sizes = [16, 128], strides = [1, 1]} : vector<16x384xf32> to vector<16x128xf32>
    %216 = vector.extract_strided_slice %194 {offsets = [0, 256], sizes = [16, 128], strides = [1, 1]} : vector<16x384xf32> to vector<16x128xf32>
    %217 = arith.mulf %206, %216 : vector<16x128xf32>
    %218 = arith.addf %215, %217 : vector<16x128xf32>
    %219 = math.tanh %218 : vector<16x128xf32>
    %cst_53 = arith.constant 1.000000e+00 : f32
    %220 = vector.broadcast %cst_53 : f32 to vector<16x128xf32>
    %221 = arith.subf %220, %214 : vector<16x128xf32>
    %222 = arith.mulf %221, %219 : vector<16x128xf32>
    %223 = arith.mulf %214, %174 : vector<16x128xf32>
    %224 = arith.addf %222, %223 : vector<16x128xf32>
    %225 = vector.extract_strided_slice %190 {offsets = [0, 0], sizes = [16, 128], strides = [1, 1]} : vector<16x384xf32> to vector<16x128xf32>
    %226 = vector.extract_strided_slice %198 {offsets = [0, 0], sizes = [16, 128], strides = [1, 1]} : vector<16x384xf32> to vector<16x128xf32>
    %227 = arith.addf %225, %226 : vector<16x128xf32>
    %228 = arith.negf %227 : vector<16x128xf32>
    %229 = math.exp %228 : vector<16x128xf32>
    %cst_54 = arith.constant 1.000000e+00 : f32
    %230 = vector.broadcast %cst_54 : f32 to vector<16x128xf32>
    %231 = arith.addf %230, %229 : vector<16x128xf32>
    %232 = arith.divf %230, %231 : vector<16x128xf32>
    %233 = vector.extract_strided_slice %190 {offsets = [0, 128], sizes = [16, 128], strides = [1, 1]} : vector<16x384xf32> to vector<16x128xf32>
    %234 = vector.extract_strided_slice %198 {offsets = [0, 128], sizes = [16, 128], strides = [1, 1]} : vector<16x384xf32> to vector<16x128xf32>
    %235 = arith.addf %233, %234 : vector<16x128xf32>
    %236 = arith.negf %235 : vector<16x128xf32>
    %237 = math.exp %236 : vector<16x128xf32>
    %cst_55 = arith.constant 1.000000e+00 : f32
    %238 = vector.broadcast %cst_55 : f32 to vector<16x128xf32>
    %239 = arith.addf %238, %237 : vector<16x128xf32>
    %240 = arith.divf %238, %239 : vector<16x128xf32>
    %241 = vector.extract_strided_slice %190 {offsets = [0, 256], sizes = [16, 128], strides = [1, 1]} : vector<16x384xf32> to vector<16x128xf32>
    %242 = vector.extract_strided_slice %198 {offsets = [0, 256], sizes = [16, 128], strides = [1, 1]} : vector<16x384xf32> to vector<16x128xf32>
    %243 = arith.mulf %232, %242 : vector<16x128xf32>
    %244 = arith.addf %241, %243 : vector<16x128xf32>
    %245 = math.tanh %244 : vector<16x128xf32>
    %cst_56 = arith.constant 1.000000e+00 : f32
    %246 = vector.broadcast %cst_56 : f32 to vector<16x128xf32>
    %247 = arith.subf %246, %240 : vector<16x128xf32>
    %248 = arith.mulf %247, %245 : vector<16x128xf32>
    %249 = arith.mulf %240, %179 : vector<16x128xf32>
    %250 = arith.addf %248, %249 : vector<16x128xf32>
    %251 = vector.broadcast %c2_i32 : i32 to vector<16x1xi32>
    %252 = arith.cmpi slt, %251, %8 : vector<16x1xi32>
    %253 = vector.shape_cast %252 : vector<16x1xi1> to vector<16x1xi1>
    %254 = vector.broadcast %253 : vector<16x1xi1> to vector<16x128xi1>
    %255 = arith.select %254, %224, %174 : vector<16x128xi1>, vector<16x128xf32>
    %256 = vector.broadcast %180 : i32 to vector<16x1xi32>
    %257 = arith.cmpi slt, %256, %8 : vector<16x1xi32>
    %258 = vector.shape_cast %257 : vector<16x1xi1> to vector<16x1xi1>
    %259 = vector.broadcast %258 : vector<16x1xi1> to vector<16x128xi1>
    %260 = arith.select %259, %250, %179 : vector<16x128xi1>, vector<16x128xf32>
    %c3_i32 = arith.constant 3 : i32
    %c7_i32_57 = arith.constant 7 : i32
    %261 = arith.subi %c7_i32_57, %c3_i32 : i32
    %c16_i32_58 = arith.constant 16 : i32
    %262 = arith.muli %c3_i32, %c16_i32_58 : i32
    %263 = tpu.assume_multiple %262, 16 : i32
    %c16_i32_59 = arith.constant 16 : i32
    %264 = arith.muli %261, %c16_i32_59 : i32
    %265 = tpu.assume_multiple %264, 16 : i32
    %266 = arith.index_cast %263 : i32 to index
    %c0_60 = arith.constant 0 : index
    %267 = vector.load %arg7[%266, %c0_60] : memref<128x768xbf16, #tpu.memory_space<vmem>>, vector<16x384xbf16>
    %268 = arith.extf %267 : vector<16x384xbf16> to vector<16x384xf32>
    %269 = arith.index_cast %265 : i32 to index
    %c384_61 = arith.constant 384 : index
    %270 = vector.load %arg7[%269, %c384_61] : memref<128x768xbf16, #tpu.memory_space<vmem>>, vector<16x384xbf16>
    %271 = arith.extf %270 : vector<16x384xbf16> to vector<16x384xf32>
    %272 = arith.truncf %255 : vector<16x128xf32> to vector<16x128xbf16>
    %cst_62 = arith.constant dense<0.000000e+00> : vector<16x384xf32>
    %273 = tpu.matmul %272, %14, %cst_62 {dimension_numbers = #tpu.dot_dimension_numbers<[1], [0], [0], [1], [0, 0, 1, 1], [], []>} : vector<16x128xbf16>, vector<128x384xbf16>, vector<16x384xf32> -> vector<16x384xf32>
    %274 = vector.broadcast %10 : vector<1x384xf32> to vector<16x384xf32>
    %275 = arith.addf %273, %274 : vector<16x384xf32>
    %276 = arith.truncf %260 : vector<16x128xf32> to vector<16x128xbf16>
    %cst_63 = arith.constant dense<0.000000e+00> : vector<16x384xf32>
    %277 = tpu.matmul %276, %16, %cst_63 {dimension_numbers = #tpu.dot_dimension_numbers<[1], [0], [0], [1], [0, 0, 1, 1], [], []>} : vector<16x128xbf16>, vector<128x384xbf16>, vector<16x384xf32> -> vector<16x384xf32>
    %278 = vector.broadcast %12 : vector<1x384xf32> to vector<16x384xf32>
    %279 = arith.addf %277, %278 : vector<16x384xf32>
    %280 = vector.extract_strided_slice %268 {offsets = [0, 0], sizes = [16, 128], strides = [1, 1]} : vector<16x384xf32> to vector<16x128xf32>
    %281 = vector.extract_strided_slice %275 {offsets = [0, 0], sizes = [16, 128], strides = [1, 1]} : vector<16x384xf32> to vector<16x128xf32>
    %282 = arith.addf %280, %281 : vector<16x128xf32>
    %283 = arith.negf %282 : vector<16x128xf32>
    %284 = math.exp %283 : vector<16x128xf32>
    %cst_64 = arith.constant 1.000000e+00 : f32
    %285 = vector.broadcast %cst_64 : f32 to vector<16x128xf32>
    %286 = arith.addf %285, %284 : vector<16x128xf32>
    %287 = arith.divf %285, %286 : vector<16x128xf32>
    %288 = vector.extract_strided_slice %268 {offsets = [0, 128], sizes = [16, 128], strides = [1, 1]} : vector<16x384xf32> to vector<16x128xf32>
    %289 = vector.extract_strided_slice %275 {offsets = [0, 128], sizes = [16, 128], strides = [1, 1]} : vector<16x384xf32> to vector<16x128xf32>
    %290 = arith.addf %288, %289 : vector<16x128xf32>
    %291 = arith.negf %290 : vector<16x128xf32>
    %292 = math.exp %291 : vector<16x128xf32>
    %cst_65 = arith.constant 1.000000e+00 : f32
    %293 = vector.broadcast %cst_65 : f32 to vector<16x128xf32>
    %294 = arith.addf %293, %292 : vector<16x128xf32>
    %295 = arith.divf %293, %294 : vector<16x128xf32>
    %296 = vector.extract_strided_slice %268 {offsets = [0, 256], sizes = [16, 128], strides = [1, 1]} : vector<16x384xf32> to vector<16x128xf32>
    %297 = vector.extract_strided_slice %275 {offsets = [0, 256], sizes = [16, 128], strides = [1, 1]} : vector<16x384xf32> to vector<16x128xf32>
    %298 = arith.mulf %287, %297 : vector<16x128xf32>
    %299 = arith.addf %296, %298 : vector<16x128xf32>
    %300 = math.tanh %299 : vector<16x128xf32>
    %cst_66 = arith.constant 1.000000e+00 : f32
    %301 = vector.broadcast %cst_66 : f32 to vector<16x128xf32>
    %302 = arith.subf %301, %295 : vector<16x128xf32>
    %303 = arith.mulf %302, %300 : vector<16x128xf32>
    %304 = arith.mulf %295, %255 : vector<16x128xf32>
    %305 = arith.addf %303, %304 : vector<16x128xf32>
    %306 = vector.extract_strided_slice %271 {offsets = [0, 0], sizes = [16, 128], strides = [1, 1]} : vector<16x384xf32> to vector<16x128xf32>
    %307 = vector.extract_strided_slice %279 {offsets = [0, 0], sizes = [16, 128], strides = [1, 1]} : vector<16x384xf32> to vector<16x128xf32>
    %308 = arith.addf %306, %307 : vector<16x128xf32>
    %309 = arith.negf %308 : vector<16x128xf32>
    %310 = math.exp %309 : vector<16x128xf32>
    %cst_67 = arith.constant 1.000000e+00 : f32
    %311 = vector.broadcast %cst_67 : f32 to vector<16x128xf32>
    %312 = arith.addf %311, %310 : vector<16x128xf32>
    %313 = arith.divf %311, %312 : vector<16x128xf32>
    %314 = vector.extract_strided_slice %271 {offsets = [0, 128], sizes = [16, 128], strides = [1, 1]} : vector<16x384xf32> to vector<16x128xf32>
    %315 = vector.extract_strided_slice %279 {offsets = [0, 128], sizes = [16, 128], strides = [1, 1]} : vector<16x384xf32> to vector<16x128xf32>
    %316 = arith.addf %314, %315 : vector<16x128xf32>
    %317 = arith.negf %316 : vector<16x128xf32>
    %318 = math.exp %317 : vector<16x128xf32>
    %cst_68 = arith.constant 1.000000e+00 : f32
    %319 = vector.broadcast %cst_68 : f32 to vector<16x128xf32>
    %320 = arith.addf %319, %318 : vector<16x128xf32>
    %321 = arith.divf %319, %320 : vector<16x128xf32>
    %322 = vector.extract_strided_slice %271 {offsets = [0, 256], sizes = [16, 128], strides = [1, 1]} : vector<16x384xf32> to vector<16x128xf32>
    %323 = vector.extract_strided_slice %279 {offsets = [0, 256], sizes = [16, 128], strides = [1, 1]} : vector<16x384xf32> to vector<16x128xf32>
    %324 = arith.mulf %313, %323 : vector<16x128xf32>
    %325 = arith.addf %322, %324 : vector<16x128xf32>
    %326 = math.tanh %325 : vector<16x128xf32>
    %cst_69 = arith.constant 1.000000e+00 : f32
    %327 = vector.broadcast %cst_69 : f32 to vector<16x128xf32>
    %328 = arith.subf %327, %321 : vector<16x128xf32>
    %329 = arith.mulf %328, %326 : vector<16x128xf32>
    %330 = arith.mulf %321, %260 : vector<16x128xf32>
    %331 = arith.addf %329, %330 : vector<16x128xf32>
    %332 = vector.broadcast %c3_i32 : i32 to vector<16x1xi32>
    %333 = arith.cmpi slt, %332, %8 : vector<16x1xi32>
    %334 = vector.shape_cast %333 : vector<16x1xi1> to vector<16x1xi1>
    %335 = vector.broadcast %334 : vector<16x1xi1> to vector<16x128xi1>
    %336 = arith.select %335, %305, %255 : vector<16x128xi1>, vector<16x128xf32>
    %337 = vector.broadcast %261 : i32 to vector<16x1xi32>
    %338 = arith.cmpi slt, %337, %8 : vector<16x1xi32>
    %339 = vector.shape_cast %338 : vector<16x1xi1> to vector<16x1xi1>
    %340 = vector.broadcast %339 : vector<16x1xi1> to vector<16x128xi1>
    %341 = arith.select %340, %331, %260 : vector<16x128xi1>, vector<16x128xf32>
    %c4_i32 = arith.constant 4 : i32
    %c7_i32_70 = arith.constant 7 : i32
    %342 = arith.subi %c7_i32_70, %c4_i32 : i32
    %c16_i32_71 = arith.constant 16 : i32
    %343 = arith.muli %c4_i32, %c16_i32_71 : i32
    %344 = tpu.assume_multiple %343, 16 : i32
    %c16_i32_72 = arith.constant 16 : i32
    %345 = arith.muli %342, %c16_i32_72 : i32
    %346 = tpu.assume_multiple %345, 16 : i32
    %347 = arith.index_cast %344 : i32 to index
    %c0_73 = arith.constant 0 : index
    %348 = vector.load %arg7[%347, %c0_73] : memref<128x768xbf16, #tpu.memory_space<vmem>>, vector<16x384xbf16>
    %349 = arith.extf %348 : vector<16x384xbf16> to vector<16x384xf32>
    %350 = arith.index_cast %346 : i32 to index
    %c384_74 = arith.constant 384 : index
    %351 = vector.load %arg7[%350, %c384_74] : memref<128x768xbf16, #tpu.memory_space<vmem>>, vector<16x384xbf16>
    %352 = arith.extf %351 : vector<16x384xbf16> to vector<16x384xf32>
    %353 = arith.truncf %336 : vector<16x128xf32> to vector<16x128xbf16>
    %cst_75 = arith.constant dense<0.000000e+00> : vector<16x384xf32>
    %354 = tpu.matmul %353, %14, %cst_75 {dimension_numbers = #tpu.dot_dimension_numbers<[1], [0], [0], [1], [0, 0, 1, 1], [], []>} : vector<16x128xbf16>, vector<128x384xbf16>, vector<16x384xf32> -> vector<16x384xf32>
    %355 = vector.broadcast %10 : vector<1x384xf32> to vector<16x384xf32>
    %356 = arith.addf %354, %355 : vector<16x384xf32>
    %357 = arith.truncf %341 : vector<16x128xf32> to vector<16x128xbf16>
    %cst_76 = arith.constant dense<0.000000e+00> : vector<16x384xf32>
    %358 = tpu.matmul %357, %16, %cst_76 {dimension_numbers = #tpu.dot_dimension_numbers<[1], [0], [0], [1], [0, 0, 1, 1], [], []>} : vector<16x128xbf16>, vector<128x384xbf16>, vector<16x384xf32> -> vector<16x384xf32>
    %359 = vector.broadcast %12 : vector<1x384xf32> to vector<16x384xf32>
    %360 = arith.addf %358, %359 : vector<16x384xf32>
    %361 = vector.extract_strided_slice %349 {offsets = [0, 0], sizes = [16, 128], strides = [1, 1]} : vector<16x384xf32> to vector<16x128xf32>
    %362 = vector.extract_strided_slice %356 {offsets = [0, 0], sizes = [16, 128], strides = [1, 1]} : vector<16x384xf32> to vector<16x128xf32>
    %363 = arith.addf %361, %362 : vector<16x128xf32>
    %364 = arith.negf %363 : vector<16x128xf32>
    %365 = math.exp %364 : vector<16x128xf32>
    %cst_77 = arith.constant 1.000000e+00 : f32
    %366 = vector.broadcast %cst_77 : f32 to vector<16x128xf32>
    %367 = arith.addf %366, %365 : vector<16x128xf32>
    %368 = arith.divf %366, %367 : vector<16x128xf32>
    %369 = vector.extract_strided_slice %349 {offsets = [0, 128], sizes = [16, 128], strides = [1, 1]} : vector<16x384xf32> to vector<16x128xf32>
    %370 = vector.extract_strided_slice %356 {offsets = [0, 128], sizes = [16, 128], strides = [1, 1]} : vector<16x384xf32> to vector<16x128xf32>
    %371 = arith.addf %369, %370 : vector<16x128xf32>
    %372 = arith.negf %371 : vector<16x128xf32>
    %373 = math.exp %372 : vector<16x128xf32>
    %cst_78 = arith.constant 1.000000e+00 : f32
    %374 = vector.broadcast %cst_78 : f32 to vector<16x128xf32>
    %375 = arith.addf %374, %373 : vector<16x128xf32>
    %376 = arith.divf %374, %375 : vector<16x128xf32>
    %377 = vector.extract_strided_slice %349 {offsets = [0, 256], sizes = [16, 128], strides = [1, 1]} : vector<16x384xf32> to vector<16x128xf32>
    %378 = vector.extract_strided_slice %356 {offsets = [0, 256], sizes = [16, 128], strides = [1, 1]} : vector<16x384xf32> to vector<16x128xf32>
    %379 = arith.mulf %368, %378 : vector<16x128xf32>
    %380 = arith.addf %377, %379 : vector<16x128xf32>
    %381 = math.tanh %380 : vector<16x128xf32>
    %cst_79 = arith.constant 1.000000e+00 : f32
    %382 = vector.broadcast %cst_79 : f32 to vector<16x128xf32>
    %383 = arith.subf %382, %376 : vector<16x128xf32>
    %384 = arith.mulf %383, %381 : vector<16x128xf32>
    %385 = arith.mulf %376, %336 : vector<16x128xf32>
    %386 = arith.addf %384, %385 : vector<16x128xf32>
    %387 = vector.extract_strided_slice %352 {offsets = [0, 0], sizes = [16, 128], strides = [1, 1]} : vector<16x384xf32> to vector<16x128xf32>
    %388 = vector.extract_strided_slice %360 {offsets = [0, 0], sizes = [16, 128], strides = [1, 1]} : vector<16x384xf32> to vector<16x128xf32>
    %389 = arith.addf %387, %388 : vector<16x128xf32>
    %390 = arith.negf %389 : vector<16x128xf32>
    %391 = math.exp %390 : vector<16x128xf32>
    %cst_80 = arith.constant 1.000000e+00 : f32
    %392 = vector.broadcast %cst_80 : f32 to vector<16x128xf32>
    %393 = arith.addf %392, %391 : vector<16x128xf32>
    %394 = arith.divf %392, %393 : vector<16x128xf32>
    %395 = vector.extract_strided_slice %352 {offsets = [0, 128], sizes = [16, 128], strides = [1, 1]} : vector<16x384xf32> to vector<16x128xf32>
    %396 = vector.extract_strided_slice %360 {offsets = [0, 128], sizes = [16, 128], strides = [1, 1]} : vector<16x384xf32> to vector<16x128xf32>
    %397 = arith.addf %395, %396 : vector<16x128xf32>
    %398 = arith.negf %397 : vector<16x128xf32>
    %399 = math.exp %398 : vector<16x128xf32>
    %cst_81 = arith.constant 1.000000e+00 : f32
    %400 = vector.broadcast %cst_81 : f32 to vector<16x128xf32>
    %401 = arith.addf %400, %399 : vector<16x128xf32>
    %402 = arith.divf %400, %401 : vector<16x128xf32>
    %403 = vector.extract_strided_slice %352 {offsets = [0, 256], sizes = [16, 128], strides = [1, 1]} : vector<16x384xf32> to vector<16x128xf32>
    %404 = vector.extract_strided_slice %360 {offsets = [0, 256], sizes = [16, 128], strides = [1, 1]} : vector<16x384xf32> to vector<16x128xf32>
    %405 = arith.mulf %394, %404 : vector<16x128xf32>
    %406 = arith.addf %403, %405 : vector<16x128xf32>
    %407 = math.tanh %406 : vector<16x128xf32>
    %cst_82 = arith.constant 1.000000e+00 : f32
    %408 = vector.broadcast %cst_82 : f32 to vector<16x128xf32>
    %409 = arith.subf %408, %402 : vector<16x128xf32>
    %410 = arith.mulf %409, %407 : vector<16x128xf32>
    %411 = arith.mulf %402, %341 : vector<16x128xf32>
    %412 = arith.addf %410, %411 : vector<16x128xf32>
    %413 = vector.broadcast %c4_i32 : i32 to vector<16x1xi32>
    %414 = arith.cmpi slt, %413, %8 : vector<16x1xi32>
    %415 = vector.shape_cast %414 : vector<16x1xi1> to vector<16x1xi1>
    %416 = vector.broadcast %415 : vector<16x1xi1> to vector<16x128xi1>
    %417 = arith.select %416, %386, %336 : vector<16x128xi1>, vector<16x128xf32>
    %418 = vector.broadcast %342 : i32 to vector<16x1xi32>
    %419 = arith.cmpi slt, %418, %8 : vector<16x1xi32>
    %420 = vector.shape_cast %419 : vector<16x1xi1> to vector<16x1xi1>
    %421 = vector.broadcast %420 : vector<16x1xi1> to vector<16x128xi1>
    %422 = arith.select %421, %412, %341 : vector<16x128xi1>, vector<16x128xf32>
    %c5_i32 = arith.constant 5 : i32
    %c7_i32_83 = arith.constant 7 : i32
    %423 = arith.subi %c7_i32_83, %c5_i32 : i32
    %c16_i32_84 = arith.constant 16 : i32
    %424 = arith.muli %c5_i32, %c16_i32_84 : i32
    %425 = tpu.assume_multiple %424, 16 : i32
    %c16_i32_85 = arith.constant 16 : i32
    %426 = arith.muli %423, %c16_i32_85 : i32
    %427 = tpu.assume_multiple %426, 16 : i32
    %428 = arith.index_cast %425 : i32 to index
    %c0_86 = arith.constant 0 : index
    %429 = vector.load %arg7[%428, %c0_86] : memref<128x768xbf16, #tpu.memory_space<vmem>>, vector<16x384xbf16>
    %430 = arith.extf %429 : vector<16x384xbf16> to vector<16x384xf32>
    %431 = arith.index_cast %427 : i32 to index
    %c384_87 = arith.constant 384 : index
    %432 = vector.load %arg7[%431, %c384_87] : memref<128x768xbf16, #tpu.memory_space<vmem>>, vector<16x384xbf16>
    %433 = arith.extf %432 : vector<16x384xbf16> to vector<16x384xf32>
    %434 = arith.truncf %417 : vector<16x128xf32> to vector<16x128xbf16>
    %cst_88 = arith.constant dense<0.000000e+00> : vector<16x384xf32>
    %435 = tpu.matmul %434, %14, %cst_88 {dimension_numbers = #tpu.dot_dimension_numbers<[1], [0], [0], [1], [0, 0, 1, 1], [], []>} : vector<16x128xbf16>, vector<128x384xbf16>, vector<16x384xf32> -> vector<16x384xf32>
    %436 = vector.broadcast %10 : vector<1x384xf32> to vector<16x384xf32>
    %437 = arith.addf %435, %436 : vector<16x384xf32>
    %438 = arith.truncf %422 : vector<16x128xf32> to vector<16x128xbf16>
    %cst_89 = arith.constant dense<0.000000e+00> : vector<16x384xf32>
    %439 = tpu.matmul %438, %16, %cst_89 {dimension_numbers = #tpu.dot_dimension_numbers<[1], [0], [0], [1], [0, 0, 1, 1], [], []>} : vector<16x128xbf16>, vector<128x384xbf16>, vector<16x384xf32> -> vector<16x384xf32>
    %440 = vector.broadcast %12 : vector<1x384xf32> to vector<16x384xf32>
    %441 = arith.addf %439, %440 : vector<16x384xf32>
    %442 = vector.extract_strided_slice %430 {offsets = [0, 0], sizes = [16, 128], strides = [1, 1]} : vector<16x384xf32> to vector<16x128xf32>
    %443 = vector.extract_strided_slice %437 {offsets = [0, 0], sizes = [16, 128], strides = [1, 1]} : vector<16x384xf32> to vector<16x128xf32>
    %444 = arith.addf %442, %443 : vector<16x128xf32>
    %445 = arith.negf %444 : vector<16x128xf32>
    %446 = math.exp %445 : vector<16x128xf32>
    %cst_90 = arith.constant 1.000000e+00 : f32
    %447 = vector.broadcast %cst_90 : f32 to vector<16x128xf32>
    %448 = arith.addf %447, %446 : vector<16x128xf32>
    %449 = arith.divf %447, %448 : vector<16x128xf32>
    %450 = vector.extract_strided_slice %430 {offsets = [0, 128], sizes = [16, 128], strides = [1, 1]} : vector<16x384xf32> to vector<16x128xf32>
    %451 = vector.extract_strided_slice %437 {offsets = [0, 128], sizes = [16, 128], strides = [1, 1]} : vector<16x384xf32> to vector<16x128xf32>
    %452 = arith.addf %450, %451 : vector<16x128xf32>
    %453 = arith.negf %452 : vector<16x128xf32>
    %454 = math.exp %453 : vector<16x128xf32>
    %cst_91 = arith.constant 1.000000e+00 : f32
    %455 = vector.broadcast %cst_91 : f32 to vector<16x128xf32>
    %456 = arith.addf %455, %454 : vector<16x128xf32>
    %457 = arith.divf %455, %456 : vector<16x128xf32>
    %458 = vector.extract_strided_slice %430 {offsets = [0, 256], sizes = [16, 128], strides = [1, 1]} : vector<16x384xf32> to vector<16x128xf32>
    %459 = vector.extract_strided_slice %437 {offsets = [0, 256], sizes = [16, 128], strides = [1, 1]} : vector<16x384xf32> to vector<16x128xf32>
    %460 = arith.mulf %449, %459 : vector<16x128xf32>
    %461 = arith.addf %458, %460 : vector<16x128xf32>
    %462 = math.tanh %461 : vector<16x128xf32>
    %cst_92 = arith.constant 1.000000e+00 : f32
    %463 = vector.broadcast %cst_92 : f32 to vector<16x128xf32>
    %464 = arith.subf %463, %457 : vector<16x128xf32>
    %465 = arith.mulf %464, %462 : vector<16x128xf32>
    %466 = arith.mulf %457, %417 : vector<16x128xf32>
    %467 = arith.addf %465, %466 : vector<16x128xf32>
    %468 = vector.extract_strided_slice %433 {offsets = [0, 0], sizes = [16, 128], strides = [1, 1]} : vector<16x384xf32> to vector<16x128xf32>
    %469 = vector.extract_strided_slice %441 {offsets = [0, 0], sizes = [16, 128], strides = [1, 1]} : vector<16x384xf32> to vector<16x128xf32>
    %470 = arith.addf %468, %469 : vector<16x128xf32>
    %471 = arith.negf %470 : vector<16x128xf32>
    %472 = math.exp %471 : vector<16x128xf32>
    %cst_93 = arith.constant 1.000000e+00 : f32
    %473 = vector.broadcast %cst_93 : f32 to vector<16x128xf32>
    %474 = arith.addf %473, %472 : vector<16x128xf32>
    %475 = arith.divf %473, %474 : vector<16x128xf32>
    %476 = vector.extract_strided_slice %433 {offsets = [0, 128], sizes = [16, 128], strides = [1, 1]} : vector<16x384xf32> to vector<16x128xf32>
    %477 = vector.extract_strided_slice %441 {offsets = [0, 128], sizes = [16, 128], strides = [1, 1]} : vector<16x384xf32> to vector<16x128xf32>
    %478 = arith.addf %476, %477 : vector<16x128xf32>
    %479 = arith.negf %478 : vector<16x128xf32>
    %480 = math.exp %479 : vector<16x128xf32>
    %cst_94 = arith.constant 1.000000e+00 : f32
    %481 = vector.broadcast %cst_94 : f32 to vector<16x128xf32>
    %482 = arith.addf %481, %480 : vector<16x128xf32>
    %483 = arith.divf %481, %482 : vector<16x128xf32>
    %484 = vector.extract_strided_slice %433 {offsets = [0, 256], sizes = [16, 128], strides = [1, 1]} : vector<16x384xf32> to vector<16x128xf32>
    %485 = vector.extract_strided_slice %441 {offsets = [0, 256], sizes = [16, 128], strides = [1, 1]} : vector<16x384xf32> to vector<16x128xf32>
    %486 = arith.mulf %475, %485 : vector<16x128xf32>
    %487 = arith.addf %484, %486 : vector<16x128xf32>
    %488 = math.tanh %487 : vector<16x128xf32>
    %cst_95 = arith.constant 1.000000e+00 : f32
    %489 = vector.broadcast %cst_95 : f32 to vector<16x128xf32>
    %490 = arith.subf %489, %483 : vector<16x128xf32>
    %491 = arith.mulf %490, %488 : vector<16x128xf32>
    %492 = arith.mulf %483, %422 : vector<16x128xf32>
    %493 = arith.addf %491, %492 : vector<16x128xf32>
    %494 = vector.broadcast %c5_i32 : i32 to vector<16x1xi32>
    %495 = arith.cmpi slt, %494, %8 : vector<16x1xi32>
    %496 = vector.shape_cast %495 : vector<16x1xi1> to vector<16x1xi1>
    %497 = vector.broadcast %496 : vector<16x1xi1> to vector<16x128xi1>
    %498 = arith.select %497, %467, %417 : vector<16x128xi1>, vector<16x128xf32>
    %499 = vector.broadcast %423 : i32 to vector<16x1xi32>
    %500 = arith.cmpi slt, %499, %8 : vector<16x1xi32>
    %501 = vector.shape_cast %500 : vector<16x1xi1> to vector<16x1xi1>
    %502 = vector.broadcast %501 : vector<16x1xi1> to vector<16x128xi1>
    %503 = arith.select %502, %493, %422 : vector<16x128xi1>, vector<16x128xf32>
    %c6_i32 = arith.constant 6 : i32
    %c7_i32_96 = arith.constant 7 : i32
    %504 = arith.subi %c7_i32_96, %c6_i32 : i32
    %c16_i32_97 = arith.constant 16 : i32
    %505 = arith.muli %c6_i32, %c16_i32_97 : i32
    %506 = tpu.assume_multiple %505, 16 : i32
    %c16_i32_98 = arith.constant 16 : i32
    %507 = arith.muli %504, %c16_i32_98 : i32
    %508 = tpu.assume_multiple %507, 16 : i32
    %509 = arith.index_cast %506 : i32 to index
    %c0_99 = arith.constant 0 : index
    %510 = vector.load %arg7[%509, %c0_99] : memref<128x768xbf16, #tpu.memory_space<vmem>>, vector<16x384xbf16>
    %511 = arith.extf %510 : vector<16x384xbf16> to vector<16x384xf32>
    %512 = arith.index_cast %508 : i32 to index
    %c384_100 = arith.constant 384 : index
    %513 = vector.load %arg7[%512, %c384_100] : memref<128x768xbf16, #tpu.memory_space<vmem>>, vector<16x384xbf16>
    %514 = arith.extf %513 : vector<16x384xbf16> to vector<16x384xf32>
    %515 = arith.truncf %498 : vector<16x128xf32> to vector<16x128xbf16>
    %cst_101 = arith.constant dense<0.000000e+00> : vector<16x384xf32>
    %516 = tpu.matmul %515, %14, %cst_101 {dimension_numbers = #tpu.dot_dimension_numbers<[1], [0], [0], [1], [0, 0, 1, 1], [], []>} : vector<16x128xbf16>, vector<128x384xbf16>, vector<16x384xf32> -> vector<16x384xf32>
    %517 = vector.broadcast %10 : vector<1x384xf32> to vector<16x384xf32>
    %518 = arith.addf %516, %517 : vector<16x384xf32>
    %519 = arith.truncf %503 : vector<16x128xf32> to vector<16x128xbf16>
    %cst_102 = arith.constant dense<0.000000e+00> : vector<16x384xf32>
    %520 = tpu.matmul %519, %16, %cst_102 {dimension_numbers = #tpu.dot_dimension_numbers<[1], [0], [0], [1], [0, 0, 1, 1], [], []>} : vector<16x128xbf16>, vector<128x384xbf16>, vector<16x384xf32> -> vector<16x384xf32>
    %521 = vector.broadcast %12 : vector<1x384xf32> to vector<16x384xf32>
    %522 = arith.addf %520, %521 : vector<16x384xf32>
    %523 = vector.extract_strided_slice %511 {offsets = [0, 0], sizes = [16, 128], strides = [1, 1]} : vector<16x384xf32> to vector<16x128xf32>
    %524 = vector.extract_strided_slice %518 {offsets = [0, 0], sizes = [16, 128], strides = [1, 1]} : vector<16x384xf32> to vector<16x128xf32>
    %525 = arith.addf %523, %524 : vector<16x128xf32>
    %526 = arith.negf %525 : vector<16x128xf32>
    %527 = math.exp %526 : vector<16x128xf32>
    %cst_103 = arith.constant 1.000000e+00 : f32
    %528 = vector.broadcast %cst_103 : f32 to vector<16x128xf32>
    %529 = arith.addf %528, %527 : vector<16x128xf32>
    %530 = arith.divf %528, %529 : vector<16x128xf32>
    %531 = vector.extract_strided_slice %511 {offsets = [0, 128], sizes = [16, 128], strides = [1, 1]} : vector<16x384xf32> to vector<16x128xf32>
    %532 = vector.extract_strided_slice %518 {offsets = [0, 128], sizes = [16, 128], strides = [1, 1]} : vector<16x384xf32> to vector<16x128xf32>
    %533 = arith.addf %531, %532 : vector<16x128xf32>
    %534 = arith.negf %533 : vector<16x128xf32>
    %535 = math.exp %534 : vector<16x128xf32>
    %cst_104 = arith.constant 1.000000e+00 : f32
    %536 = vector.broadcast %cst_104 : f32 to vector<16x128xf32>
    %537 = arith.addf %536, %535 : vector<16x128xf32>
    %538 = arith.divf %536, %537 : vector<16x128xf32>
    %539 = vector.extract_strided_slice %511 {offsets = [0, 256], sizes = [16, 128], strides = [1, 1]} : vector<16x384xf32> to vector<16x128xf32>
    %540 = vector.extract_strided_slice %518 {offsets = [0, 256], sizes = [16, 128], strides = [1, 1]} : vector<16x384xf32> to vector<16x128xf32>
    %541 = arith.mulf %530, %540 : vector<16x128xf32>
    %542 = arith.addf %539, %541 : vector<16x128xf32>
    %543 = math.tanh %542 : vector<16x128xf32>
    %cst_105 = arith.constant 1.000000e+00 : f32
    %544 = vector.broadcast %cst_105 : f32 to vector<16x128xf32>
    %545 = arith.subf %544, %538 : vector<16x128xf32>
    %546 = arith.mulf %545, %543 : vector<16x128xf32>
    %547 = arith.mulf %538, %498 : vector<16x128xf32>
    %548 = arith.addf %546, %547 : vector<16x128xf32>
    %549 = vector.extract_strided_slice %514 {offsets = [0, 0], sizes = [16, 128], strides = [1, 1]} : vector<16x384xf32> to vector<16x128xf32>
    %550 = vector.extract_strided_slice %522 {offsets = [0, 0], sizes = [16, 128], strides = [1, 1]} : vector<16x384xf32> to vector<16x128xf32>
    %551 = arith.addf %549, %550 : vector<16x128xf32>
    %552 = arith.negf %551 : vector<16x128xf32>
    %553 = math.exp %552 : vector<16x128xf32>
    %cst_106 = arith.constant 1.000000e+00 : f32
    %554 = vector.broadcast %cst_106 : f32 to vector<16x128xf32>
    %555 = arith.addf %554, %553 : vector<16x128xf32>
    %556 = arith.divf %554, %555 : vector<16x128xf32>
    %557 = vector.extract_strided_slice %514 {offsets = [0, 128], sizes = [16, 128], strides = [1, 1]} : vector<16x384xf32> to vector<16x128xf32>
    %558 = vector.extract_strided_slice %522 {offsets = [0, 128], sizes = [16, 128], strides = [1, 1]} : vector<16x384xf32> to vector<16x128xf32>
    %559 = arith.addf %557, %558 : vector<16x128xf32>
    %560 = arith.negf %559 : vector<16x128xf32>
    %561 = math.exp %560 : vector<16x128xf32>
    %cst_107 = arith.constant 1.000000e+00 : f32
    %562 = vector.broadcast %cst_107 : f32 to vector<16x128xf32>
    %563 = arith.addf %562, %561 : vector<16x128xf32>
    %564 = arith.divf %562, %563 : vector<16x128xf32>
    %565 = vector.extract_strided_slice %514 {offsets = [0, 256], sizes = [16, 128], strides = [1, 1]} : vector<16x384xf32> to vector<16x128xf32>
    %566 = vector.extract_strided_slice %522 {offsets = [0, 256], sizes = [16, 128], strides = [1, 1]} : vector<16x384xf32> to vector<16x128xf32>
    %567 = arith.mulf %556, %566 : vector<16x128xf32>
    %568 = arith.addf %565, %567 : vector<16x128xf32>
    %569 = math.tanh %568 : vector<16x128xf32>
    %cst_108 = arith.constant 1.000000e+00 : f32
    %570 = vector.broadcast %cst_108 : f32 to vector<16x128xf32>
    %571 = arith.subf %570, %564 : vector<16x128xf32>
    %572 = arith.mulf %571, %569 : vector<16x128xf32>
    %573 = arith.mulf %564, %503 : vector<16x128xf32>
    %574 = arith.addf %572, %573 : vector<16x128xf32>
    %575 = vector.broadcast %c6_i32 : i32 to vector<16x1xi32>
    %576 = arith.cmpi slt, %575, %8 : vector<16x1xi32>
    %577 = vector.shape_cast %576 : vector<16x1xi1> to vector<16x1xi1>
    %578 = vector.broadcast %577 : vector<16x1xi1> to vector<16x128xi1>
    %579 = arith.select %578, %548, %498 : vector<16x128xi1>, vector<16x128xf32>
    %580 = vector.broadcast %504 : i32 to vector<16x1xi32>
    %581 = arith.cmpi slt, %580, %8 : vector<16x1xi32>
    %582 = vector.shape_cast %581 : vector<16x1xi1> to vector<16x1xi1>
    %583 = vector.broadcast %582 : vector<16x1xi1> to vector<16x128xi1>
    %584 = arith.select %583, %574, %503 : vector<16x128xi1>, vector<16x128xf32>
    %c7_i32_109 = arith.constant 7 : i32
    %c7_i32_110 = arith.constant 7 : i32
    %585 = arith.subi %c7_i32_110, %c7_i32_109 : i32
    %c16_i32_111 = arith.constant 16 : i32
    %586 = arith.muli %c7_i32_109, %c16_i32_111 : i32
    %587 = tpu.assume_multiple %586, 16 : i32
    %c16_i32_112 = arith.constant 16 : i32
    %588 = arith.muli %585, %c16_i32_112 : i32
    %589 = tpu.assume_multiple %588, 16 : i32
    %590 = arith.index_cast %587 : i32 to index
    %c0_113 = arith.constant 0 : index
    %591 = vector.load %arg7[%590, %c0_113] : memref<128x768xbf16, #tpu.memory_space<vmem>>, vector<16x384xbf16>
    %592 = arith.extf %591 : vector<16x384xbf16> to vector<16x384xf32>
    %593 = arith.index_cast %589 : i32 to index
    %c384_114 = arith.constant 384 : index
    %594 = vector.load %arg7[%593, %c384_114] : memref<128x768xbf16, #tpu.memory_space<vmem>>, vector<16x384xbf16>
    %595 = arith.extf %594 : vector<16x384xbf16> to vector<16x384xf32>
    %596 = arith.truncf %579 : vector<16x128xf32> to vector<16x128xbf16>
    %cst_115 = arith.constant dense<0.000000e+00> : vector<16x384xf32>
    %597 = tpu.matmul %596, %14, %cst_115 {dimension_numbers = #tpu.dot_dimension_numbers<[1], [0], [0], [1], [0, 0, 1, 1], [], []>} : vector<16x128xbf16>, vector<128x384xbf16>, vector<16x384xf32> -> vector<16x384xf32>
    %598 = vector.broadcast %10 : vector<1x384xf32> to vector<16x384xf32>
    %599 = arith.addf %597, %598 : vector<16x384xf32>
    %600 = arith.truncf %584 : vector<16x128xf32> to vector<16x128xbf16>
    %cst_116 = arith.constant dense<0.000000e+00> : vector<16x384xf32>
    %601 = tpu.matmul %600, %16, %cst_116 {dimension_numbers = #tpu.dot_dimension_numbers<[1], [0], [0], [1], [0, 0, 1, 1], [], []>} : vector<16x128xbf16>, vector<128x384xbf16>, vector<16x384xf32> -> vector<16x384xf32>
    %602 = vector.broadcast %12 : vector<1x384xf32> to vector<16x384xf32>
    %603 = arith.addf %601, %602 : vector<16x384xf32>
    %604 = vector.extract_strided_slice %592 {offsets = [0, 0], sizes = [16, 128], strides = [1, 1]} : vector<16x384xf32> to vector<16x128xf32>
    %605 = vector.extract_strided_slice %599 {offsets = [0, 0], sizes = [16, 128], strides = [1, 1]} : vector<16x384xf32> to vector<16x128xf32>
    %606 = arith.addf %604, %605 : vector<16x128xf32>
    %607 = arith.negf %606 : vector<16x128xf32>
    %608 = math.exp %607 : vector<16x128xf32>
    %cst_117 = arith.constant 1.000000e+00 : f32
    %609 = vector.broadcast %cst_117 : f32 to vector<16x128xf32>
    %610 = arith.addf %609, %608 : vector<16x128xf32>
    %611 = arith.divf %609, %610 : vector<16x128xf32>
    %612 = vector.extract_strided_slice %592 {offsets = [0, 128], sizes = [16, 128], strides = [1, 1]} : vector<16x384xf32> to vector<16x128xf32>
    %613 = vector.extract_strided_slice %599 {offsets = [0, 128], sizes = [16, 128], strides = [1, 1]} : vector<16x384xf32> to vector<16x128xf32>
    %614 = arith.addf %612, %613 : vector<16x128xf32>
    %615 = arith.negf %614 : vector<16x128xf32>
    %616 = math.exp %615 : vector<16x128xf32>
    %cst_118 = arith.constant 1.000000e+00 : f32
    %617 = vector.broadcast %cst_118 : f32 to vector<16x128xf32>
    %618 = arith.addf %617, %616 : vector<16x128xf32>
    %619 = arith.divf %617, %618 : vector<16x128xf32>
    %620 = vector.extract_strided_slice %592 {offsets = [0, 256], sizes = [16, 128], strides = [1, 1]} : vector<16x384xf32> to vector<16x128xf32>
    %621 = vector.extract_strided_slice %599 {offsets = [0, 256], sizes = [16, 128], strides = [1, 1]} : vector<16x384xf32> to vector<16x128xf32>
    %622 = arith.mulf %611, %621 : vector<16x128xf32>
    %623 = arith.addf %620, %622 : vector<16x128xf32>
    %624 = math.tanh %623 : vector<16x128xf32>
    %cst_119 = arith.constant 1.000000e+00 : f32
    %625 = vector.broadcast %cst_119 : f32 to vector<16x128xf32>
    %626 = arith.subf %625, %619 : vector<16x128xf32>
    %627 = arith.mulf %626, %624 : vector<16x128xf32>
    %628 = arith.mulf %619, %579 : vector<16x128xf32>
    %629 = arith.addf %627, %628 : vector<16x128xf32>
    %630 = vector.extract_strided_slice %595 {offsets = [0, 0], sizes = [16, 128], strides = [1, 1]} : vector<16x384xf32> to vector<16x128xf32>
    %631 = vector.extract_strided_slice %603 {offsets = [0, 0], sizes = [16, 128], strides = [1, 1]} : vector<16x384xf32> to vector<16x128xf32>
    %632 = arith.addf %630, %631 : vector<16x128xf32>
    %633 = arith.negf %632 : vector<16x128xf32>
    %634 = math.exp %633 : vector<16x128xf32>
    %cst_120 = arith.constant 1.000000e+00 : f32
    %635 = vector.broadcast %cst_120 : f32 to vector<16x128xf32>
    %636 = arith.addf %635, %634 : vector<16x128xf32>
    %637 = arith.divf %635, %636 : vector<16x128xf32>
    %638 = vector.extract_strided_slice %595 {offsets = [0, 128], sizes = [16, 128], strides = [1, 1]} : vector<16x384xf32> to vector<16x128xf32>
    %639 = vector.extract_strided_slice %603 {offsets = [0, 128], sizes = [16, 128], strides = [1, 1]} : vector<16x384xf32> to vector<16x128xf32>
    %640 = arith.addf %638, %639 : vector<16x128xf32>
    %641 = arith.negf %640 : vector<16x128xf32>
    %642 = math.exp %641 : vector<16x128xf32>
    %cst_121 = arith.constant 1.000000e+00 : f32
    %643 = vector.broadcast %cst_121 : f32 to vector<16x128xf32>
    %644 = arith.addf %643, %642 : vector<16x128xf32>
    %645 = arith.divf %643, %644 : vector<16x128xf32>
    %646 = vector.extract_strided_slice %595 {offsets = [0, 256], sizes = [16, 128], strides = [1, 1]} : vector<16x384xf32> to vector<16x128xf32>
    %647 = vector.extract_strided_slice %603 {offsets = [0, 256], sizes = [16, 128], strides = [1, 1]} : vector<16x384xf32> to vector<16x128xf32>
    %648 = arith.mulf %637, %647 : vector<16x128xf32>
    %649 = arith.addf %646, %648 : vector<16x128xf32>
    %650 = math.tanh %649 : vector<16x128xf32>
    %cst_122 = arith.constant 1.000000e+00 : f32
    %651 = vector.broadcast %cst_122 : f32 to vector<16x128xf32>
    %652 = arith.subf %651, %645 : vector<16x128xf32>
    %653 = arith.mulf %652, %650 : vector<16x128xf32>
    %654 = arith.mulf %645, %584 : vector<16x128xf32>
    %655 = arith.addf %653, %654 : vector<16x128xf32>
    %656 = vector.broadcast %c7_i32_109 : i32 to vector<16x1xi32>
    %657 = arith.cmpi slt, %656, %8 : vector<16x1xi32>
    %658 = vector.shape_cast %657 : vector<16x1xi1> to vector<16x1xi1>
    %659 = vector.broadcast %658 : vector<16x1xi1> to vector<16x128xi1>
    %660 = arith.select %659, %629, %579 : vector<16x128xi1>, vector<16x128xf32>
    %661 = vector.broadcast %585 : i32 to vector<16x1xi32>
    %662 = arith.cmpi slt, %661, %8 : vector<16x1xi32>
    %663 = vector.shape_cast %662 : vector<16x1xi1> to vector<16x1xi1>
    %664 = vector.broadcast %663 : vector<16x1xi1> to vector<16x128xi1>
    %665 = arith.select %664, %655, %584 : vector<16x128xi1>, vector<16x128xf32>
    %c8_i32 = arith.constant 8 : i32
    %c0_123 = arith.constant 0 : index
    %c0_124 = arith.constant 0 : index
    %c0_125 = arith.constant 0 : index
    %666 = vector.load %arg6[%c0_123, %c0_124, %c0_125] : memref<2x16x128xf32, #tpu.memory_space<vmem>>, vector<1x16x128xf32>
    %667 = vector.shape_cast %666 : vector<1x16x128xf32> to vector<16x128xf32>
    %668 = vector.shape_cast %660 : vector<16x128xf32> to vector<1x16x128xf32>
    tpu.vector_store %arg6[%c0_123, %c0_124, %c0_125], %668 {strides = array<i32>} : memref<2x16x128xf32, #tpu.memory_space<vmem>>, vector<1x16x128xf32>,
    %c1_126 = arith.constant 1 : index
    %c0_127 = arith.constant 0 : index
    %c0_128 = arith.constant 0 : index
    %669 = vector.load %arg6[%c1_126, %c0_127, %c0_128] : memref<2x16x128xf32, #tpu.memory_space<vmem>>, vector<1x16x128xf32>
    %670 = vector.shape_cast %669 : vector<1x16x128xf32> to vector<16x128xf32>
    %671 = vector.shape_cast %665 : vector<16x128xf32> to vector<1x16x128xf32>
    tpu.vector_store %arg6[%c1_126, %c0_127, %c0_128], %671 {strides = array<i32>} : memref<2x16x128xf32, #tpu.memory_space<vmem>>, vector<1x16x128xf32>,
    return
  }
}

</mosaic_0001>

<llo_original>
// kernel: tpu_custom_call.1
$region0: #{tpu_custom_call.1}
  #allocation0 [shape = 'u32[]', space=smem, size = 0x4, offset = 0x4, fixed_abs, tag = 'smem constant byte address 0x4 - core index']
  #allocation1 [shape = 'u32[144,128]{1,0:T(1,128)}', space=vmem, size = 0x12000, scoped, tag = 'internal scratch']
  #allocation2 [shape = 'bf16[128,768]{1,0:T(8,128)(2,1)}', space=vmem, size = 0x30000, scoped, tag = 'scratch operand']
  %s0 = inlined_call_operand.hbm [shape: bf16[128,128], index: 0, kind: input, shape index: {}]
  %s1 = inlined_call_operand.vmem [shape: s32[16,1], index: 1, kind: input, shape index: {}]
  %s2 = inlined_call_operand.hbm [shape: bf16[128,768], index: 2, kind: input, shape index: {}]
  %s3 = inlined_call_operand.hbm [shape: bf16[2,128,384], index: 3, kind: input, shape index: {}]
  %s4 = inlined_call_operand.vmem [shape: f32[1,768], index: 4, kind: input, shape index: {}]
  %s5 = inlined_call_operand.vmem [shape: f32[2,1,384], index: 5, kind: input, shape index: {}]
  %s6 = inlined_call_operand.hbm [shape: f32[2,16,128], index: 6, kind: output, shape index: {}]
  %s7 = sld [smem:[#allocation0]]
  $region46: #{tpu_custom_call.1} parent=0
    _
  %s9 = ssub.s32 1, %s7
  %s10 = scalar_select 0, %s9, %s7
  $region1: #{tpu_custom_call.1} parent=0
    #allocation3 [shape = 'u8[32768]{0}', space=vmem, size = 0x8000, scoped, tag = 'input window, operand 0, single buffered']
    #allocation4 [shape = 's32[1]{0}', space=sflag, size = 0x4, scoped, tag = 'scoped memory for tpu_custom_call.1']
    #allocation5 [shape = 's32[1]{0}', space=sflag, size = 0x4, scoped, tag = 'scoped memory for tpu_custom_call.1']
    #allocation6 [shape = 'u8[196608]{0}', space=vmem, size = 0x30000, scoped, tag = 'input window, operand 2, single buffered']
    #allocation7 [shape = 's32[1]{0}', space=sflag, size = 0x4, scoped, tag = 'scoped memory for tpu_custom_call.1']
    #allocation8 [shape = 'u8[196608]{0}', space=vmem, size = 0x30000, scoped, tag = 'input window, operand 3, single buffered']
    #allocation9 [shape = 'u8[16384]{0}', space=vmem, size = 0x4000, scoped, tag = 'output window, operand 0, single buffered']
    %11 = vsyncpa [#allocation4], 0
    %12 = vsyncpa [#allocation7], 0
    %13 = vsyncpa [#allocation5], 0
    // Predicated region
    $region2: #{tpu_custom_call.1} parent=1 // pred_check
      _
    $region3: #{tpu_custom_call.1} parent=1 // pred_check_branch
      %15 = sbr.rel (0) target = $region5
    $region4: #{tpu_custom_call.1} parent=1 // pred_region
      %s17 = ssub.s32 1024, 1024
      %18 = vsyncadd [#allocation4], %s17
      %s19 = sshll.u32 [#allocation3], 4
      %s20 = int_to_ptr.vmem [resolvable:$true] %s19
      %25 = dma.hbm_to_vmem [thread:$0]  %s0, 1024, %s20, [#allocation4], 64, 64, 4
    $region5: #{tpu_custom_call.1} parent=1 // pred_fallthru
      _
    // Predicated region
    $region6: #{tpu_custom_call.1} parent=1 // pred_check
      _
    $region7: #{tpu_custom_call.1} parent=1 // pred_check_branch
      %27 = sbr.rel (0) target = $region9
    $region8: #{tpu_custom_call.1} parent=1 // pred_region
      _
    $region9: #{tpu_custom_call.1} parent=1 // pred_fallthru
      _
    // Predicated region
    $region10: #{tpu_custom_call.1} parent=1 // pred_check
      _
    $region11: #{tpu_custom_call.1} parent=1 // pred_check_branch
      %29 = sbr.rel (0) target = $region13
    $region12: #{tpu_custom_call.1} parent=1 // pred_region
      %s31 = ssub.s32 6144, 6144
      %32 = vsyncadd [#allocation7], %s31
      %s33 = sshll.u32 [#allocation6], 4
      %s34 = int_to_ptr.vmem [resolvable:$true] %s33
      %39 = dma.hbm_to_vmem [thread:$0]  %s2, 6144, %s34, [#allocation7], 384, 384, 24
    $region13: #{tpu_custom_call.1} parent=1 // pred_fallthru
      _
    // Predicated region
    $region14: #{tpu_custom_call.1} parent=1 // pred_check
      _
    $region15: #{tpu_custom_call.1} parent=1 // pred_check_branch
      %41 = sbr.rel (0) target = $region17
    $region16: #{tpu_custom_call.1} parent=1 // pred_region
      %s43 = ssub.s32 6144, 6144
      %44 = vsyncadd [#allocation7], %s43
      %s45 = sshll.u32 [#allocation8], 4
      %s46 = int_to_ptr.vmem [resolvable:$true] %s45
      %51 = dma.hbm_to_vmem [thread:$0]  %s3, 6144, %s46, [#allocation7], 192, 192, 12
    $region17: #{tpu_custom_call.1} parent=1 // pred_fallthru
      _
    // Predicated region
    $region18: #{tpu_custom_call.1} parent=1 // pred_check
      _
    $region19: #{tpu_custom_call.1} parent=1 // pred_check_branch
      %53 = sbr.rel (0) target = $region21
    $region20: #{tpu_custom_call.1} parent=1 // pred_region
      _
    $region21: #{tpu_custom_call.1} parent=1 // pred_fallthru
      _
    // Predicated region
    $region22: #{tpu_custom_call.1} parent=1 // pred_check
      _
    $region23: #{tpu_custom_call.1} parent=1 // pred_check_branch
      %55 = sbr.rel (0) target = $region25
    $region24: #{tpu_custom_call.1} parent=1 // pred_region
      _
    $region25: #{tpu_custom_call.1} parent=1 // pred_fallthru
      _
    // Predicated region
    $region26: #{tpu_custom_call.1} parent=1 // pred_check
      _
    $region27: #{tpu_custom_call.1} parent=1 // pred_check_branch
      %57 = sbr.rel (0) target = $region29
    $region28: #{tpu_custom_call.1} parent=1 // pred_region
      %58 = dma.done [#allocation4], 1024
    $region29: #{tpu_custom_call.1} parent=1 // pred_fallthru
      _
    // Predicated region
    $region30: #{tpu_custom_call.1} parent=1 // pred_check
      _
    $region31: #{tpu_custom_call.1} parent=1 // pred_check_branch
      %60 = sbr.rel (0) target = $region33
    $region32: #{tpu_custom_call.1} parent=1 // pred_region
      %61 = dma.done [#allocation7], 6144
    $region33: #{tpu_custom_call.1} parent=1 // pred_fallthru
      _
    // Predicated region
    $region34: #{tpu_custom_call.1} parent=1 // pred_check
      _
    $region35: #{tpu_custom_call.1} parent=1 // pred_check_branch
      %63 = sbr.rel (0) target = $region37
    $region36: #{tpu_custom_call.1} parent=1 // pred_region
      %64 = dma.done [#allocation7], 6144
    $region37: #{tpu_custom_call.1} parent=1 // pred_fallthru
      _
    %v66 = vld [vmem:[#allocation3] sm:$0xf]
    %v67 = vld [vmem:[#allocation3 + $0x4] sm:$0xf]
    %v68 = vld [vmem:[#allocation3 + $0x8] sm:$0xf]
    %v69 = vld [vmem:[#allocation3 + $0xc] sm:$0xf]
    %v70 = vld [vmem:[#allocation3 + $0x10] sm:$0xf]
    %v71 = vld [vmem:[#allocation3 + $0x14] sm:$0xf]
    %v72 = vld [vmem:[#allocation3 + $0x18] sm:$0xf]
    %v73 = vld [vmem:[#allocation3 + $0x1c] sm:$0xf]
    %v74 = vld [vmem:[#allocation3 + $0x20] sm:$0xf]
    %v75 = vld [vmem:[#allocation3 + $0x24] sm:$0xf]
    %v76 = vld [vmem:[#allocation3 + $0x28] sm:$0xf]
    %v77 = vld [vmem:[#allocation3 + $0x2c] sm:$0xf]
    %v78 = vld [vmem:[#allocation3 + $0x30] sm:$0xf]
    %v79 = vld [vmem:[#allocation3 + $0x34] sm:$0xf]
    %v80 = vld [vmem:[#allocation3 + $0x38] sm:$0xf]
    %v81 = vld [vmem:[#allocation3 + $0x3c] sm:$0xf]
    %v82 = vld [vmem:[#allocation6] sm:$0xff]
    %v83 = vld [vmem:[#allocation6 + $0x8] sm:$0xff]
    %v84 = vld [vmem:[#allocation6 + $0x10] sm:$0xff]
    %v85 = vld [vmem:[#allocation6 + $0x18] sm:$0xff]
    %v86 = vld [vmem:[#allocation6 + $0x20] sm:$0xff]
    %v87 = vld [vmem:[#allocation6 + $0x28] sm:$0xff]
    %v88 = vld [vmem:[#allocation6 + $0x30] sm:$0xff]
    %v89 = vld [vmem:[#allocation6 + $0x38] sm:$0xff]
    %v90 = vld [vmem:[#allocation6 + $0x40] sm:$0xff]
    %v91 = vld [vmem:[#allocation6 + $0x48] sm:$0xff]
    %v92 = vld [vmem:[#allocation6 + $0x50] sm:$0xff]
    %v93 = vld [vmem:[#allocation6 + $0x58] sm:$0xff]
    %v94 = vld [vmem:[#allocation6 + $0x60] sm:$0xff]
    %v95 = vld [vmem:[#allocation6 + $0x68] sm:$0xff]
    %v96 = vld [vmem:[#allocation6 + $0x70] sm:$0xff]
    %v97 = vld [vmem:[#allocation6 + $0x78] sm:$0xff]
    %v98 = vld [vmem:[#allocation6 + $0x80] sm:$0xff]
    %v99 = vld [vmem:[#allocation6 + $0x88] sm:$0xff]
    %v100 = vld [vmem:[#allocation6 + $0x90] sm:$0xff]
    %v101 = vld [vmem:[#allocation6 + $0x98] sm:$0xff]
    %v102 = vld [vmem:[#allocation6 + $0xa0] sm:$0xff]
    %v103 = vld [vmem:[#allocation6 + $0xa8] sm:$0xff]
    %v104 = vld [vmem:[#allocation6 + $0xb0] sm:$0xff]
    %v105 = vld [vmem:[#allocation6 + $0xb8] sm:$0xff]
    %v106 = vld [vmem:[#allocation6 + $0xc0] sm:$0xff]
    %v107 = vld [vmem:[#allocation6 + $0xc8] sm:$0xff]
    %v108 = vld [vmem:[#allocation6 + $0xd0] sm:$0xff]
    %v109 = vld [vmem:[#allocation6 + $0xd8] sm:$0xff]
    %v110 = vld [vmem:[#allocation6 + $0xe0] sm:$0xff]
    %v111 = vld [vmem:[#allocation6 + $0xe8] sm:$0xff]
    %v112 = vld [vmem:[#allocation6 + $0xf0] sm:$0xff]
    %v113 = vld [vmem:[#allocation6 + $0xf8] sm:$0xff]
    %v114 = vld [vmem:[#allocation6 + $0x100] sm:$0xff]
    %v115 = vld [vmem:[#allocation6 + $0x108] sm:$0xff]
    %v116 = vld [vmem:[#allocation6 + $0x110] sm:$0xff]
    %v117 = vld [vmem:[#allocation6 + $0x118] sm:$0xff]
    %v118 = vld [vmem:[#allocation6 + $0x120] sm:$0xff]
    %v119 = vld [vmem:[#allocation6 + $0x128] sm:$0xff]
    %v120 = vld [vmem:[#allocation6 + $0x130] sm:$0xff]
    %v121 = vld [vmem:[#allocation6 + $0x138] sm:$0xff]
    %v122 = vld [vmem:[#allocation6 + $0x140] sm:$0xff]
    %v123 = vld [vmem:[#allocation6 + $0x148] sm:$0xff]
    %v124 = vld [vmem:[#allocation6 + $0x150] sm:$0xff]
    %v125 = vld [vmem:[#allocation6 + $0x158] sm:$0xff]
    %v126 = vld [vmem:[#allocation6 + $0x160] sm:$0xff]
    %v127 = vld [vmem:[#allocation6 + $0x168] sm:$0xff]
    %v128 = vld [vmem:[#allocation6 + $0x170] sm:$0xff]
    %v129 = vld [vmem:[#allocation6 + $0x178] sm:$0xff]
    %v130 = vld [vmem:[%s4] sm:$0x3f]
    %v132 = vlaneseq
    %v133 = vshrl.u32 %v132, 7
    %v134 = vsub.s32 0, %v133
    %v135 = vrot.slane %v130, %v134
    %v136 = vlaneseq
    %v137 = vshrl.u32 %v136, 7
    %v138 = vsub.s32 1, %v137
    %v139 = vrot.slane %v130, %v138
    %v140 = vlaneseq
    %v141 = vshrl.u32 %v140, 7
    %v142 = vsub.s32 2, %v141
    %v143 = vrot.slane %v130, %v142
    %v144 = vlaneseq
    %v145 = vshrl.u32 %v144, 7
    %v146 = vsub.s32 3, %v145
    %v147 = vrot.slane %v130, %v146
    %v148 = vlaneseq
    %v149 = vshrl.u32 %v148, 7
    %v150 = vsub.s32 4, %v149
    %v151 = vrot.slane %v130, %v150
    %v152 = vlaneseq
    %v153 = vshrl.u32 %v152, 7
    %v154 = vsub.s32 5, %v153
    %v155 = vrot.slane %v130, %v154
    %v178 = vunpack.c.l.b16 %v66
    %v179 = vunpack.c.l.b16 %v67
    %v180 = vunpack.c.l.b16 %v68
    %v181 = vunpack.c.l.b16 %v69
    %v182 = vunpack.c.l.b16 %v70
    %v183 = vunpack.c.l.b16 %v71
    %v184 = vunpack.c.l.b16 %v72
    %v185 = vunpack.c.l.b16 %v73
    %v186 = vunpack.c.l.b16 %v74
    %v187 = vunpack.c.l.b16 %v75
    %v188 = vunpack.c.l.b16 %v76
    %v189 = vunpack.c.l.b16 %v77
    %v190 = vunpack.c.l.b16 %v78
    %v191 = vunpack.c.l.b16 %v79
    %v192 = vunpack.c.l.b16 %v80
    %v193 = vunpack.c.l.b16 %v81
    %v194 = vpack.c.b16 %v179, %v178
    %v195 = vpack.c.b16 %v181, %v180
    %v196 = vpack.c.b16 %v183, %v182
    %v197 = vpack.c.b16 %v185, %v184
    %v198 = vpack.c.b16 %v187, %v186
    %v199 = vpack.c.b16 %v189, %v188
    %v200 = vpack.c.b16 %v191, %v190
    %v201 = vpack.c.b16 %v193, %v192
    %v258 = vunpack.c.l.b16 %v82
    %v259 = vunpack.c.h.b16 %v82
    %v260 = vunpack.c.l.b16 %v83
    %v261 = vunpack.c.h.b16 %v83
    %v262 = vunpack.c.l.b16 %v84
    %v263 = vunpack.c.h.b16 %v84
    %v264 = vunpack.c.l.b16 %v85
    %v265 = vunpack.c.h.b16 %v85
    %v266 = vunpack.c.l.b16 %v86
    %v267 = vunpack.c.h.b16 %v86
    %v268 = vunpack.c.l.b16 %v87
    %v269 = vunpack.c.h.b16 %v87
    %v270 = vunpack.c.l.b16 %v88
    %v271 = vunpack.c.h.b16 %v88
    %v272 = vunpack.c.l.b16 %v89
    %v273 = vunpack.c.h.b16 %v89
    %v274 = vunpack.c.l.b16 %v90
    %v275 = vunpack.c.h.b16 %v90
    %v276 = vunpack.c.l.b16 %v91
    %v277 = vunpack.c.h.b16 %v91
    %v278 = vunpack.c.l.b16 %v92
    %v279 = vunpack.c.h.b16 %v92
    %v280 = vunpack.c.l.b16 %v93
    %v281 = vunpack.c.h.b16 %v93
    %v282 = vunpack.c.l.b16 %v94
    %v283 = vunpack.c.h.b16 %v94
    %v284 = vunpack.c.l.b16 %v95
    %v285 = vunpack.c.h.b16 %v95
    %v286 = vunpack.c.l.b16 %v96
    %v287 = vunpack.c.h.b16 %v96
    %v288 = vunpack.c.l.b16 %v97
    %v289 = vunpack.c.h.b16 %v97
    %v290 = vunpack.c.l.b16 %v98
    %v291 = vunpack.c.h.b16 %v98
    %v292 = vunpack.c.l.b16 %v99
    %v293 = vunpack.c.h.b16 %v99
    %v294 = vunpack.c.l.b16 %v100
    %v295 = vunpack.c.h.b16 %v100
    %v296 = vunpack.c.l.b16 %v101
    %v297 = vunpack.c.h.b16 %v101
    %v298 = vunpack.c.l.b16 %v102
    %v299 = vunpack.c.h.b16 %v102
    %v300 = vunpack.c.l.b16 %v103
    %v301 = vunpack.c.h.b16 %v103
    %v302 = vunpack.c.l.b16 %v104
    %v303 = vunpack.c.h.b16 %v104
    %v304 = vunpack.c.l.b16 %v105
    %v305 = vunpack.c.h.b16 %v105
    %v306 = vunpack.c.l.b16 %v106
    %v307 = vunpack.c.h.b16 %v106
    %v308 = vunpack.c.l.b16 %v107
    %v309 = vunpack.c.h.b16 %v107
    %v310 = vunpack.c.l.b16 %v108
    %v311 = vunpack.c.h.b16 %v108
    %v312 = vunpack.c.l.b16 %v109
    %v313 = vunpack.c.h.b16 %v109
    %v314 = vunpack.c.l.b16 %v110
    %v315 = vunpack.c.h.b16 %v110
    %v316 = vunpack.c.l.b16 %v111
    %v317 = vunpack.c.h.b16 %v111
    %v318 = vunpack.c.l.b16 %v112
    %v319 = vunpack.c.h.b16 %v112
    %v320 = vunpack.c.l.b16 %v113
    %v321 = vunpack.c.h.b16 %v113
    %v322 = vunpack.c.l.b16 %v114
    %v323 = vunpack.c.h.b16 %v114
    %v324 = vunpack.c.l.b16 %v115
    %v325 = vunpack.c.h.b16 %v115
    %v326 = vunpack.c.l.b16 %v116
    %v327 = vunpack.c.h.b16 %v116
    %v328 = vunpack.c.l.b16 %v117
    %v329 = vunpack.c.h.b16 %v117
    %v330 = vunpack.c.l.b16 %v118
    %v331 = vunpack.c.h.b16 %v118
    %v332 = vunpack.c.l.b16 %v119
    %v333 = vunpack.c.h.b16 %v119
    %v334 = vunpack.c.l.b16 %v120
    %v335 = vunpack.c.h.b16 %v120
    %v336 = vunpack.c.l.b16 %v121
    %v337 = vunpack.c.h.b16 %v121
    %v338 = vunpack.c.l.b16 %v122
    %v339 = vunpack.c.h.b16 %v122
    %v340 = vunpack.c.l.b16 %v123
    %v341 = vunpack.c.h.b16 %v123
    %v342 = vunpack.c.l.b16 %v124
    %v343 = vunpack.c.h.b16 %v124
    %v344 = vunpack.c.l.b16 %v125
    %v345 = vunpack.c.h.b16 %v125
    %v346 = vunpack.c.l.b16 %v126
    %v347 = vunpack.c.h.b16 %v126
    %v348 = vunpack.c.l.b16 %v127
    %v349 = vunpack.c.h.b16 %v127
    %v350 = vunpack.c.l.b16 %v128
    %v351 = vunpack.c.h.b16 %v128
    %v352 = vunpack.c.l.b16 %v129
    %v353 = vunpack.c.h.b16 %v129
    %v354 = vpack.c.b16 %v264, %v258
    %v355 = vpack.c.b16 %v265, %v259
    %v356 = vpack.c.b16 %v266, %v260
    %v357 = vpack.c.b16 %v267, %v261
    %v358 = vpack.c.b16 %v268, %v262
    %v359 = vpack.c.b16 %v269, %v263
    %v360 = vpack.c.b16 %v276, %v270
    %v361 = vpack.c.b16 %v277, %v271
    %v362 = vpack.c.b16 %v278, %v272
    %v363 = vpack.c.b16 %v279, %v273
    %v364 = vpack.c.b16 %v280, %v274
    %v365 = vpack.c.b16 %v281, %v275
    %v366 = vpack.c.b16 %v288, %v282
    %v367 = vpack.c.b16 %v289, %v283
    %v368 = vpack.c.b16 %v290, %v284
    %v369 = vpack.c.b16 %v291, %v285
    %v370 = vpack.c.b16 %v292, %v286
    %v371 = vpack.c.b16 %v293, %v287
    %v372 = vpack.c.b16 %v300, %v294
    %v373 = vpack.c.b16 %v301, %v295
    %v374 = vpack.c.b16 %v302, %v296
    %v375 = vpack.c.b16 %v303, %v297
    %v376 = vpack.c.b16 %v304, %v298
    %v377 = vpack.c.b16 %v305, %v299
    %v378 = vpack.c.b16 %v312, %v306
    %v379 = vpack.c.b16 %v313, %v307
    %v380 = vpack.c.b16 %v314, %v308
    %v381 = vpack.c.b16 %v315, %v309
    %v382 = vpack.c.b16 %v316, %v310
    %v383 = vpack.c.b16 %v317, %v311
    %v384 = vpack.c.b16 %v324, %v318
    %v385 = vpack.c.b16 %v325, %v319
    %v386 = vpack.c.b16 %v326, %v320
    %v387 = vpack.c.b16 %v327, %v321
    %v388 = vpack.c.b16 %v328, %v322
    %v389 = vpack.c.b16 %v329, %v323
    %v390 = vpack.c.b16 %v336, %v330
    %v391 = vpack.c.b16 %v337, %v331
    %v392 = vpack.c.b16 %v338, %v332
    %v393 = vpack.c.b16 %v339, %v333
    %v394 = vpack.c.b16 %v340, %v334
    %v395 = vpack.c.b16 %v341, %v335
    %v396 = vpack.c.b16 %v348, %v342
    %v397 = vpack.c.b16 %v349, %v343
    %v398 = vpack.c.b16 %v350, %v344
    %v399 = vpack.c.b16 %v351, %v345
    %v400 = vpack.c.b16 %v352, %v346
    %v401 = vpack.c.b16 %v353, %v347
    %450 = vmatprep.subr.bf16.mxu0 %v397
    %451 = vmatpush1.bf16.msra.mxu0 %v396
    %452 = vmatprep.subr.bf16.mxu0 %v391
    %453 = vmatpush1.bf16.msra.mxu0 %v390
    %454 = vmatprep.subr.bf16.mxu0 %v385
    %455 = vmatpush1.bf16.msra.mxu0 %v384
    %456 = vmatprep.subr.bf16.mxu0 %v379
    %457 = vmatpush1.bf16.msra.mxu0 %v378
    %458 = vmatprep.subr.bf16.mxu0 %v373
    %459 = vmatpush1.bf16.msra.mxu0 %v372
    %460 = vmatprep.subr.bf16.mxu0 %v367
    %461 = vmatpush1.bf16.msra.mxu0 %v366
    %462 = vmatprep.subr.bf16.mxu0 %v361
    %463 = vmatpush1.bf16.msra.mxu0 %v360
    %464 = vmatprep.subr.bf16.mxu0 %v355
    %465 = vmatpush1.bf16.msra.mxu0 %v354
    %466 = vmatprep.subr.bf16.mxu0 0
    %467 = vmatpush2.bf16.msra.mxu0 0
    %468 = vmatprep.subr.bf16.mxu0 0
    %469 = vmatpush2.bf16.msra.mxu0 0
    %470 = vmatprep.subr.bf16.mxu0 0
    %471 = vmatpush2.bf16.msra.mxu0 0
    %472 = vmatprep.subr.bf16.mxu0 0
    %473 = vmatpush2.bf16.msra.mxu0 0
    %474 = vmatprep.subr.bf16.mxu0 0
    %475 = vmatpush2.bf16.msra.mxu0 0
    %476 = vmatprep.subr.bf16.mxu0 0
    %477 = vmatpush2.bf16.msra.mxu0 0
    %478 = vmatprep.subr.bf16.mxu0 0
    %479 = vmatpush2.bf16.msra.mxu0 0
    %480 = vmatprep.subr.bf16.mxu0 0
    %481 = vmatpush2.bf16.msra.mxu0 0
    %482 = vmatprep.mubr.bf16.mxu0 0
    %483 = vmatmul.mubr.bf16.gmra.mxu0 %v194
    %v484 = vpop.f32.mrf.mxu0
    %v485 = vadd.f32 %v135, %v484
    %v486 = vpop.f32.mrf.mxu0
    %v487 = vadd.f32 %v139, %v486
    %v488 = vpop.f32.mrf.mxu0
    %v489 = vadd.f32 %v135, %v488
    %v490 = vpop.f32.mrf.mxu0
    %v491 = vadd.f32 %v139, %v490
    %492 = vmatprep.mubr.bf16.mxu0 0
    %493 = vmatmul.mubr.bf16.gmra.mxu0 %v195
    %v494 = vpop.f32.mrf.mxu0
    %v495 = vadd.f32 %v135, %v494
    %v496 = vpop.f32.mrf.mxu0
    %v497 = vadd.f32 %v139, %v496
    %v498 = vpop.f32.mrf.mxu0
    %v499 = vadd.f32 %v135, %v498
    %v500 = vpop.f32.mrf.mxu0
    %v501 = vadd.f32 %v139, %v500
    %502 = vmatprep.mubr.bf16.mxu0 0
    %503 = vmatmul.mubr.bf16.gmra.mxu0 %v196
    %v504 = vpop.f32.mrf.mxu0
    %v505 = vadd.f32 %v135, %v504
    %v506 = vpop.f32.mrf.mxu0
    %v507 = vadd.f32 %v139, %v506
    %v508 = vpop.f32.mrf.mxu0
    %v509 = vadd.f32 %v135, %v508
    %v510 = vpop.f32.mrf.mxu0
    %v511 = vadd.f32 %v139, %v510
    %512 = vmatprep.mubr.bf16.mxu0 0
    %513 = vmatmul.mubr.bf16.gmra.mxu0 %v197
    %v514 = vpop.f32.mrf.mxu0
    %v515 = vadd.f32 %v135, %v514
    %v516 = vpop.f32.mrf.mxu0
    %v517 = vadd.f32 %v139, %v516
    %v518 = vpop.f32.mrf.mxu0
    %v519 = vadd.f32 %v135, %v518
    %v520 = vpop.f32.mrf.mxu0
    %v521 = vadd.f32 %v139, %v520
    %522 = vmatprep.mubr.bf16.mxu0 0
    %523 = vmatmul.mubr.bf16.gmra.mxu0 %v198
    %v524 = vpop.f32.mrf.mxu0
    %v525 = vadd.f32 %v135, %v524
    %v526 = vpop.f32.mrf.mxu0
    %v527 = vadd.f32 %v139, %v526
    %v528 = vpop.f32.mrf.mxu0
    %v529 = vadd.f32 %v135, %v528
    %v530 = vpop.f32.mrf.mxu0
    %v531 = vadd.f32 %v139, %v530
    %532 = vmatprep.mubr.bf16.mxu0 0
    %533 = vmatmul.mubr.bf16.gmra.mxu0 %v199
    %v534 = vpop.f32.mrf.mxu0
    %v535 = vadd.f32 %v135, %v534
    %v536 = vpop.f32.mrf.mxu0
    %v537 = vadd.f32 %v139, %v536
    %v538 = vpop.f32.mrf.mxu0
    %v539 = vadd.f32 %v135, %v538
    %v540 = vpop.f32.mrf.mxu0
    %v541 = vadd.f32 %v139, %v540
    %542 = vmatprep.mubr.bf16.mxu0 0
    %543 = vmatmul.mubr.bf16.gmra.mxu0 %v200
    %v544 = vpop.f32.mrf.mxu0
    %v545 = vadd.f32 %v135, %v544
    %v546 = vpop.f32.mrf.mxu0
    %v547 = vadd.f32 %v139, %v546
    %v548 = vpop.f32.mrf.mxu0
    %v549 = vadd.f32 %v135, %v548
    %v550 = vpop.f32.mrf.mxu0
    %v551 = vadd.f32 %v139, %v550
    %552 = vmatprep.mubr.bf16.mxu0 0
    %553 = vmatmul.mubr.bf16.gmra.mxu0 %v201
    %v554 = vpop.f32.mrf.mxu0
    %v555 = vadd.f32 %v135, %v554
    %v556 = vpop.f32.mrf.mxu0
    %v557 = vadd.f32 %v139, %v556
    %v558 = vpop.f32.mrf.mxu0
    %v559 = vadd.f32 %v135, %v558
    %v560 = vpop.f32.mrf.mxu0
    %v561 = vadd.f32 %v139, %v560
    %562 = vdwg.mxu0
    %563 = vmatprep.subr.bf16.mxu0 %v399
    %564 = vmatpush1.bf16.msra.mxu0 %v398
    %565 = vmatprep.subr.bf16.mxu0 %v393
    %566 = vmatpush1.bf16.msra.mxu0 %v392
    %567 = vmatprep.subr.bf16.mxu0 %v387
    %568 = vmatpush1.bf16.msra.mxu0 %v386
    %569 = vmatprep.subr.bf16.mxu0 %v381
    %570 = vmatpush1.bf16.msra.mxu0 %v380
    %571 = vmatprep.subr.bf16.mxu0 %v375
    %572 = vmatpush1.bf16.msra.mxu0 %v374
    %573 = vmatprep.subr.bf16.mxu0 %v369
    %574 = vmatpush1.bf16.msra.mxu0 %v368
    %575 = vmatprep.subr.bf16.mxu0 %v363
    %576 = vmatpush1.bf16.msra.mxu0 %v362
    %577 = vmatprep.subr.bf16.mxu0 %v357
    %578 = vmatpush1.bf16.msra.mxu0 %v356
    %579 = vmatprep.subr.bf16.mxu0 0
    %580 = vmatpush2.bf16.msra.mxu0 0
    %581 = vmatprep.subr.bf16.mxu0 0
    %582 = vmatpush2.bf16.msra.mxu0 0
    %583 = vmatprep.subr.bf16.mxu0 0
    %584 = vmatpush2.bf16.msra.mxu0 0
    %585 = vmatprep.subr.bf16.mxu0 0
    %586 = vmatpush2.bf16.msra.mxu0 0
    %587 = vmatprep.subr.bf16.mxu0 0
    %588 = vmatpush2.bf16.msra.mxu0 0
    %589 = vmatprep.subr.bf16.mxu0 0
    %590 = vmatpush2.bf16.msra.mxu0 0
    %591 = vmatprep.subr.bf16.mxu0 0
    %592 = vmatpush2.bf16.msra.mxu0 0
    %593 = vmatprep.subr.bf16.mxu0 0
    %594 = vmatpush2.bf16.msra.mxu0 0
    %595 = vmatprep.mubr.bf16.mxu0 0
    %596 = vmatmul.mubr.bf16.gmra.mxu0 %v194
    %v597 = vpop.f32.mrf.mxu0
    %v598 = vadd.f32 %v143, %v597
    %v599 = vpop.f32.mrf.mxu0
    %v600 = vadd.f32 %v147, %v599
    %v601 = vpop.f32.mrf.mxu0
    %v602 = vadd.f32 %v143, %v601
    %v603 = vpop.f32.mrf.mxu0
    %v604 = vadd.f32 %v147, %v603
    %605 = vmatprep.mubr.bf16.mxu0 0
    %606 = vmatmul.mubr.bf16.gmra.mxu0 %v195
    %v607 = vpop.f32.mrf.mxu0
    %v608 = vadd.f32 %v143, %v607
    %v609 = vpop.f32.mrf.mxu0
    %v610 = vadd.f32 %v147, %v609
    %v611 = vpop.f32.mrf.mxu0
    %v612 = vadd.f32 %v143, %v611
    %v613 = vpop.f32.mrf.mxu0
    %v614 = vadd.f32 %v147, %v613
    %615 = vmatprep.mubr.bf16.mxu0 0
    %616 = vmatmul.mubr.bf16.gmra.mxu0 %v196
    %v617 = vpop.f32.mrf.mxu0
    %v618 = vadd.f32 %v143, %v617
    %v619 = vpop.f32.mrf.mxu0
    %v620 = vadd.f32 %v147, %v619
    %v621 = vpop.f32.mrf.mxu0
    %v622 = vadd.f32 %v143, %v621
    %v623 = vpop.f32.mrf.mxu0
    %v624 = vadd.f32 %v147, %v623
    %625 = vmatprep.mubr.bf16.mxu0 0
    %626 = vmatmul.mubr.bf16.gmra.mxu0 %v197
    %v627 = vpop.f32.mrf.mxu0
    %v628 = vadd.f32 %v143, %v627
    %v629 = vpop.f32.mrf.mxu0
    %v630 = vadd.f32 %v147, %v629
    %v631 = vpop.f32.mrf.mxu0
    %v632 = vadd.f32 %v143, %v631
    %v633 = vpop.f32.mrf.mxu0
    %v634 = vadd.f32 %v147, %v633
    %635 = vmatprep.mubr.bf16.mxu0 0
    %636 = vmatmul.mubr.bf16.gmra.mxu0 %v198
    %v637 = vpop.f32.mrf.mxu0
    %v638 = vadd.f32 %v143, %v637
    %v639 = vpop.f32.mrf.mxu0
    %v640 = vadd.f32 %v147, %v639
    %v641 = vpop.f32.mrf.mxu0
    %v642 = vadd.f32 %v143, %v641
    %v643 = vpop.f32.mrf.mxu0
    %v644 = vadd.f32 %v147, %v643
    %645 = vmatprep.mubr.bf16.mxu0 0
    %646 = vmatmul.mubr.bf16.gmra.mxu0 %v199
    %v647 = vpop.f32.mrf.mxu0
    %v648 = vadd.f32 %v143, %v647
    %v649 = vpop.f32.mrf.mxu0
    %v650 = vadd.f32 %v147, %v649
    %v651 = vpop.f32.mrf.mxu0
    %v652 = vadd.f32 %v143, %v651
    %v653 = vpop.f32.mrf.mxu0
    %v654 = vadd.f32 %v147, %v653
    %655 = vmatprep.mubr.bf16.mxu0 0
    %656 = vmatmul.mubr.bf16.gmra.mxu0 %v200
    %v657 = vpop.f32.mrf.mxu0
    %v658 = vadd.f32 %v143, %v657
    %v659 = vpop.f32.mrf.mxu0
    %v660 = vadd.f32 %v147, %v659
    %v661 = vpop.f32.mrf.mxu0
    %v662 = vadd.f32 %v143, %v661
    %v663 = vpop.f32.mrf.mxu0
    %v664 = vadd.f32 %v147, %v663
    %665 = vmatprep.mubr.bf16.mxu0 0
    %666 = vmatmul.mubr.bf16.gmra.mxu0 %v201
    %v667 = vpop.f32.mrf.mxu0
    %v668 = vadd.f32 %v143, %v667
    %v669 = vpop.f32.mrf.mxu0
    %v670 = vadd.f32 %v147, %v669
    %v671 = vpop.f32.mrf.mxu0
    %v672 = vadd.f32 %v143, %v671
    %v673 = vpop.f32.mrf.mxu0
    %v674 = vadd.f32 %v147, %v673
    %675 = vdwg.mxu0
    %676 = vmatprep.subr.bf16.mxu0 %v401
    %677 = vmatpush1.bf16.msra.mxu0 %v400
    %678 = vmatprep.subr.bf16.mxu0 %v395
    %679 = vmatpush1.bf16.msra.mxu0 %v394
    %680 = vmatprep.subr.bf16.mxu0 %v389
    %681 = vmatpush1.bf16.msra.mxu0 %v388
    %682 = vmatprep.subr.bf16.mxu0 %v383
    %683 = vmatpush1.bf16.msra.mxu0 %v382
    %684 = vmatprep.subr.bf16.mxu0 %v377
    %685 = vmatpush1.bf16.msra.mxu0 %v376
    %686 = vmatprep.subr.bf16.mxu0 %v371
    %687 = vmatpush1.bf16.msra.mxu0 %v370
    %688 = vmatprep.subr.bf16.mxu0 %v365
    %689 = vmatpush1.bf16.msra.mxu0 %v364
    %690 = vmatprep.subr.bf16.mxu0 %v359
    %691 = vmatpush1.bf16.msra.mxu0 %v358
    %692 = vmatprep.subr.bf16.mxu0 0
    %693 = vmatpush2.bf16.msra.mxu0 0
    %694 = vmatprep.subr.bf16.mxu0 0
    %695 = vmatpush2.bf16.msra.mxu0 0
    %696 = vmatprep.subr.bf16.mxu0 0
    %697 = vmatpush2.bf16.msra.mxu0 0
    %698 = vmatprep.subr.bf16.mxu0 0
    %699 = vmatpush2.bf16.msra.mxu0 0
    %700 = vmatprep.subr.bf16.mxu0 0
    %701 = vmatpush2.bf16.msra.mxu0 0
    %702 = vmatprep.subr.bf16.mxu0 0
    %703 = vmatpush2.bf16.msra.mxu0 0
    %704 = vmatprep.subr.bf16.mxu0 0
    %705 = vmatpush2.bf16.msra.mxu0 0
    %706 = vmatprep.subr.bf16.mxu0 0
    %707 = vmatpush2.bf16.msra.mxu0 0
    %708 = vmatprep.mubr.bf16.mxu0 0
    %709 = vmatmul.mubr.bf16.gmra.mxu0 %v194
    %v710 = vpop.f32.mrf.mxu0
    %v711 = vadd.f32 %v151, %v710
    %v712 = vpop.f32.mrf.mxu0
    %v713 = vadd.f32 %v155, %v712
    %v714 = vpop.f32.mrf.mxu0
    %v715 = vadd.f32 %v151, %v714
    %v716 = vpop.f32.mrf.mxu0
    %v717 = vadd.f32 %v155, %v716
    %718 = vmatprep.mubr.bf16.mxu0 0
    %719 = vmatmul.mubr.bf16.gmra.mxu0 %v195
    %v720 = vpop.f32.mrf.mxu0
    %v721 = vadd.f32 %v151, %v720
    %v722 = vpop.f32.mrf.mxu0
    %v723 = vadd.f32 %v155, %v722
    %v724 = vpop.f32.mrf.mxu0
    %v725 = vadd.f32 %v151, %v724
    %v726 = vpop.f32.mrf.mxu0
    %v727 = vadd.f32 %v155, %v726
    %728 = vmatprep.mubr.bf16.mxu0 0
    %729 = vmatmul.mubr.bf16.gmra.mxu0 %v196
    %v730 = vpop.f32.mrf.mxu0
    %v731 = vadd.f32 %v151, %v730
    %v732 = vpop.f32.mrf.mxu0
    %v733 = vadd.f32 %v155, %v732
    %v734 = vpop.f32.mrf.mxu0
    %v735 = vadd.f32 %v151, %v734
    %v736 = vpop.f32.mrf.mxu0
    %v737 = vadd.f32 %v155, %v736
    %738 = vmatprep.mubr.bf16.mxu0 0
    %739 = vmatmul.mubr.bf16.gmra.mxu0 %v197
    %v740 = vpop.f32.mrf.mxu0
    %v741 = vadd.f32 %v151, %v740
    %v742 = vpop.f32.mrf.mxu0
    %v743 = vadd.f32 %v155, %v742
    %v744 = vpop.f32.mrf.mxu0
    %v745 = vadd.f32 %v151, %v744
    %v746 = vpop.f32.mrf.mxu0
    %v747 = vadd.f32 %v155, %v746
    %748 = vmatprep.mubr.bf16.mxu0 0
    %749 = vmatmul.mubr.bf16.gmra.mxu0 %v198
    %v750 = vpop.f32.mrf.mxu0
    %v751 = vadd.f32 %v151, %v750
    %v752 = vpop.f32.mrf.mxu0
    %v753 = vadd.f32 %v155, %v752
    %v754 = vpop.f32.mrf.mxu0
    %v755 = vadd.f32 %v151, %v754
    %v756 = vpop.f32.mrf.mxu0
    %v757 = vadd.f32 %v155, %v756
    %758 = vmatprep.mubr.bf16.mxu0 0
    %759 = vmatmul.mubr.bf16.gmra.mxu0 %v199
    %v760 = vpop.f32.mrf.mxu0
    %v761 = vadd.f32 %v151, %v760
    %v762 = vpop.f32.mrf.mxu0
    %v763 = vadd.f32 %v155, %v762
    %v764 = vpop.f32.mrf.mxu0
    %v765 = vadd.f32 %v151, %v764
    %v766 = vpop.f32.mrf.mxu0
    %v767 = vadd.f32 %v155, %v766
    %768 = vmatprep.mubr.bf16.mxu0 0
    %769 = vmatmul.mubr.bf16.gmra.mxu0 %v200
    %v770 = vpop.f32.mrf.mxu0
    %v771 = vadd.f32 %v151, %v770
    %v772 = vpop.f32.mrf.mxu0
    %v773 = vadd.f32 %v155, %v772
    %v774 = vpop.f32.mrf.mxu0
    %v775 = vadd.f32 %v151, %v774
    %v776 = vpop.f32.mrf.mxu0
    %v777 = vadd.f32 %v155, %v776
    %778 = vmatprep.mubr.bf16.mxu0 0
    %779 = vmatmul.mubr.bf16.gmra.mxu0 %v201
    %v780 = vpop.f32.mrf.mxu0
    %v781 = vadd.f32 %v151, %v780
    %v782 = vpop.f32.mrf.mxu0
    %v783 = vadd.f32 %v155, %v782
    %v784 = vpop.f32.mrf.mxu0
    %v785 = vadd.f32 %v151, %v784
    %v786 = vpop.f32.mrf.mxu0
    %v787 = vadd.f32 %v155, %v786
    %788 = vdwg.mxu0
    %v789 = vpack.c.bf16 %v489, %v485
    %v790 = vpack.c.bf16 %v491, %v487
    %v791 = vpack.c.bf16 %v602, %v598
    %v792 = vpack.c.bf16 %v604, %v600
    %v793 = vpack.c.bf16 %v715, %v711
    %v794 = vpack.c.bf16 %v717, %v713
    %v795 = vpack.c.bf16 %v499, %v495
    %v796 = vpack.c.bf16 %v501, %v497
    %v797 = vpack.c.bf16 %v612, %v608
    %v798 = vpack.c.bf16 %v614, %v610
    %v799 = vpack.c.bf16 %v725, %v721
    %v800 = vpack.c.bf16 %v727, %v723
    %v801 = vpack.c.bf16 %v509, %v505
    %v802 = vpack.c.bf16 %v511, %v507
    %v803 = vpack.c.bf16 %v622, %v618
    %v804 = vpack.c.bf16 %v624, %v620
    %v805 = vpack.c.bf16 %v735, %v731
    %v806 = vpack.c.bf16 %v737, %v733
    %v807 = vpack.c.bf16 %v519, %v515
    %v808 = vpack.c.bf16 %v521, %v517
    %v809 = vpack.c.bf16 %v632, %v628
    %v810 = vpack.c.bf16 %v634, %v630
    %v811 = vpack.c.bf16 %v745, %v741
    %v812 = vpack.c.bf16 %v747, %v743
    %v813 = vpack.c.bf16 %v529, %v525
    %v814 = vpack.c.bf16 %v531, %v527
    %v815 = vpack.c.bf16 %v642, %v638
    %v816 = vpack.c.bf16 %v644, %v640
    %v817 = vpack.c.bf16 %v755, %v751
    %v818 = vpack.c.bf16 %v757, %v753
    %v819 = vpack.c.bf16 %v539, %v535
    %v820 = vpack.c.bf16 %v541, %v537
    %v821 = vpack.c.bf16 %v652, %v648
    %v822 = vpack.c.bf16 %v654, %v650
    %v823 = vpack.c.bf16 %v765, %v761
    %v824 = vpack.c.bf16 %v767, %v763
    %v825 = vpack.c.bf16 %v549, %v545
    %v826 = vpack.c.bf16 %v551, %v547
    %v827 = vpack.c.bf16 %v662, %v658
    %v828 = vpack.c.bf16 %v664, %v660
    %v829 = vpack.c.bf16 %v775, %v771
    %v830 = vpack.c.bf16 %v777, %v773
    %v831 = vpack.c.bf16 %v559, %v555
    %v832 = vpack.c.bf16 %v561, %v557
    %v833 = vpack.c.bf16 %v672, %v668
    %v834 = vpack.c.bf16 %v674, %v670
    %v835 = vpack.c.bf16 %v785, %v781
    %v836 = vpack.c.bf16 %v787, %v783
    %v885 = vunpack.c.l.b16 %v789
    %v886 = vunpack.c.l.b16 %v790
    %v887 = vunpack.c.l.b16 %v791
    %v888 = vunpack.c.l.b16 %v792
    %v889 = vunpack.c.l.b16 %v793
    %v890 = vunpack.c.l.b16 %v794
    %v891 = vunpack.c.h.b16 %v789
    %v892 = vunpack.c.h.b16 %v790
    %v893 = vunpack.c.h.b16 %v791
    %v894 = vunpack.c.h.b16 %v792
    %v895 = vunpack.c.h.b16 %v793
    %v896 = vunpack.c.h.b16 %v794
    %v897 = vunpack.c.l.b16 %v795
    %v898 = vunpack.c.l.b16 %v796
    %v899 = vunpack.c.l.b16 %v797
    %v900 = vunpack.c.l.b16 %v798
    %v901 = vunpack.c.l.b16 %v799
    %v902 = vunpack.c.l.b16 %v800
    %v903 = vunpack.c.h.b16 %v795
    %v904 = vunpack.c.h.b16 %v796
    %v905 = vunpack.c.h.b16 %v797
    %v906 = vunpack.c.h.b16 %v798
    %v907 = vunpack.c.h.b16 %v799
    %v908 = vunpack.c.h.b16 %v800
    %v909 = vunpack.c.l.b16 %v801
    %v910 = vunpack.c.l.b16 %v802
    %v911 = vunpack.c.l.b16 %v803
    %v912 = vunpack.c.l.b16 %v804
    %v913 = vunpack.c.l.b16 %v805
    %v914 = vunpack.c.l.b16 %v806
    %v915 = vunpack.c.h.b16 %v801
    %v916 = vunpack.c.h.b16 %v802
    %v917 = vunpack.c.h.b16 %v803
    %v918 = vunpack.c.h.b16 %v804
    %v919 = vunpack.c.h.b16 %v805
    %v920 = vunpack.c.h.b16 %v806
    %v921 = vunpack.c.l.b16 %v807
    %v922 = vunpack.c.l.b16 %v808
    %v923 = vunpack.c.l.b16 %v809
    %v924 = vunpack.c.l.b16 %v810
    %v925 = vunpack.c.l.b16 %v811
    %v926 = vunpack.c.l.b16 %v812
    %v927 = vunpack.c.h.b16 %v807
    %v928 = vunpack.c.h.b16 %v808
    %v929 = vunpack.c.h.b16 %v809
    %v930 = vunpack.c.h.b16 %v810
    %v931 = vunpack.c.h.b16 %v811
    %v932 = vunpack.c.h.b16 %v812
    %v933 = vunpack.c.l.b16 %v813
    %v934 = vunpack.c.l.b16 %v814
    %v935 = vunpack.c.l.b16 %v815
    %v936 = vunpack.c.l.b16 %v816
    %v937 = vunpack.c.l.b16 %v817
    %v938 = vunpack.c.l.b16 %v818
    %v939 = vunpack.c.h.b16 %v813
    %v940 = vunpack.c.h.b16 %v814
    %v941 = vunpack.c.h.b16 %v815
    %v942 = vunpack.c.h.b16 %v816
    %v943 = vunpack.c.h.b16 %v817
    %v944 = vunpack.c.h.b16 %v818
    %v945 = vunpack.c.l.b16 %v819
    %v946 = vunpack.c.l.b16 %v820
    %v947 = vunpack.c.l.b16 %v821
    %v948 = vunpack.c.l.b16 %v822
    %v949 = vunpack.c.l.b16 %v823
    %v950 = vunpack.c.l.b16 %v824
    %v951 = vunpack.c.h.b16 %v819
    %v952 = vunpack.c.h.b16 %v820
    %v953 = vunpack.c.h.b16 %v821
    %v954 = vunpack.c.h.b16 %v822
    %v955 = vunpack.c.h.b16 %v823
    %v956 = vunpack.c.h.b16 %v824
    %v957 = vunpack.c.l.b16 %v825
    %v958 = vunpack.c.l.b16 %v826
    %v959 = vunpack.c.l.b16 %v827
    %v960 = vunpack.c.l.b16 %v828
    %v961 = vunpack.c.l.b16 %v829
    %v962 = vunpack.c.l.b16 %v830
    %v963 = vunpack.c.h.b16 %v825
    %v964 = vunpack.c.h.b16 %v826
    %v965 = vunpack.c.h.b16 %v827
    %v966 = vunpack.c.h.b16 %v828
    %v967 = vunpack.c.h.b16 %v829
    %v968 = vunpack.c.h.b16 %v830
    %v969 = vunpack.c.l.b16 %v831
    %v970 = vunpack.c.l.b16 %v832
    %v971 = vunpack.c.l.b16 %v833
    %v972 = vunpack.c.l.b16 %v834
    %v973 = vunpack.c.l.b16 %v835
    %v974 = vunpack.c.l.b16 %v836
    %v975 = vunpack.c.h.b16 %v831
    %v976 = vunpack.c.h.b16 %v832
    %v977 = vunpack.c.h.b16 %v833
    %v978 = vunpack.c.h.b16 %v834
    %v979 = vunpack.c.h.b16 %v835
    %v980 = vunpack.c.h.b16 %v836
    %v981 = vpack.c.b16 %v886, %v885
    %v982 = vpack.c.b16 %v888, %v887
    %v983 = vpack.c.b16 %v890, %v889
    %v984 = vpack.c.b16 %v892, %v891
    %v985 = vpack.c.b16 %v894, %v893
    %v986 = vpack.c.b16 %v896, %v895
    %v987 = vpack.c.b16 %v898, %v897
    %v988 = vpack.c.b16 %v900, %v899
    %v989 = vpack.c.b16 %v902, %v901
    %v990 = vpack.c.b16 %v904, %v903
    %v991 = vpack.c.b16 %v906, %v905
    %v992 = vpack.c.b16 %v908, %v907
    %v993 = vpack.c.b16 %v910, %v909
    %v994 = vpack.c.b16 %v912, %v911
    %v995 = vpack.c.b16 %v914, %v913
    %v996 = vpack.c.b16 %v916, %v915
    %v997 = vpack.c.b16 %v918, %v917
    %v998 = vpack.c.b16 %v920, %v919
    %v999 = vpack.c.b16 %v922, %v921
    %v1000 = vpack.c.b16 %v924, %v923
    %v1001 = vpack.c.b16 %v926, %v925
    %v1002 = vpack.c.b16 %v928, %v927
    %v1003 = vpack.c.b16 %v930, %v929
    %v1004 = vpack.c.b16 %v932, %v931
    %v1005 = vpack.c.b16 %v934, %v933
    %v1006 = vpack.c.b16 %v936, %v935
    %v1007 = vpack.c.b16 %v938, %v937
    %v1008 = vpack.c.b16 %v940, %v939
    %v1009 = vpack.c.b16 %v942, %v941
    %v1010 = vpack.c.b16 %v944, %v943
    %v1011 = vpack.c.b16 %v946, %v945
    %v1012 = vpack.c.b16 %v948, %v947
    %v1013 = vpack.c.b16 %v950, %v949
    %v1014 = vpack.c.b16 %v952, %v951
    %v1015 = vpack.c.b16 %v954, %v953
    %v1016 = vpack.c.b16 %v956, %v955
    %v1017 = vpack.c.b16 %v958, %v957
    %v1018 = vpack.c.b16 %v960, %v959
    %v1019 = vpack.c.b16 %v962, %v961
    %v1020 = vpack.c.b16 %v964, %v963
    %v1021 = vpack.c.b16 %v966, %v965
    %v1022 = vpack.c.b16 %v968, %v967
    %v1023 = vpack.c.b16 %v970, %v969
    %v1024 = vpack.c.b16 %v972, %v971
    %v1025 = vpack.c.b16 %v974, %v973
    %v1026 = vpack.c.b16 %v976, %v975
    %v1027 = vpack.c.b16 %v978, %v977
    %v1028 = vpack.c.b16 %v980, %v979
    %1077 = vst [vmem:[#allocation2] sm:$0xff] %v981
    %1078 = vst [vmem:[#allocation2 + $0x8] sm:$0xff] %v982
    %1079 = vst [vmem:[#allocation2 + $0x10] sm:$0xff] %v983
    %1080 = vst [vmem:[#allocation2 + $0x18] sm:$0xff] %v984
    %1081 = vst [vmem:[#allocation2 + $0x20] sm:$0xff] %v985
    %1082 = vst [vmem:[#allocation2 + $0x28] sm:$0xff] %v986
    %1083 = vst [vmem:[#allocation2 + $0x30] sm:$0xff] %v987
    %1084 = vst [vmem:[#allocation2 + $0x38] sm:$0xff] %v988
    %1085 = vst [vmem:[#allocation2 + $0x40] sm:$0xff] %v989
    %1086 = vst [vmem:[#allocation2 + $0x48] sm:$0xff] %v990
    %1087 = vst [vmem:[#allocation2 + $0x50] sm:$0xff] %v991
    %1088 = vst [vmem:[#allocation2 + $0x58] sm:$0xff] %v992
    %1089 = vst [vmem:[#allocation2 + $0x60] sm:$0xff] %v993
    %1090 = vst [vmem:[#allocation2 + $0x68] sm:$0xff] %v994
    %1091 = vst [vmem:[#allocation2 + $0x70] sm:$0xff] %v995
    %1092 = vst [vmem:[#allocation2 + $0x78] sm:$0xff] %v996
    %1093 = vst [vmem:[#allocation2 + $0x80] sm:$0xff] %v997
    %1094 = vst [vmem:[#allocation2 + $0x88] sm:$0xff] %v998
    %1095 = vst [vmem:[#allocation2 + $0x90] sm:$0xff] %v999
    %1096 = vst [vmem:[#allocation2 + $0x98] sm:$0xff] %v1000
    %1097 = vst [vmem:[#allocation2 + $0xa0] sm:$0xff] %v1001
    %1098 = vst [vmem:[#allocation2 + $0xa8] sm:$0xff] %v1002
    %1099 = vst [vmem:[#allocation2 + $0xb0] sm:$0xff] %v1003
    %1100 = vst [vmem:[#allocation2 + $0xb8] sm:$0xff] %v1004
    %1101 = vst [vmem:[#allocation2 + $0xc0] sm:$0xff] %v1005
    %1102 = vst [vmem:[#allocation2 + $0xc8] sm:$0xff] %v1006
    %1103 = vst [vmem:[#allocation2 + $0xd0] sm:$0xff] %v1007
    %1104 = vst [vmem:[#allocation2 + $0xd8] sm:$0xff] %v1008
    %1105 = vst [vmem:[#allocation2 + $0xe0] sm:$0xff] %v1009
    %1106 = vst [vmem:[#allocation2 + $0xe8] sm:$0xff] %v1010
    %1107 = vst [vmem:[#allocation2 + $0xf0] sm:$0xff] %v1011
    %1108 = vst [vmem:[#allocation2 + $0xf8] sm:$0xff] %v1012
    %1109 = vst [vmem:[#allocation2 + $0x100] sm:$0xff] %v1013
    %1110 = vst [vmem:[#allocation2 + $0x108] sm:$0xff] %v1014
    %1111 = vst [vmem:[#allocation2 + $0x110] sm:$0xff] %v1015
    %1112 = vst [vmem:[#allocation2 + $0x118] sm:$0xff] %v1016
    %1113 = vst [vmem:[#allocation2 + $0x120] sm:$0xff] %v1017
    %1114 = vst [vmem:[#allocation2 + $0x128] sm:$0xff] %v1018
    %1115 = vst [vmem:[#allocation2 + $0x130] sm:$0xff] %v1019
    %1116 = vst [vmem:[#allocation2 + $0x138] sm:$0xff] %v1020
    %1117 = vst [vmem:[#allocation2 + $0x140] sm:$0xff] %v1021
    %1118 = vst [vmem:[#allocation2 + $0x148] sm:$0xff] %v1022
    %1119 = vst [vmem:[#allocation2 + $0x150] sm:$0xff] %v1023
    %1120 = vst [vmem:[#allocation2 + $0x158] sm:$0xff] %v1024
    %1121 = vst [vmem:[#allocation2 + $0x160] sm:$0xff] %v1025
    %1122 = vst [vmem:[#allocation2 + $0x168] sm:$0xff] %v1026
    %1123 = vst [vmem:[#allocation2 + $0x170] sm:$0xff] %v1027
    %1124 = vst [vmem:[#allocation2 + $0x178] sm:$0xff] %v1028
    %v1125 = vld [vmem:[%s1] sm:$0xff]
    %v1126 = vld [vmem:[%s1 + $0x8] sm:$0xff]
    %v1127 = vld [vmem:[%s5] sm:$0x7]
    %s1128 = scalar_lea.vmem %s5, 3
    %v1129 = vld [vmem:[%s1128] sm:$0x7]
    %v1130 = vld [vmem:[#allocation8] sm:$0xff]
    %v1131 = vld [vmem:[#allocation8 + $0x8] sm:$0xf]
    %v1132 = vld [vmem:[#allocation8 + $0xc] sm:$0xff]
    %v1133 = vld [vmem:[#allocation8 + $0x14] sm:$0xf]
    %v1134 = vld [vmem:[#allocation8 + $0x18] sm:$0xff]
    %v1135 = vld [vmem:[#allocation8 + $0x20] sm:$0xf]
    %v1136 = vld [vmem:[#allocation8 + $0x24] sm:$0xff]
    %v1137 = vld [vmem:[#allocation8 + $0x2c] sm:$0xf]
    %v1138 = vld [vmem:[#allocation8 + $0x30] sm:$0xff]
    %v1139 = vld [vmem:[#allocation8 + $0x38] sm:$0xf]
    %v1140 = vld [vmem:[#allocation8 + $0x3c] sm:$0xff]
    %v1141 = vld [vmem:[#allocation8 + $0x44] sm:$0xf]
    %v1142 = vld [vmem:[#allocation8 + $0x48] sm:$0xff]
    %v1143 = vld [vmem:[#allocation8 + $0x50] sm:$0xf]
    %v1144 = vld [vmem:[#allocation8 + $0x54] sm:$0xff]
    %v1145 = vld [vmem:[#allocation8 + $0x5c] sm:$0xf]
    %v1146 = vld [vmem:[#allocation8 + $0x60] sm:$0xff]
    %v1147 = vld [vmem:[#allocation8 + $0x68] sm:$0xf]
    %v1148 = vld [vmem:[#allocation8 + $0x6c] sm:$0xff]
    %v1149 = vld [vmem:[#allocation8 + $0x74] sm:$0xf]
    %v1150 = vld [vmem:[#allocation8 + $0x78] sm:$0xff]
    %v1151 = vld [vmem:[#allocation8 + $0x80] sm:$0xf]
    %v1152 = vld [vmem:[#allocation8 + $0x84] sm:$0xff]
    %v1153 = vld [vmem:[#allocation8 + $0x8c] sm:$0xf]
    %v1154 = vld [vmem:[#allocation8 + $0x90] sm:$0xff]
    %v1155 = vld [vmem:[#allocation8 + $0x98] sm:$0xf]
    %v1156 = vld [vmem:[#allocation8 + $0x9c] sm:$0xff]
    %v1157 = vld [vmem:[#allocation8 + $0xa4] sm:$0xf]
    %v1158 = vld [vmem:[#allocation8 + $0xa8] sm:$0xff]
    %v1159 = vld [vmem:[#allocation8 + $0xb0] sm:$0xf]
    %v1160 = vld [vmem:[#allocation8 + $0xb4] sm:$0xff]
    %v1161 = vld [vmem:[#allocation8 + $0xbc] sm:$0xf]
    %s1162 = scalar_lea.vmem [#allocation8], 192
    %v1163 = vld [vmem:[%s1162] sm:$0xff]
    %v1164 = vld [vmem:[%s1162 + $0x8] sm:$0xf]
    %v1165 = vld [vmem:[%s1162 + $0xc] sm:$0xff]
    %v1166 = vld [vmem:[%s1162 + $0x14] sm:$0xf]
    %v1167 = vld [vmem:[%s1162 + $0x18] sm:$0xff]
    %v1168 = vld [vmem:[%s1162 + $0x20] sm:$0xf]
    %v1169 = vld [vmem:[%s1162 + $0x24] sm:$0xff]
    %v1170 = vld [vmem:[%s1162 + $0x2c] sm:$0xf]
    %v1171 = vld [vmem:[%s1162 + $0x30] sm:$0xff]
    %v1172 = vld [vmem:[%s1162 + $0x38] sm:$0xf]
    %v1173 = vld [vmem:[%s1162 + $0x3c] sm:$0xff]
    %v1174 = vld [vmem:[%s1162 + $0x44] sm:$0xf]
    %v1175 = vld [vmem:[%s1162 + $0x48] sm:$0xff]
    %v1176 = vld [vmem:[%s1162 + $0x50] sm:$0xf]
    %v1177 = vld [vmem:[%s1162 + $0x54] sm:$0xff]
    %v1178 = vld [vmem:[%s1162 + $0x5c] sm:$0xf]
    %v1179 = vld [vmem:[%s1162 + $0x60] sm:$0xff]
    %v1180 = vld [vmem:[%s1162 + $0x68] sm:$0xf]
    %v1181 = vld [vmem:[%s1162 + $0x6c] sm:$0xff]
    %v1182 = vld [vmem:[%s1162 + $0x74] sm:$0xf]
    %v1183 = vld [vmem:[%s1162 + $0x78] sm:$0xff]
    %v1184 = vld [vmem:[%s1162 + $0x80] sm:$0xf]
    %v1185 = vld [vmem:[%s1162 + $0x84] sm:$0xff]
    %v1186 = vld [vmem:[%s1162 + $0x8c] sm:$0xf]
    %v1187 = vld [vmem:[%s1162 + $0x90] sm:$0xff]
    %v1188 = vld [vmem:[%s1162 + $0x98] sm:$0xf]
    %v1189 = vld [vmem:[%s1162 + $0x9c] sm:$0xff]
    %v1190 = vld [vmem:[%s1162 + $0xa4] sm:$0xf]
    %v1191 = vld [vmem:[%s1162 + $0xa8] sm:$0xff]
    %v1192 = vld [vmem:[%s1162 + $0xb0] sm:$0xf]
    %v1193 = vld [vmem:[%s1162 + $0xb4] sm:$0xff]
    %v1194 = vld [vmem:[%s1162 + $0xbc] sm:$0xf]
    %s1195 = smul.u32 0, 6
    %s1196 = smul.addr %s1195, 4
    %s1197 = scalar_lea.vmem [#allocation2], %s1196
    %v1198 = vld [vmem:[%s1197] sm:$0xff]
    %v1199 = vld [vmem:[%s1197 + $0x8] sm:$0xf]
    %v1200 = vld [vmem:[%s1197 + $0x18] sm:$0xff]
    %v1201 = vld [vmem:[%s1197 + $0x20] sm:$0xf]
    %v1202 = vunpack.c.l.bf16 %v1198
    %v1203 = vunpack.c.h.bf16 %v1198
    %v1204 = vunpack.c.l.bf16 %v1199
    %v1205 = vunpack.c.l.bf16 %v1200
    %v1206 = vunpack.c.h.bf16 %v1200
    %v1207 = vunpack.c.l.bf16 %v1201
    %s1208 = smul.u32 14, 6
    %s1209 = smul.addr %s1208, 4
    %s1210 = scalar_lea.vmem [#allocation2], %s1209
    %v1211 = vld [vmem:[%s1210 + $0xc] sm:$0xff]
    %v1212 = vld [vmem:[%s1210 + $0x14] sm:$0xf]
    %v1213 = vld [vmem:[%s1210 + $0x24] sm:$0xff]
    %v1214 = vld [vmem:[%s1210 + $0x2c] sm:$0xf]
    %v1215 = vunpack.c.l.bf16 %v1211
    %v1216 = vunpack.c.h.bf16 %v1211
    %v1217 = vunpack.c.l.bf16 %v1212
    %v1218 = vunpack.c.l.bf16 %v1213
    %v1219 = vunpack.c.h.bf16 %v1213
    %v1220 = vunpack.c.l.bf16 %v1214
    %v1222 = vlaneseq
    %v1223 = vshrl.u32 %v1222, 7
    %v1224 = vsub.s32 0, %v1223
    %v1225 = vrot.slane %v1127, %v1224
    %v1226 = vlaneseq
    %v1227 = vshrl.u32 %v1226, 7
    %v1228 = vsub.s32 1, %v1227
    %v1229 = vrot.slane %v1127, %v1228
    %v1230 = vlaneseq
    %v1231 = vshrl.u32 %v1230, 7
    %v1232 = vsub.s32 2, %v1231
    %v1233 = vrot.slane %v1127, %v1232
    %v1269 = vunpack.c.l.b16 %v1130
    %v1270 = vunpack.c.h.b16 %v1130
    %v1271 = vunpack.c.l.b16 %v1131
    %v1272 = vunpack.c.l.b16 %v1132
    %v1273 = vunpack.c.h.b16 %v1132
    %v1274 = vunpack.c.l.b16 %v1133
    %v1275 = vunpack.c.l.b16 %v1134
    %v1276 = vunpack.c.h.b16 %v1134
    %v1277 = vunpack.c.l.b16 %v1135
    %v1278 = vunpack.c.l.b16 %v1136
    %v1279 = vunpack.c.h.b16 %v1136
    %v1280 = vunpack.c.l.b16 %v1137
    %v1281 = vunpack.c.l.b16 %v1138
    %v1282 = vunpack.c.h.b16 %v1138
    %v1283 = vunpack.c.l.b16 %v1139
    %v1284 = vunpack.c.l.b16 %v1140
    %v1285 = vunpack.c.h.b16 %v1140
    %v1286 = vunpack.c.l.b16 %v1141
    %v1287 = vunpack.c.l.b16 %v1142
    %v1288 = vunpack.c.h.b16 %v1142
    %v1289 = vunpack.c.l.b16 %v1143
    %v1290 = vunpack.c.l.b16 %v1144
    %v1291 = vunpack.c.h.b16 %v1144
    %v1292 = vunpack.c.l.b16 %v1145
    %v1293 = vunpack.c.l.b16 %v1146
    %v1294 = vunpack.c.h.b16 %v1146
    %v1295 = vunpack.c.l.b16 %v1147
    %v1296 = vunpack.c.l.b16 %v1148
    %v1297 = vunpack.c.h.b16 %v1148
    %v1298 = vunpack.c.l.b16 %v1149
    %v1299 = vunpack.c.l.b16 %v1150
    %v1300 = vunpack.c.h.b16 %v1150
    %v1301 = vunpack.c.l.b16 %v1151
    %v1302 = vunpack.c.l.b16 %v1152
    %v1303 = vunpack.c.h.b16 %v1152
    %v1304 = vunpack.c.l.b16 %v1153
    %v1305 = vunpack.c.l.b16 %v1154
    %v1306 = vunpack.c.h.b16 %v1154
    %v1307 = vunpack.c.l.b16 %v1155
    %v1308 = vunpack.c.l.b16 %v1156
    %v1309 = vunpack.c.h.b16 %v1156
    %v1310 = vunpack.c.l.b16 %v1157
    %v1311 = vunpack.c.l.b16 %v1158
    %v1312 = vunpack.c.h.b16 %v1158
    %v1313 = vunpack.c.l.b16 %v1159
    %v1314 = vunpack.c.l.b16 %v1160
    %v1315 = vunpack.c.h.b16 %v1160
    %v1316 = vunpack.c.l.b16 %v1161
    %v1317 = vpack.c.b16 %v1272, %v1269
    %v1318 = vpack.c.b16 %v1273, %v1270
    %v1319 = vpack.c.b16 %v1274, %v1271
    %v1320 = vpack.c.b16 %v1278, %v1275
    %v1321 = vpack.c.b16 %v1279, %v1276
    %v1322 = vpack.c.b16 %v1280, %v1277
    %v1323 = vpack.c.b16 %v1284, %v1281
    %v1324 = vpack.c.b16 %v1285, %v1282
    %v1325 = vpack.c.b16 %v1286, %v1283
    %v1326 = vpack.c.b16 %v1290, %v1287
    %v1327 = vpack.c.b16 %v1291, %v1288
    %v1328 = vpack.c.b16 %v1292, %v1289
    %v1329 = vpack.c.b16 %v1296, %v1293
    %v1330 = vpack.c.b16 %v1297, %v1294
    %v1331 = vpack.c.b16 %v1298, %v1295
    %v1332 = vpack.c.b16 %v1302, %v1299
    %v1333 = vpack.c.b16 %v1303, %v1300
    %v1334 = vpack.c.b16 %v1304, %v1301
    %v1335 = vpack.c.b16 %v1308, %v1305
    %v1336 = vpack.c.b16 %v1309, %v1306
    %v1337 = vpack.c.b16 %v1310, %v1307
    %v1338 = vpack.c.b16 %v1314, %v1311
    %v1339 = vpack.c.b16 %v1315, %v1312
    %v1340 = vpack.c.b16 %v1316, %v1313
    %1365 = vmatprep.subr.bf16.mxu0 %v1339
    %1366 = vmatpush1.bf16.msra.mxu0 %v1338
    %1367 = vmatprep.subr.bf16.mxu0 %v1336
    %1368 = vmatpush1.bf16.msra.mxu0 %v1335
    %1369 = vmatprep.subr.bf16.mxu0 %v1333
    %1370 = vmatpush1.bf16.msra.mxu0 %v1332
    %1371 = vmatprep.subr.bf16.mxu0 %v1330
    %1372 = vmatpush1.bf16.msra.mxu0 %v1329
    %1373 = vmatprep.subr.bf16.mxu0 %v1327
    %1374 = vmatpush1.bf16.msra.mxu0 %v1326
    %1375 = vmatprep.subr.bf16.mxu0 %v1324
    %1376 = vmatpush1.bf16.msra.mxu0 %v1323
    %1377 = vmatprep.subr.bf16.mxu0 %v1321
    %1378 = vmatpush1.bf16.msra.mxu0 %v1320
    %1379 = vmatprep.subr.bf16.mxu0 %v1318
    %1380 = vmatpush1.bf16.msra.mxu0 %v1317
    %1381 = vmatprep.subr.bf16.mxu0 0
    %1382 = vmatpush2.bf16.msra.mxu0 0
    %1383 = vmatprep.subr.bf16.mxu0 0
    %1384 = vmatpush2.bf16.msra.mxu0 0
    %1385 = vmatprep.subr.bf16.mxu0 0
    %1386 = vmatpush2.bf16.msra.mxu0 0
    %1387 = vmatprep.subr.bf16.mxu0 0
    %1388 = vmatpush2.bf16.msra.mxu0 0
    %1389 = vmatprep.subr.bf16.mxu0 0
    %1390 = vmatpush2.bf16.msra.mxu0 0
    %1391 = vmatprep.subr.bf16.mxu0 0
    %1392 = vmatpush2.bf16.msra.mxu0 0
    %1393 = vmatprep.subr.bf16.mxu0 0
    %1394 = vmatpush2.bf16.msra.mxu0 0
    %1395 = vmatprep.subr.bf16.mxu0 0
    %1396 = vmatpush2.bf16.msra.mxu0 0
    %1397 = vmatprep.mubr.bf16.mxu0 0
    %1398 = vmatmul.mubr.bf16.gmra.mxu0 0
    %v1399 = vpop.f32.mrf.mxu0
    %v1400 = vadd.f32 %v1225, %v1399
    %v1401 = vpop.f32.mrf.mxu0
    %v1402 = vadd.f32 %v1229, %v1401
    %v1403 = vpop.f32.mrf.mxu0
    %v1404 = vadd.f32 %v1225, %v1403
    %v1405 = vpop.f32.mrf.mxu0
    %v1406 = vadd.f32 %v1229, %v1405
    %1407 = vdwg.mxu0
    %1408 = vmatprep.subr.bf16.mxu0 0
    %1409 = vmatpush1.bf16.msra.mxu0 %v1340
    %1410 = vmatprep.subr.bf16.mxu0 0
    %1411 = vmatpush1.bf16.msra.mxu0 %v1337
    %1412 = vmatprep.subr.bf16.mxu0 0
    %1413 = vmatpush1.bf16.msra.mxu0 %v1334
    %1414 = vmatprep.subr.bf16.mxu0 0
    %1415 = vmatpush1.bf16.msra.mxu0 %v1331
    %1416 = vmatprep.subr.bf16.mxu0 0
    %1417 = vmatpush1.bf16.msra.mxu0 %v1328
    %1418 = vmatprep.subr.bf16.mxu0 0
    %1419 = vmatpush1.bf16.msra.mxu0 %v1325
    %1420 = vmatprep.subr.bf16.mxu0 0
    %1421 = vmatpush1.bf16.msra.mxu0 %v1322
    %1422 = vmatprep.subr.bf16.mxu0 0
    %1423 = vmatpush1.bf16.msra.mxu0 %v1319
    %1424 = vmatprep.subr.bf16.mxu0 0
    %1425 = vmatpush2.bf16.msra.mxu0 0
    %1426 = vmatprep.subr.bf16.mxu0 0
    %1427 = vmatpush2.bf16.msra.mxu0 0
    %1428 = vmatprep.subr.bf16.mxu0 0
    %1429 = vmatpush2.bf16.msra.mxu0 0
    %1430 = vmatprep.subr.bf16.mxu0 0
    %1431 = vmatpush2.bf16.msra.mxu0 0
    %1432 = vmatprep.subr.bf16.mxu0 0
    %1433 = vmatpush2.bf16.msra.mxu0 0
    %1434 = vmatprep.subr.bf16.mxu0 0
    %1435 = vmatpush2.bf16.msra.mxu0 0
    %1436 = vmatprep.subr.bf16.mxu0 0
    %1437 = vmatpush2.bf16.msra.mxu0 0
    %1438 = vmatprep.subr.bf16.mxu0 0
    %1439 = vmatpush2.bf16.msra.mxu0 0
    %1440 = vmatprep.mubr.bf16.mxu0 0
    %1441 = vmatmul.mubr.bf16.gmra.mxu0 0
    %v1442 = vpop.f32.mrf.mxu0
    %v1443 = vadd.f32 %v1233, %v1442
    %v1444 = vpop.f32.mrf.mxu0
    %v1445 = vpop.f32.mrf.mxu0
    %v1446 = vadd.f32 %v1233, %v1445
    %v1447 = vpop.f32.mrf.mxu0
    %1448 = vdwg.mxu0
    %v1450 = vlaneseq
    %v1451 = vshrl.u32 %v1450, 7
    %v1452 = vsub.s32 0, %v1451
    %v1453 = vrot.slane %v1129, %v1452
    %v1454 = vlaneseq
    %v1455 = vshrl.u32 %v1454, 7
    %v1456 = vsub.s32 1, %v1455
    %v1457 = vrot.slane %v1129, %v1456
    %v1458 = vlaneseq
    %v1459 = vshrl.u32 %v1458, 7
    %v1460 = vsub.s32 2, %v1459
    %v1461 = vrot.slane %v1129, %v1460
    %v1497 = vunpack.c.l.b16 %v1163
    %v1498 = vunpack.c.h.b16 %v1163
    %v1499 = vunpack.c.l.b16 %v1164
    %v1500 = vunpack.c.l.b16 %v1165
    %v1501 = vunpack.c.h.b16 %v1165
    %v1502 = vunpack.c.l.b16 %v1166
    %v1503 = vunpack.c.l.b16 %v1167
    %v1504 = vunpack.c.h.b16 %v1167
    %v1505 = vunpack.c.l.b16 %v1168
    %v1506 = vunpack.c.l.b16 %v1169
    %v1507 = vunpack.c.h.b16 %v1169
    %v1508 = vunpack.c.l.b16 %v1170
    %v1509 = vunpack.c.l.b16 %v1171
    %v1510 = vunpack.c.h.b16 %v1171
    %v1511 = vunpack.c.l.b16 %v1172
    %v1512 = vunpack.c.l.b16 %v1173
    %v1513 = vunpack.c.h.b16 %v1173
    %v1514 = vunpack.c.l.b16 %v1174
    %v1515 = vunpack.c.l.b16 %v1175
    %v1516 = vunpack.c.h.b16 %v1175
    %v1517 = vunpack.c.l.b16 %v1176
    %v1518 = vunpack.c.l.b16 %v1177
    %v1519 = vunpack.c.h.b16 %v1177
    %v1520 = vunpack.c.l.b16 %v1178
    %v1521 = vunpack.c.l.b16 %v1179
    %v1522 = vunpack.c.h.b16 %v1179
    %v1523 = vunpack.c.l.b16 %v1180
    %v1524 = vunpack.c.l.b16 %v1181
    %v1525 = vunpack.c.h.b16 %v1181
    %v1526 = vunpack.c.l.b16 %v1182
    %v1527 = vunpack.c.l.b16 %v1183
    %v1528 = vunpack.c.h.b16 %v1183
    %v1529 = vunpack.c.l.b16 %v1184
    %v1530 = vunpack.c.l.b16 %v1185
    %v1531 = vunpack.c.h.b16 %v1185
    %v1532 = vunpack.c.l.b16 %v1186
    %v1533 = vunpack.c.l.b16 %v1187
    %v1534 = vunpack.c.h.b16 %v1187
    %v1535 = vunpack.c.l.b16 %v1188
    %v1536 = vunpack.c.l.b16 %v1189
    %v1537 = vunpack.c.h.b16 %v1189
    %v1538 = vunpack.c.l.b16 %v1190
    %v1539 = vunpack.c.l.b16 %v1191
    %v1540 = vunpack.c.h.b16 %v1191
    %v1541 = vunpack.c.l.b16 %v1192
    %v1542 = vunpack.c.l.b16 %v1193
    %v1543 = vunpack.c.h.b16 %v1193
    %v1544 = vunpack.c.l.b16 %v1194
    %v1545 = vpack.c.b16 %v1500, %v1497
    %v1546 = vpack.c.b16 %v1501, %v1498
    %v1547 = vpack.c.b16 %v1502, %v1499
    %v1548 = vpack.c.b16 %v1506, %v1503
    %v1549 = vpack.c.b16 %v1507, %v1504
    %v1550 = vpack.c.b16 %v1508, %v1505
    %v1551 = vpack.c.b16 %v1512, %v1509
    %v1552 = vpack.c.b16 %v1513, %v1510
    %v1553 = vpack.c.b16 %v1514, %v1511
    %v1554 = vpack.c.b16 %v1518, %v1515
    %v1555 = vpack.c.b16 %v1519, %v1516
    %v1556 = vpack.c.b16 %v1520, %v1517
    %v1557 = vpack.c.b16 %v1524, %v1521
    %v1558 = vpack.c.b16 %v1525, %v1522
    %v1559 = vpack.c.b16 %v1526, %v1523
    %v1560 = vpack.c.b16 %v1530, %v1527
    %v1561 = vpack.c.b16 %v1531, %v1528
    %v1562 = vpack.c.b16 %v1532, %v1529
    %v1563 = vpack.c.b16 %v1536, %v1533
    %v1564 = vpack.c.b16 %v1537, %v1534
    %v1565 = vpack.c.b16 %v1538, %v1535
    %v1566 = vpack.c.b16 %v1542, %v1539
    %v1567 = vpack.c.b16 %v1543, %v1540
    %v1568 = vpack.c.b16 %v1544, %v1541
    %1593 = vmatprep.subr.bf16.mxu0 %v1567
    %1594 = vmatpush1.bf16.msra.mxu0 %v1566
    %1595 = vmatprep.subr.bf16.mxu0 %v1564
    %1596 = vmatpush1.bf16.msra.mxu0 %v1563
    %1597 = vmatprep.subr.bf16.mxu0 %v1561
    %1598 = vmatpush1.bf16.msra.mxu0 %v1560
    %1599 = vmatprep.subr.bf16.mxu0 %v1558
    %1600 = vmatpush1.bf16.msra.mxu0 %v1557
    %1601 = vmatprep.subr.bf16.mxu0 %v1555
    %1602 = vmatpush1.bf16.msra.mxu0 %v1554
    %1603 = vmatprep.subr.bf16.mxu0 %v1552
    %1604 = vmatpush1.bf16.msra.mxu0 %v1551
    %1605 = vmatprep.subr.bf16.mxu0 %v1549
    %1606 = vmatpush1.bf16.msra.mxu0 %v1548
    %1607 = vmatprep.subr.bf16.mxu0 %v1546
    %1608 = vmatpush1.bf16.msra.mxu0 %v1545
    %1609 = vmatprep.subr.bf16.mxu0 0
    %1610 = vmatpush2.bf16.msra.mxu0 0
    %1611 = vmatprep.subr.bf16.mxu0 0
    %1612 = vmatpush2.bf16.msra.mxu0 0
    %1613 = vmatprep.subr.bf16.mxu0 0
    %1614 = vmatpush2.bf16.msra.mxu0 0
    %1615 = vmatprep.subr.bf16.mxu0 0
    %1616 = vmatpush2.bf16.msra.mxu0 0
    %1617 = vmatprep.subr.bf16.mxu0 0
    %1618 = vmatpush2.bf16.msra.mxu0 0
    %1619 = vmatprep.subr.bf16.mxu0 0
    %1620 = vmatpush2.bf16.msra.mxu0 0
    %1621 = vmatprep.subr.bf16.mxu0 0
    %1622 = vmatpush2.bf16.msra.mxu0 0
    %1623 = vmatprep.subr.bf16.mxu0 0
    %1624 = vmatpush2.bf16.msra.mxu0 0
    %1625 = vmatprep.mubr.bf16.mxu0 0
    %1626 = vmatmul.mubr.bf16.gmra.mxu0 0
    %v1627 = vpop.f32.mrf.mxu0
    %v1628 = vadd.f32 %v1453, %v1627
    %v1629 = vpop.f32.mrf.mxu0
    %v1630 = vadd.f32 %v1457, %v1629
    %v1631 = vpop.f32.mrf.mxu0
    %v1632 = vadd.f32 %v1453, %v1631
    %v1633 = vpop.f32.mrf.mxu0
    %v1634 = vadd.f32 %v1457, %v1633
    %1635 = vdwg.mxu0
    %1636 = vmatprep.subr.bf16.mxu0 0
    %1637 = vmatpush1.bf16.msra.mxu0 %v1568
    %1638 = vmatprep.subr.bf16.mxu0 0
    %1639 = vmatpush1.bf16.msra.mxu0 %v1565
    %1640 = vmatprep.subr.bf16.mxu0 0
    %1641 = vmatpush1.bf16.msra.mxu0 %v1562
    %1642 = vmatprep.subr.bf16.mxu0 0
    %1643 = vmatpush1.bf16.msra.mxu0 %v1559
    %1644 = vmatprep.subr.bf16.mxu0 0
    %1645 = vmatpush1.bf16.msra.mxu0 %v1556
    %1646 = vmatprep.subr.bf16.mxu0 0
    %1647 = vmatpush1.bf16.msra.mxu0 %v1553
    %1648 = vmatprep.subr.bf16.mxu0 0
    %1649 = vmatpush1.bf16.msra.mxu0 %v1550
    %1650 = vmatprep.subr.bf16.mxu0 0
    %1651 = vmatpush1.bf16.msra.mxu0 %v1547
    %1652 = vmatprep.subr.bf16.mxu0 0
    %1653 = vmatpush2.bf16.msra.mxu0 0
    %1654 = vmatprep.subr.bf16.mxu0 0
    %1655 = vmatpush2.bf16.msra.mxu0 0
    %1656 = vmatprep.subr.bf16.mxu0 0
    %1657 = vmatpush2.bf16.msra.mxu0 0
    %1658 = vmatprep.subr.bf16.mxu0 0
    %1659 = vmatpush2.bf16.msra.mxu0 0
    %1660 = vmatprep.subr.bf16.mxu0 0
    %1661 = vmatpush2.bf16.msra.mxu0 0
    %1662 = vmatprep.subr.bf16.mxu0 0
    %1663 = vmatpush2.bf16.msra.mxu0 0
    %1664 = vmatprep.subr.bf16.mxu0 0
    %1665 = vmatpush2.bf16.msra.mxu0 0
    %1666 = vmatprep.subr.bf16.mxu0 0
    %1667 = vmatpush2.bf16.msra.mxu0 0
    %1668 = vmatprep.mubr.bf16.mxu0 0
    %1669 = vmatmul.mubr.bf16.gmra.mxu0 0
    %v1670 = vpop.f32.mrf.mxu0
    %v1671 = vadd.f32 %v1461, %v1670
    %v1672 = vpop.f32.mrf.mxu0
    %v1673 = vpop.f32.mrf.mxu0
    %v1674 = vadd.f32 %v1461, %v1673
    %v1675 = vpop.f32.mrf.mxu0
    %1676 = vdwg.mxu0
    %v1677 = vadd.f32 %v1202, %v1400
    %v1678 = vadd.f32 %v1205, %v1404
    %v1679 = vxor.u32 %v1677, 2147483648
    %v1680 = vxor.u32 %v1678, 2147483648
    %v1681 = vmul.f32 %v1679, 1.442695
    %v1682 = vpow.pop %v1681
    %v1683 = vmul.f32 %v1680, 1.442695
    %v1684 = vpow.pop %v1683
    %v1685 = vadd.f32 %v1682, 1.0
    %v1686 = vadd.f32 %v1684, 1.0
    %v1687 = vrcp.pop %v1685
    %v1688 = vmul.f32 1.0, %v1687
    %v1689 = vrcp.pop %v1686
    %v1690 = vmul.f32 1.0, %v1689
    %v1691 = vadd.f32 %v1203, %v1402
    %v1692 = vadd.f32 %v1206, %v1406
    %v1693 = vxor.u32 %v1691, 2147483648
    %v1694 = vxor.u32 %v1692, 2147483648
    %v1695 = vmul.f32 %v1693, 1.442695
    %v1696 = vpow.pop %v1695
    %v1697 = vmul.f32 %v1694, 1.442695
    %v1698 = vpow.pop %v1697
    %v1699 = vadd.f32 %v1696, 1.0
    %v1700 = vadd.f32 %v1698, 1.0
    %v1701 = vrcp.pop %v1699
    %v1702 = vmul.f32 1.0, %v1701
    %v1703 = vrcp.pop %v1700
    %v1704 = vmul.f32 1.0, %v1703
    %v1705 = vmul.f32 %v1688, %v1443
    %v1706 = vmul.f32 %v1690, %v1446
    %v1707 = vadd.f32 %v1204, %v1705
    %v1708 = vadd.f32 %v1207, %v1706
    %v1709 = vtanh.pop %v1707
    %v1710 = vtanh.pop %v1708
    %v1711 = vsub.f32 1.0, %v1702
    %v1712 = vsub.f32 1.0, %v1704
    %v1713 = vmul.f32 %v1711, %v1709
    %v1714 = vmul.f32 %v1712, %v1710
    %v1715 = vmul.f32 %v1702, 0.0
    %v1716 = vmul.f32 %v1704, 0.0
    %v1717 = vadd.f32 %v1713, %v1715
    %v1718 = vadd.f32 %v1714, %v1716
    %v1719 = vadd.f32 %v1215, %v1628
    %v1720 = vadd.f32 %v1218, %v1632
    %v1721 = vxor.u32 %v1719, 2147483648
    %v1722 = vxor.u32 %v1720, 2147483648
    %v1723 = vmul.f32 %v1721, 1.442695
    %v1724 = vpow.pop %v1723
    %v1725 = vmul.f32 %v1722, 1.442695
    %v1726 = vpow.pop %v1725
    %v1727 = vadd.f32 %v1724, 1.0
    %v1728 = vadd.f32 %v1726, 1.0
    %v1729 = vrcp.pop %v1727
    %v1730 = vmul.f32 1.0, %v1729
    %v1731 = vrcp.pop %v1728
    %v1732 = vmul.f32 1.0, %v1731
    %v1733 = vadd.f32 %v1216, %v1630
    %v1734 = vadd.f32 %v1219, %v1634
    %v1735 = vxor.u32 %v1733, 2147483648
    %v1736 = vxor.u32 %v1734, 2147483648
    %v1737 = vmul.f32 %v1735, 1.442695
    %v1738 = vpow.pop %v1737
    %v1739 = vmul.f32 %v1736, 1.442695
    %v1740 = vpow.pop %v1739
    %v1741 = vadd.f32 %v1738, 1.0
    %v1742 = vadd.f32 %v1740, 1.0
    %v1743 = vrcp.pop %v1741
    %v1744 = vmul.f32 1.0, %v1743
    %v1745 = vrcp.pop %v1742
    %v1746 = vmul.f32 1.0, %v1745
    %v1747 = vmul.f32 %v1730, %v1671
    %v1748 = vmul.f32 %v1732, %v1674
    %v1749 = vadd.f32 %v1217, %v1747
    %v1750 = vadd.f32 %v1220, %v1748
    %v1751 = vtanh.pop %v1749
    %v1752 = vtanh.pop %v1750
    %v1753 = vsub.f32 1.0, %v1744
    %v1754 = vsub.f32 1.0, %v1746
    %v1755 = vmul.f32 %v1753, %v1751
    %v1756 = vmul.f32 %v1754, %v1752
    %v1757 = vmul.f32 %v1744, 0.0
    %v1758 = vmul.f32 %v1746, 0.0
    %v1759 = vadd.f32 %v1755, %v1757
    %v1760 = vadd.f32 %v1756, %v1758
    %vm1761 = vcmp.gt.s32.totalorder %v1125, 0
    %vm1762 = vcmp.gt.s32.totalorder %v1126, 0
    %v1763 = vsel %vm1761, 1, 0
    %v1764 = vsel %vm1762, 1, 0
    %1765 = vset.pattern.permute.xlu0 0
    %1766 = vperm.xlu0 %1765, %v1763
    %v1767 = vpop.permute.xlu0 %1766
    %1768 = vset.pattern.permute.xlu0 0
    %1769 = vperm.xlu0 %1768, %v1764
    %v1770 = vpop.permute.xlu0 %1769
    %vm1771 = vcmp.eq.s32.totalorder %v1767, 1
    %vm1772 = vcmp.eq.s32.totalorder %v1770, 1
    %v1773 = vsel %vm1771, %v1717, 0.0
    %v1774 = vsel %vm1772, %v1718, 0.0
    %vm1775 = vcmp.gt.s32.totalorder %v1125, 7
    %vm1776 = vcmp.gt.s32.totalorder %v1126, 7
    %v1777 = vsel %vm1775, 1, 0
    %v1778 = vsel %vm1776, 1, 0
    %1779 = vset.pattern.permute.xlu0 0
    %1780 = vperm.xlu0 %1779, %v1777
    %v1781 = vpop.permute.xlu0 %1780
    %1782 = vset.pattern.permute.xlu0 0
    %1783 = vperm.xlu0 %1782, %v1778
    %v1784 = vpop.permute.xlu0 %1783
    %vm1785 = vcmp.eq.s32.totalorder %v1781, 1
    %vm1786 = vcmp.eq.s32.totalorder %v1784, 1
    %v1787 = vsel %vm1785, %v1759, 0.0
    %v1788 = vsel %vm1786, %v1760, 0.0
    %s1789 = smul.u32 2, 6
    %s1790 = smul.addr %s1789, 4
    %s1791 = scalar_lea.vmem [#allocation2], %s1790
    %v1792 = vld [vmem:[%s1791] sm:$0xff]
    %v1793 = vld [vmem:[%s1791 + $0x8] sm:$0xf]
    %v1794 = vld [vmem:[%s1791 + $0x18] sm:$0xff]
    %v1795 = vld [vmem:[%s1791 + $0x20] sm:$0xf]
    %v1796 = vunpack.c.l.bf16 %v1792
    %v1797 = vunpack.c.h.bf16 %v1792
    %v1798 = vunpack.c.l.bf16 %v1793
    %v1799 = vunpack.c.l.bf16 %v1794
    %v1800 = vunpack.c.h.bf16 %v1794
    %v1801 = vunpack.c.l.bf16 %v1795
    %s1802 = smul.u32 12, 6
    %s1803 = smul.addr %s1802, 4
    %s1804 = scalar_lea.vmem [#allocation2], %s1803
    %v1805 = vld [vmem:[%s1804 + $0xc] sm:$0xff]
    %v1806 = vld [vmem:[%s1804 + $0x14] sm:$0xf]
    %v1807 = vld [vmem:[%s1804 + $0x24] sm:$0xff]
    %v1808 = vld [vmem:[%s1804 + $0x2c] sm:$0xf]
    %v1809 = vunpack.c.l.bf16 %v1805
    %v1810 = vunpack.c.h.bf16 %v1805
    %v1811 = vunpack.c.l.bf16 %v1806
    %v1812 = vunpack.c.l.bf16 %v1807
    %v1813 = vunpack.c.h.bf16 %v1807
    %v1814 = vunpack.c.l.bf16 %v1808
    %v1815 = vpack.c.bf16 %v1774, %v1773
    %1816 = vmatprep.subr.bf16.mxu0 %v1339
    %1817 = vmatpush1.bf16.msra.mxu0 %v1338
    %1818 = vmatprep.subr.bf16.mxu0 %v1336
    %1819 = vmatpush1.bf16.msra.mxu0 %v1335
    %1820 = vmatprep.subr.bf16.mxu0 %v1333
    %1821 = vmatpush1.bf16.msra.mxu0 %v1332
    %1822 = vmatprep.subr.bf16.mxu0 %v1330
    %1823 = vmatpush1.bf16.msra.mxu0 %v1329
    %1824 = vmatprep.subr.bf16.mxu0 %v1327
    %1825 = vmatpush1.bf16.msra.mxu0 %v1326
    %1826 = vmatprep.subr.bf16.mxu0 %v1324
    %1827 = vmatpush1.bf16.msra.mxu0 %v1323
    %1828 = vmatprep.subr.bf16.mxu0 %v1321
    %1829 = vmatpush1.bf16.msra.mxu0 %v1320
    %1830 = vmatprep.subr.bf16.mxu0 %v1318
    %1831 = vmatpush1.bf16.msra.mxu0 %v1317
    %1832 = vmatprep.subr.bf16.mxu0 0
    %1833 = vmatpush2.bf16.msra.mxu0 0
    %1834 = vmatprep.subr.bf16.mxu0 0
    %1835 = vmatpush2.bf16.msra.mxu0 0
    %1836 = vmatprep.subr.bf16.mxu0 0
    %1837 = vmatpush2.bf16.msra.mxu0 0
    %1838 = vmatprep.subr.bf16.mxu0 0
    %1839 = vmatpush2.bf16.msra.mxu0 0
    %1840 = vmatprep.subr.bf16.mxu0 0
    %1841 = vmatpush2.bf16.msra.mxu0 0
    %1842 = vmatprep.subr.bf16.mxu0 0
    %1843 = vmatpush2.bf16.msra.mxu0 0
    %1844 = vmatprep.subr.bf16.mxu0 0
    %1845 = vmatpush2.bf16.msra.mxu0 0
    %1846 = vmatprep.subr.bf16.mxu0 0
    %1847 = vmatpush2.bf16.msra.mxu0 0
    %1848 = vmatprep.mubr.bf16.mxu0 0
    %1849 = vmatmul.mubr.bf16.gmra.mxu0 %v1815
    %v1850 = vpop.f32.mrf.mxu0
    %v1851 = vadd.f32 %v1225, %v1850
    %v1852 = vpop.f32.mrf.mxu0
    %v1853 = vadd.f32 %v1229, %v1852
    %v1854 = vpop.f32.mrf.mxu0
    %v1855 = vadd.f32 %v1225, %v1854
    %v1856 = vpop.f32.mrf.mxu0
    %v1857 = vadd.f32 %v1229, %v1856
    %1858 = vdwg.mxu0
    %1859 = vmatprep.subr.bf16.mxu0 0
    %1860 = vmatpush1.bf16.msra.mxu0 %v1340
    %1861 = vmatprep.subr.bf16.mxu0 0
    %1862 = vmatpush1.bf16.msra.mxu0 %v1337
    %1863 = vmatprep.subr.bf16.mxu0 0
    %1864 = vmatpush1.bf16.msra.mxu0 %v1334
    %1865 = vmatprep.subr.bf16.mxu0 0
    %1866 = vmatpush1.bf16.msra.mxu0 %v1331
    %1867 = vmatprep.subr.bf16.mxu0 0
    %1868 = vmatpush1.bf16.msra.mxu0 %v1328
    %1869 = vmatprep.subr.bf16.mxu0 0
    %1870 = vmatpush1.bf16.msra.mxu0 %v1325
    %1871 = vmatprep.subr.bf16.mxu0 0
    %1872 = vmatpush1.bf16.msra.mxu0 %v1322
    %1873 = vmatprep.subr.bf16.mxu0 0
    %1874 = vmatpush1.bf16.msra.mxu0 %v1319
    %1875 = vmatprep.subr.bf16.mxu0 0
    %1876 = vmatpush2.bf16.msra.mxu0 0
    %1877 = vmatprep.subr.bf16.mxu0 0
    %1878 = vmatpush2.bf16.msra.mxu0 0
    %1879 = vmatprep.subr.bf16.mxu0 0
    %1880 = vmatpush2.bf16.msra.mxu0 0
    %1881 = vmatprep.subr.bf16.mxu0 0
    %1882 = vmatpush2.bf16.msra.mxu0 0
    %1883 = vmatprep.subr.bf16.mxu0 0
    %1884 = vmatpush2.bf16.msra.mxu0 0
    %1885 = vmatprep.subr.bf16.mxu0 0
    %1886 = vmatpush2.bf16.msra.mxu0 0
    %1887 = vmatprep.subr.bf16.mxu0 0
    %1888 = vmatpush2.bf16.msra.mxu0 0
    %1889 = vmatprep.subr.bf16.mxu0 0
    %1890 = vmatpush2.bf16.msra.mxu0 0
    %1891 = vmatprep.mubr.bf16.mxu0 0
    %1892 = vmatmul.mubr.bf16.gmra.mxu0 %v1815
    %v1893 = vpop.f32.mrf.mxu0
    %v1894 = vadd.f32 %v1233, %v1893
    %v1895 = vpop.f32.mrf.mxu0
    %v1896 = vpop.f32.mrf.mxu0
    %v1897 = vadd.f32 %v1233, %v1896
    %v1898 = vpop.f32.mrf.mxu0
    %1899 = vdwg.mxu0
    %v1900 = vpack.c.bf16 %v1788, %v1787
    %1901 = vmatprep.subr.bf16.mxu0 %v1567
    %1902 = vmatpush1.bf16.msra.mxu0 %v1566
    %1903 = vmatprep.subr.bf16.mxu0 %v1564
    %1904 = vmatpush1.bf16.msra.mxu0 %v1563
    %1905 = vmatprep.subr.bf16.mxu0 %v1561
    %1906 = vmatpush1.bf16.msra.mxu0 %v1560
    %1907 = vmatprep.subr.bf16.mxu0 %v1558
    %1908 = vmatpush1.bf16.msra.mxu0 %v1557
    %1909 = vmatprep.subr.bf16.mxu0 %v1555
    %1910 = vmatpush1.bf16.msra.mxu0 %v1554
    %1911 = vmatprep.subr.bf16.mxu0 %v1552
    %1912 = vmatpush1.bf16.msra.mxu0 %v1551
    %1913 = vmatprep.subr.bf16.mxu0 %v1549
    %1914 = vmatpush1.bf16.msra.mxu0 %v1548
    %1915 = vmatprep.subr.bf16.mxu0 %v1546
    %1916 = vmatpush1.bf16.msra.mxu0 %v1545
    %1917 = vmatprep.subr.bf16.mxu0 0
    %1918 = vmatpush2.bf16.msra.mxu0 0
    %1919 = vmatprep.subr.bf16.mxu0 0
    %1920 = vmatpush2.bf16.msra.mxu0 0
    %1921 = vmatprep.subr.bf16.mxu0 0
    %1922 = vmatpush2.bf16.msra.mxu0 0
    %1923 = vmatprep.subr.bf16.mxu0 0
    %1924 = vmatpush2.bf16.msra.mxu0 0
    %1925 = vmatprep.subr.bf16.mxu0 0
    %1926 = vmatpush2.bf16.msra.mxu0 0
    %1927 = vmatprep.subr.bf16.mxu0 0
    %1928 = vmatpush2.bf16.msra.mxu0 0
    %1929 = vmatprep.subr.bf16.mxu0 0
    %1930 = vmatpush2.bf16.msra.mxu0 0
    %1931 = vmatprep.subr.bf16.mxu0 0
    %1932 = vmatpush2.bf16.msra.mxu0 0
    %1933 = vmatprep.mubr.bf16.mxu0 0
    %1934 = vmatmul.mubr.bf16.gmra.mxu0 %v1900
    %v1935 = vpop.f32.mrf.mxu0
    %v1936 = vadd.f32 %v1453, %v1935
    %v1937 = vpop.f32.mrf.mxu0
    %v1938 = vadd.f32 %v1457, %v1937
    %v1939 = vpop.f32.mrf.mxu0
    %v1940 = vadd.f32 %v1453, %v1939
    %v1941 = vpop.f32.mrf.mxu0
    %v1942 = vadd.f32 %v1457, %v1941
    %1943 = vdwg.mxu0
    %1944 = vmatprep.subr.bf16.mxu0 0
    %1945 = vmatpush1.bf16.msra.mxu0 %v1568
    %1946 = vmatprep.subr.bf16.mxu0 0
    %1947 = vmatpush1.bf16.msra.mxu0 %v1565
    %1948 = vmatprep.subr.bf16.mxu0 0
    %1949 = vmatpush1.bf16.msra.mxu0 %v1562
    %1950 = vmatprep.subr.bf16.mxu0 0
    %1951 = vmatpush1.bf16.msra.mxu0 %v1559
    %1952 = vmatprep.subr.bf16.mxu0 0
    %1953 = vmatpush1.bf16.msra.mxu0 %v1556
    %1954 = vmatprep.subr.bf16.mxu0 0
    %1955 = vmatpush1.bf16.msra.mxu0 %v1553
    %1956 = vmatprep.subr.bf16.mxu0 0
    %1957 = vmatpush1.bf16.msra.mxu0 %v1550
    %1958 = vmatprep.subr.bf16.mxu0 0
    %1959 = vmatpush1.bf16.msra.mxu0 %v1547
    %1960 = vmatprep.subr.bf16.mxu0 0
    %1961 = vmatpush2.bf16.msra.mxu0 0
    %1962 = vmatprep.subr.bf16.mxu0 0
    %1963 = vmatpush2.bf16.msra.mxu0 0
    %1964 = vmatprep.subr.bf16.mxu0 0
    %1965 = vmatpush2.bf16.msra.mxu0 0
    %1966 = vmatprep.subr.bf16.mxu0 0
    %1967 = vmatpush2.bf16.msra.mxu0 0
    %1968 = vmatprep.subr.bf16.mxu0 0
    %1969 = vmatpush2.bf16.msra.mxu0 0
    %1970 = vmatprep.subr.bf16.mxu0 0
    %1971 = vmatpush2.bf16.msra.mxu0 0
    %1972 = vmatprep.subr.bf16.mxu0 0
    %1973 = vmatpush2.bf16.msra.mxu0 0
    %1974 = vmatprep.subr.bf16.mxu0 0
    %1975 = vmatpush2.bf16.msra.mxu0 0
    %1976 = vmatprep.mubr.bf16.mxu0 0
    %1977 = vmatmul.mubr.bf16.gmra.mxu0 %v1900
    %v1978 = vpop.f32.mrf.mxu0
    %v1979 = vadd.f32 %v1461, %v1978
    %v1980 = vpop.f32.mrf.mxu0
    %v1981 = vpop.f32.mrf.mxu0
    %v1982 = vadd.f32 %v1461, %v1981
    %v1983 = vpop.f32.mrf.mxu0
    %1984 = vdwg.mxu0
    %v1985 = vadd.f32 %v1796, %v1851
    %v1986 = vadd.f32 %v1799, %v1855
    %v1987 = vxor.u32 %v1985, 2147483648
    %v1988 = vxor.u32 %v1986, 2147483648
    %v1989 = vmul.f32 %v1987, 1.442695
    %v1990 = vpow.pop %v1989
    %v1991 = vmul.f32 %v1988, 1.442695
    %v1992 = vpow.pop %v1991
    %v1993 = vadd.f32 %v1990, 1.0
    %v1994 = vadd.f32 %v1992, 1.0
    %v1995 = vrcp.pop %v1993
    %v1996 = vmul.f32 1.0, %v1995
    %v1997 = vrcp.pop %v1994
    %v1998 = vmul.f32 1.0, %v1997
    %v1999 = vadd.f32 %v1797, %v1853
    %v2000 = vadd.f32 %v1800, %v1857
    %v2001 = vxor.u32 %v1999, 2147483648
    %v2002 = vxor.u32 %v2000, 2147483648
    %v2003 = vmul.f32 %v2001, 1.442695
    %v2004 = vpow.pop %v2003
    %v2005 = vmul.f32 %v2002, 1.442695
    %v2006 = vpow.pop %v2005
    %v2007 = vadd.f32 %v2004, 1.0
    %v2008 = vadd.f32 %v2006, 1.0
    %v2009 = vrcp.pop %v2007
    %v2010 = vmul.f32 1.0, %v2009
    %v2011 = vrcp.pop %v2008
    %v2012 = vmul.f32 1.0, %v2011
    %v2013 = vmul.f32 %v1996, %v1894
    %v2014 = vmul.f32 %v1998, %v1897
    %v2015 = vadd.f32 %v1798, %v2013
    %v2016 = vadd.f32 %v1801, %v2014
    %v2017 = vtanh.pop %v2015
    %v2018 = vtanh.pop %v2016
    %v2019 = vsub.f32 1.0, %v2010
    %v2020 = vsub.f32 1.0, %v2012
    %v2021 = vmul.f32 %v2019, %v2017
    %v2022 = vmul.f32 %v2020, %v2018
    %v2023 = vmul.f32 %v2010, %v1773
    %v2024 = vmul.f32 %v2012, %v1774
    %v2025 = vadd.f32 %v2021, %v2023
    %v2026 = vadd.f32 %v2022, %v2024
    %v2027 = vadd.f32 %v1809, %v1936
    %v2028 = vadd.f32 %v1812, %v1940
    %v2029 = vxor.u32 %v2027, 2147483648
    %v2030 = vxor.u32 %v2028, 2147483648
    %v2031 = vmul.f32 %v2029, 1.442695
    %v2032 = vpow.pop %v2031
    %v2033 = vmul.f32 %v2030, 1.442695
    %v2034 = vpow.pop %v2033
    %v2035 = vadd.f32 %v2032, 1.0
    %v2036 = vadd.f32 %v2034, 1.0
    %v2037 = vrcp.pop %v2035
    %v2038 = vmul.f32 1.0, %v2037
    %v2039 = vrcp.pop %v2036
    %v2040 = vmul.f32 1.0, %v2039
    %v2041 = vadd.f32 %v1810, %v1938
    %v2042 = vadd.f32 %v1813, %v1942
    %v2043 = vxor.u32 %v2041, 2147483648
    %v2044 = vxor.u32 %v2042, 2147483648
    %v2045 = vmul.f32 %v2043, 1.442695
    %v2046 = vpow.pop %v2045
    %v2047 = vmul.f32 %v2044, 1.442695
    %v2048 = vpow.pop %v2047
    %v2049 = vadd.f32 %v2046, 1.0
    %v2050 = vadd.f32 %v2048, 1.0
    %v2051 = vrcp.pop %v2049
    %v2052 = vmul.f32 1.0, %v2051
    %v2053 = vrcp.pop %v2050
    %v2054 = vmul.f32 1.0, %v2053
    %v2055 = vmul.f32 %v2038, %v1979
    %v2056 = vmul.f32 %v2040, %v1982
    %v2057 = vadd.f32 %v1811, %v2055
    %v2058 = vadd.f32 %v1814, %v2056
    %v2059 = vtanh.pop %v2057
    %v2060 = vtanh.pop %v2058
    %v2061 = vsub.f32 1.0, %v2052
    %v2062 = vsub.f32 1.0, %v2054
    %v2063 = vmul.f32 %v2061, %v2059
    %v2064 = vmul.f32 %v2062, %v2060
    %v2065 = vmul.f32 %v2052, %v1787
    %v2066 = vmul.f32 %v2054, %v1788
    %v2067 = vadd.f32 %v2063, %v2065
    %v2068 = vadd.f32 %v2064, %v2066
    %vm2069 = vcmp.gt.s32.totalorder %v1125, 1
    %vm2070 = vcmp.gt.s32.totalorder %v1126, 1
    %v2071 = vsel %vm2069, 1, 0
    %v2072 = vsel %vm2070, 1, 0
    %2073 = vset.pattern.permute.xlu0 0
    %2074 = vperm.xlu0 %2073, %v2071
    %v2075 = vpop.permute.xlu0 %2074
    %2076 = vset.pattern.permute.xlu0 0
    %2077 = vperm.xlu0 %2076, %v2072
    %v2078 = vpop.permute.xlu0 %2077
    %vm2079 = vcmp.eq.s32.totalorder %v2075, 1
    %vm2080 = vcmp.eq.s32.totalorder %v2078, 1
    %v2081 = vsel %vm2079, %v2025, %v1773
    %v2082 = vsel %vm2080, %v2026, %v1774
    %vm2083 = vcmp.gt.s32.totalorder %v1125, 6
    %vm2084 = vcmp.gt.s32.totalorder %v1126, 6
    %v2085 = vsel %vm2083, 1, 0
    %v2086 = vsel %vm2084, 1, 0
    %2087 = vset.pattern.permute.xlu0 0
    %2088 = vperm.xlu0 %2087, %v2085
    %v2089 = vpop.permute.xlu0 %2088
    %2090 = vset.pattern.permute.xlu0 0
    %2091 = vperm.xlu0 %2090, %v2086
    %v2092 = vpop.permute.xlu0 %2091
    %vm2093 = vcmp.eq.s32.totalorder %v2089, 1
    %vm2094 = vcmp.eq.s32.totalorder %v2092, 1
    %v2095 = vsel %vm2093, %v2067, %v1787
    %v2096 = vsel %vm2094, %v2068, %v1788
    %s2097 = smul.u32 4, 6
    %s2098 = smul.addr %s2097, 4
    %s2099 = scalar_lea.vmem [#allocation2], %s2098
    %v2100 = vld [vmem:[%s2099] sm:$0xff]
    %v2101 = vld [vmem:[%s2099 + $0x8] sm:$0xf]
    %v2102 = vld [vmem:[%s2099 + $0x18] sm:$0xff]
    %v2103 = vld [vmem:[%s2099 + $0x20] sm:$0xf]
    %v2104 = vunpack.c.l.bf16 %v2100
    %v2105 = vunpack.c.h.bf16 %v2100
    %v2106 = vunpack.c.l.bf16 %v2101
    %v2107 = vunpack.c.l.bf16 %v2102
    %v2108 = vunpack.c.h.bf16 %v2102
    %v2109 = vunpack.c.l.bf16 %v2103
    %s2110 = smul.u32 10, 6
    %s2111 = smul.addr %s2110, 4
    %s2112 = scalar_lea.vmem [#allocation2], %s2111
    %v2113 = vld [vmem:[%s2112 + $0xc] sm:$0xff]
    %v2114 = vld [vmem:[%s2112 + $0x14] sm:$0xf]
    %v2115 = vld [vmem:[%s2112 + $0x24] sm:$0xff]
    %v2116 = vld [vmem:[%s2112 + $0x2c] sm:$0xf]
    %v2117 = vunpack.c.l.bf16 %v2113
    %v2118 = vunpack.c.h.bf16 %v2113
    %v2119 = vunpack.c.l.bf16 %v2114
    %v2120 = vunpack.c.l.bf16 %v2115
    %v2121 = vunpack.c.h.bf16 %v2115
    %v2122 = vunpack.c.l.bf16 %v2116
    %v2123 = vpack.c.bf16 %v2082, %v2081
    %2124 = vmatprep.subr.bf16.mxu0 %v1339
    %2125 = vmatpush1.bf16.msra.mxu0 %v1338
    %2126 = vmatprep.subr.bf16.mxu0 %v1336
    %2127 = vmatpush1.bf16.msra.mxu0 %v1335
    %2128 = vmatprep.subr.bf16.mxu0 %v1333
    %2129 = vmatpush1.bf16.msra.mxu0 %v1332
    %2130 = vmatprep.subr.bf16.mxu0 %v1330
    %2131 = vmatpush1.bf16.msra.mxu0 %v1329
    %2132 = vmatprep.subr.bf16.mxu0 %v1327
    %2133 = vmatpush1.bf16.msra.mxu0 %v1326
    %2134 = vmatprep.subr.bf16.mxu0 %v1324
    %2135 = vmatpush1.bf16.msra.mxu0 %v1323
    %2136 = vmatprep.subr.bf16.mxu0 %v1321
    %2137 = vmatpush1.bf16.msra.mxu0 %v1320
    %2138 = vmatprep.subr.bf16.mxu0 %v1318
    %2139 = vmatpush1.bf16.msra.mxu0 %v1317
    %2140 = vmatprep.subr.bf16.mxu0 0
    %2141 = vmatpush2.bf16.msra.mxu0 0
    %2142 = vmatprep.subr.bf16.mxu0 0
    %2143 = vmatpush2.bf16.msra.mxu0 0
    %2144 = vmatprep.subr.bf16.mxu0 0
    %2145 = vmatpush2.bf16.msra.mxu0 0
    %2146 = vmatprep.subr.bf16.mxu0 0
    %2147 = vmatpush2.bf16.msra.mxu0 0
    %2148 = vmatprep.subr.bf16.mxu0 0
    %2149 = vmatpush2.bf16.msra.mxu0 0
    %2150 = vmatprep.subr.bf16.mxu0 0
    %2151 = vmatpush2.bf16.msra.mxu0 0
    %2152 = vmatprep.subr.bf16.mxu0 0
    %2153 = vmatpush2.bf16.msra.mxu0 0
    %2154 = vmatprep.subr.bf16.mxu0 0
    %2155 = vmatpush2.bf16.msra.mxu0 0
    %2156 = vmatprep.mubr.bf16.mxu0 0
    %2157 = vmatmul.mubr.bf16.gmra.mxu0 %v2123
    %v2158 = vpop.f32.mrf.mxu0
    %v2159 = vadd.f32 %v1225, %v2158
    %v2160 = vpop.f32.mrf.mxu0
    %v2161 = vadd.f32 %v1229, %v2160
    %v2162 = vpop.f32.mrf.mxu0
    %v2163 = vadd.f32 %v1225, %v2162
    %v2164 = vpop.f32.mrf.mxu0
    %v2165 = vadd.f32 %v1229, %v2164
    %2166 = vdwg.mxu0
    %2167 = vmatprep.subr.bf16.mxu0 0
    %2168 = vmatpush1.bf16.msra.mxu0 %v1340
    %2169 = vmatprep.subr.bf16.mxu0 0
    %2170 = vmatpush1.bf16.msra.mxu0 %v1337
    %2171 = vmatprep.subr.bf16.mxu0 0
    %2172 = vmatpush1.bf16.msra.mxu0 %v1334
    %2173 = vmatprep.subr.bf16.mxu0 0
    %2174 = vmatpush1.bf16.msra.mxu0 %v1331
    %2175 = vmatprep.subr.bf16.mxu0 0
    %2176 = vmatpush1.bf16.msra.mxu0 %v1328
    %2177 = vmatprep.subr.bf16.mxu0 0
    %2178 = vmatpush1.bf16.msra.mxu0 %v1325
    %2179 = vmatprep.subr.bf16.mxu0 0
    %2180 = vmatpush1.bf16.msra.mxu0 %v1322
    %2181 = vmatprep.subr.bf16.mxu0 0
    %2182 = vmatpush1.bf16.msra.mxu0 %v1319
    %2183 = vmatprep.subr.bf16.mxu0 0
    %2184 = vmatpush2.bf16.msra.mxu0 0
    %2185 = vmatprep.subr.bf16.mxu0 0
    %2186 = vmatpush2.bf16.msra.mxu0 0
    %2187 = vmatprep.subr.bf16.mxu0 0
    %2188 = vmatpush2.bf16.msra.mxu0 0
    %2189 = vmatprep.subr.bf16.mxu0 0
    %2190 = vmatpush2.bf16.msra.mxu0 0
    %2191 = vmatprep.subr.bf16.mxu0 0
    %2192 = vmatpush2.bf16.msra.mxu0 0
    %2193 = vmatprep.subr.bf16.mxu0 0
    %2194 = vmatpush2.bf16.msra.mxu0 0
    %2195 = vmatprep.subr.bf16.mxu0 0
    %2196 = vmatpush2.bf16.msra.mxu0 0
    %2197 = vmatprep.subr.bf16.mxu0 0
    %2198 = vmatpush2.bf16.msra.mxu0 0
    %2199 = vmatprep.mubr.bf16.mxu0 0
    %2200 = vmatmul.mubr.bf16.gmra.mxu0 %v2123
    %v2201 = vpop.f32.mrf.mxu0
    %v2202 = vadd.f32 %v1233, %v2201
    %v2203 = vpop.f32.mrf.mxu0
    %v2204 = vpop.f32.mrf.mxu0
    %v2205 = vadd.f32 %v1233, %v2204
    %v2206 = vpop.f32.mrf.mxu0
    %2207 = vdwg.mxu0
    %v2208 = vpack.c.bf16 %v2096, %v2095
    %2209 = vmatprep.subr.bf16.mxu0 %v1567
    %2210 = vmatpush1.bf16.msra.mxu0 %v1566
    %2211 = vmatprep.subr.bf16.mxu0 %v1564
    %2212 = vmatpush1.bf16.msra.mxu0 %v1563
    %2213 = vmatprep.subr.bf16.mxu0 %v1561
    %2214 = vmatpush1.bf16.msra.mxu0 %v1560
    %2215 = vmatprep.subr.bf16.mxu0 %v1558
    %2216 = vmatpush1.bf16.msra.mxu0 %v1557
    %2217 = vmatprep.subr.bf16.mxu0 %v1555
    %2218 = vmatpush1.bf16.msra.mxu0 %v1554
    %2219 = vmatprep.subr.bf16.mxu0 %v1552
    %2220 = vmatpush1.bf16.msra.mxu0 %v1551
    %2221 = vmatprep.subr.bf16.mxu0 %v1549
    %2222 = vmatpush1.bf16.msra.mxu0 %v1548
    %2223 = vmatprep.subr.bf16.mxu0 %v1546
    %2224 = vmatpush1.bf16.msra.mxu0 %v1545
    %2225 = vmatprep.subr.bf16.mxu0 0
    %2226 = vmatpush2.bf16.msra.mxu0 0
    %2227 = vmatprep.subr.bf16.mxu0 0
    %2228 = vmatpush2.bf16.msra.mxu0 0
    %2229 = vmatprep.subr.bf16.mxu0 0
    %2230 = vmatpush2.bf16.msra.mxu0 0
    %2231 = vmatprep.subr.bf16.mxu0 0
    %2232 = vmatpush2.bf16.msra.mxu0 0
    %2233 = vmatprep.subr.bf16.mxu0 0
    %2234 = vmatpush2.bf16.msra.mxu0 0
    %2235 = vmatprep.subr.bf16.mxu0 0
    %2236 = vmatpush2.bf16.msra.mxu0 0
    %2237 = vmatprep.subr.bf16.mxu0 0
    %2238 = vmatpush2.bf16.msra.mxu0 0
    %2239 = vmatprep.subr.bf16.mxu0 0
    %2240 = vmatpush2.bf16.msra.mxu0 0
    %2241 = vmatprep.mubr.bf16.mxu0 0
    %2242 = vmatmul.mubr.bf16.gmra.mxu0 %v2208
    %v2243 = vpop.f32.mrf.mxu0
    %v2244 = vadd.f32 %v1453, %v2243
    %v2245 = vpop.f32.mrf.mxu0
    %v2246 = vadd.f32 %v1457, %v2245
    %v2247 = vpop.f32.mrf.mxu0
    %v2248 = vadd.f32 %v1453, %v2247
    %v2249 = vpop.f32.mrf.mxu0
    %v2250 = vadd.f32 %v1457, %v2249
    %2251 = vdwg.mxu0
    %2252 = vmatprep.subr.bf16.mxu0 0
    %2253 = vmatpush1.bf16.msra.mxu0 %v1568
    %2254 = vmatprep.subr.bf16.mxu0 0
    %2255 = vmatpush1.bf16.msra.mxu0 %v1565
    %2256 = vmatprep.subr.bf16.mxu0 0
    %2257 = vmatpush1.bf16.msra.mxu0 %v1562
    %2258 = vmatprep.subr.bf16.mxu0 0
    %2259 = vmatpush1.bf16.msra.mxu0 %v1559
    %2260 = vmatprep.subr.bf16.mxu0 0
    %2261 = vmatpush1.bf16.msra.mxu0 %v1556
    %2262 = vmatprep.subr.bf16.mxu0 0
    %2263 = vmatpush1.bf16.msra.mxu0 %v1553
    %2264 = vmatprep.subr.bf16.mxu0 0
    %2265 = vmatpush1.bf16.msra.mxu0 %v1550
    %2266 = vmatprep.subr.bf16.mxu0 0
    %2267 = vmatpush1.bf16.msra.mxu0 %v1547
    %2268 = vmatprep.subr.bf16.mxu0 0
    %2269 = vmatpush2.bf16.msra.mxu0 0
    %2270 = vmatprep.subr.bf16.mxu0 0
    %2271 = vmatpush2.bf16.msra.mxu0 0
    %2272 = vmatprep.subr.bf16.mxu0 0
    %2273 = vmatpush2.bf16.msra.mxu0 0
    %2274 = vmatprep.subr.bf16.mxu0 0
    %2275 = vmatpush2.bf16.msra.mxu0 0
    %2276 = vmatprep.subr.bf16.mxu0 0
    %2277 = vmatpush2.bf16.msra.mxu0 0
    %2278 = vmatprep.subr.bf16.mxu0 0
    %2279 = vmatpush2.bf16.msra.mxu0 0
    %2280 = vmatprep.subr.bf16.mxu0 0
    %2281 = vmatpush2.bf16.msra.mxu0 0
    %2282 = vmatprep.subr.bf16.mxu0 0
    %2283 = vmatpush2.bf16.msra.mxu0 0
    %2284 = vmatprep.mubr.bf16.mxu0 0
    %2285 = vmatmul.mubr.bf16.gmra.mxu0 %v2208
    %v2286 = vpop.f32.mrf.mxu0
    %v2287 = vadd.f32 %v1461, %v2286
    %v2288 = vpop.f32.mrf.mxu0
    %v2289 = vpop.f32.mrf.mxu0
    %v2290 = vadd.f32 %v1461, %v2289
    %v2291 = vpop.f32.mrf.mxu0
    %2292 = vdwg.mxu0
    %v2293 = vadd.f32 %v2104, %v2159
    %v2294 = vadd.f32 %v2107, %v2163
    %v2295 = vxor.u32 %v2293, 2147483648
    %v2296 = vxor.u32 %v2294, 2147483648
    %v2297 = vmul.f32 %v2295, 1.442695
    %v2298 = vpow.pop %v2297
    %v2299 = vmul.f32 %v2296, 1.442695
    %v2300 = vpow.pop %v2299
    %v2301 = vadd.f32 %v2298, 1.0
    %v2302 = vadd.f32 %v2300, 1.0
    %v2303 = vrcp.pop %v2301
    %v2304 = vmul.f32 1.0, %v2303
    %v2305 = vrcp.pop %v2302
    %v2306 = vmul.f32 1.0, %v2305
    %v2307 = vadd.f32 %v2105, %v2161
    %v2308 = vadd.f32 %v2108, %v2165
    %v2309 = vxor.u32 %v2307, 2147483648
    %v2310 = vxor.u32 %v2308, 2147483648
    %v2311 = vmul.f32 %v2309, 1.442695
    %v2312 = vpow.pop %v2311
    %v2313 = vmul.f32 %v2310, 1.442695
    %v2314 = vpow.pop %v2313
    %v2315 = vadd.f32 %v2312, 1.0
    %v2316 = vadd.f32 %v2314, 1.0
    %v2317 = vrcp.pop %v2315
    %v2318 = vmul.f32 1.0, %v2317
    %v2319 = vrcp.pop %v2316
    %v2320 = vmul.f32 1.0, %v2319
    %v2321 = vmul.f32 %v2304, %v2202
    %v2322 = vmul.f32 %v2306, %v2205
    %v2323 = vadd.f32 %v2106, %v2321
    %v2324 = vadd.f32 %v2109, %v2322
    %v2325 = vtanh.pop %v2323
    %v2326 = vtanh.pop %v2324
    %v2327 = vsub.f32 1.0, %v2318
    %v2328 = vsub.f32 1.0, %v2320
    %v2329 = vmul.f32 %v2327, %v2325
    %v2330 = vmul.f32 %v2328, %v2326
    %v2331 = vmul.f32 %v2318, %v2081
    %v2332 = vmul.f32 %v2320, %v2082
    %v2333 = vadd.f32 %v2329, %v2331
    %v2334 = vadd.f32 %v2330, %v2332
    %v2335 = vadd.f32 %v2117, %v2244
    %v2336 = vadd.f32 %v2120, %v2248
    %v2337 = vxor.u32 %v2335, 2147483648
    %v2338 = vxor.u32 %v2336, 2147483648
    %v2339 = vmul.f32 %v2337, 1.442695
    %v2340 = vpow.pop %v2339
    %v2341 = vmul.f32 %v2338, 1.442695
    %v2342 = vpow.pop %v2341
    %v2343 = vadd.f32 %v2340, 1.0
    %v2344 = vadd.f32 %v2342, 1.0
    %v2345 = vrcp.pop %v2343
    %v2346 = vmul.f32 1.0, %v2345
    %v2347 = vrcp.pop %v2344
    %v2348 = vmul.f32 1.0, %v2347
    %v2349 = vadd.f32 %v2118, %v2246
    %v2350 = vadd.f32 %v2121, %v2250
    %v2351 = vxor.u32 %v2349, 2147483648
    %v2352 = vxor.u32 %v2350, 2147483648
    %v2353 = vmul.f32 %v2351, 1.442695
    %v2354 = vpow.pop %v2353
    %v2355 = vmul.f32 %v2352, 1.442695
    %v2356 = vpow.pop %v2355
    %v2357 = vadd.f32 %v2354, 1.0
    %v2358 = vadd.f32 %v2356, 1.0
    %v2359 = vrcp.pop %v2357
    %v2360 = vmul.f32 1.0, %v2359
    %v2361 = vrcp.pop %v2358
    %v2362 = vmul.f32 1.0, %v2361
    %v2363 = vmul.f32 %v2346, %v2287
    %v2364 = vmul.f32 %v2348, %v2290
    %v2365 = vadd.f32 %v2119, %v2363
    %v2366 = vadd.f32 %v2122, %v2364
    %v2367 = vtanh.pop %v2365
    %v2368 = vtanh.pop %v2366
    %v2369 = vsub.f32 1.0, %v2360
    %v2370 = vsub.f32 1.0, %v2362
    %v2371 = vmul.f32 %v2369, %v2367
    %v2372 = vmul.f32 %v2370, %v2368
    %v2373 = vmul.f32 %v2360, %v2095
    %v2374 = vmul.f32 %v2362, %v2096
    %v2375 = vadd.f32 %v2371, %v2373
    %v2376 = vadd.f32 %v2372, %v2374
    %vm2377 = vcmp.gt.s32.totalorder %v1125, 2
    %vm2378 = vcmp.gt.s32.totalorder %v1126, 2
    %v2379 = vsel %vm2377, 1, 0
    %v2380 = vsel %vm2378, 1, 0
    %2381 = vset.pattern.permute.xlu0 0
    %2382 = vperm.xlu0 %2381, %v2379
    %v2383 = vpop.permute.xlu0 %2382
    %2384 = vset.pattern.permute.xlu0 0
    %2385 = vperm.xlu0 %2384, %v2380
    %v2386 = vpop.permute.xlu0 %2385
    %vm2387 = vcmp.eq.s32.totalorder %v2383, 1
    %vm2388 = vcmp.eq.s32.totalorder %v2386, 1
    %v2389 = vsel %vm2387, %v2333, %v2081
    %v2390 = vsel %vm2388, %v2334, %v2082
    %vm2391 = vcmp.gt.s32.totalorder %v1125, 5
    %vm2392 = vcmp.gt.s32.totalorder %v1126, 5
    %v2393 = vsel %vm2391, 1, 0
    %v2394 = vsel %vm2392, 1, 0
    %2395 = vset.pattern.permute.xlu0 0
    %2396 = vperm.xlu0 %2395, %v2393
    %v2397 = vpop.permute.xlu0 %2396
    %2398 = vset.pattern.permute.xlu0 0
    %2399 = vperm.xlu0 %2398, %v2394
    %v2400 = vpop.permute.xlu0 %2399
    %vm2401 = vcmp.eq.s32.totalorder %v2397, 1
    %vm2402 = vcmp.eq.s32.totalorder %v2400, 1
    %v2403 = vsel %vm2401, %v2375, %v2095
    %v2404 = vsel %vm2402, %v2376, %v2096
    %s2405 = smul.u32 6, 6
    %s2406 = smul.addr %s2405, 4
    %s2407 = scalar_lea.vmem [#allocation2], %s2406
    %v2408 = vld [vmem:[%s2407] sm:$0xff]
    %v2409 = vld [vmem:[%s2407 + $0x8] sm:$0xf]
    %v2410 = vld [vmem:[%s2407 + $0x18] sm:$0xff]
    %v2411 = vld [vmem:[%s2407 + $0x20] sm:$0xf]
    %v2412 = vunpack.c.l.bf16 %v2408
    %v2413 = vunpack.c.h.bf16 %v2408
    %v2414 = vunpack.c.l.bf16 %v2409
    %v2415 = vunpack.c.l.bf16 %v2410
    %v2416 = vunpack.c.h.bf16 %v2410
    %v2417 = vunpack.c.l.bf16 %v2411
    %s2418 = smul.u32 8, 6
    %s2419 = smul.addr %s2418, 4
    %s2420 = scalar_lea.vmem [#allocation2], %s2419
    %v2421 = vld [vmem:[%s2420 + $0xc] sm:$0xff]
    %v2422 = vld [vmem:[%s2420 + $0x14] sm:$0xf]
    %v2423 = vld [vmem:[%s2420 + $0x24] sm:$0xff]
    %v2424 = vld [vmem:[%s2420 + $0x2c] sm:$0xf]
    %v2425 = vunpack.c.l.bf16 %v2421
    %v2426 = vunpack.c.h.bf16 %v2421
    %v2427 = vunpack.c.l.bf16 %v2422
    %v2428 = vunpack.c.l.bf16 %v2423
    %v2429 = vunpack.c.h.bf16 %v2423
    %v2430 = vunpack.c.l.bf16 %v2424
    %v2431 = vpack.c.bf16 %v2390, %v2389
    %2432 = vmatprep.subr.bf16.mxu0 %v1339
    %2433 = vmatpush1.bf16.msra.mxu0 %v1338
    %2434 = vmatprep.subr.bf16.mxu0 %v1336
    %2435 = vmatpush1.bf16.msra.mxu0 %v1335
    %2436 = vmatprep.subr.bf16.mxu0 %v1333
    %2437 = vmatpush1.bf16.msra.mxu0 %v1332
    %2438 = vmatprep.subr.bf16.mxu0 %v1330
    %2439 = vmatpush1.bf16.msra.mxu0 %v1329
    %2440 = vmatprep.subr.bf16.mxu0 %v1327
    %2441 = vmatpush1.bf16.msra.mxu0 %v1326
    %2442 = vmatprep.subr.bf16.mxu0 %v1324
    %2443 = vmatpush1.bf16.msra.mxu0 %v1323
    %2444 = vmatprep.subr.bf16.mxu0 %v1321
    %2445 = vmatpush1.bf16.msra.mxu0 %v1320
    %2446 = vmatprep.subr.bf16.mxu0 %v1318
    %2447 = vmatpush1.bf16.msra.mxu0 %v1317
    %2448 = vmatprep.subr.bf16.mxu0 0
    %2449 = vmatpush2.bf16.msra.mxu0 0
    %2450 = vmatprep.subr.bf16.mxu0 0
    %2451 = vmatpush2.bf16.msra.mxu0 0
    %2452 = vmatprep.subr.bf16.mxu0 0
    %2453 = vmatpush2.bf16.msra.mxu0 0
    %2454 = vmatprep.subr.bf16.mxu0 0
    %2455 = vmatpush2.bf16.msra.mxu0 0
    %2456 = vmatprep.subr.bf16.mxu0 0
    %2457 = vmatpush2.bf16.msra.mxu0 0
    %2458 = vmatprep.subr.bf16.mxu0 0
    %2459 = vmatpush2.bf16.msra.mxu0 0
    %2460 = vmatprep.subr.bf16.mxu0 0
    %2461 = vmatpush2.bf16.msra.mxu0 0
    %2462 = vmatprep.subr.bf16.mxu0 0
    %2463 = vmatpush2.bf16.msra.mxu0 0
    %2464 = vmatprep.mubr.bf16.mxu0 0
    %2465 = vmatmul.mubr.bf16.gmra.mxu0 %v2431
    %v2466 = vpop.f32.mrf.mxu0
    %v2467 = vadd.f32 %v1225, %v2466
    %v2468 = vpop.f32.mrf.mxu0
    %v2469 = vadd.f32 %v1229, %v2468
    %v2470 = vpop.f32.mrf.mxu0
    %v2471 = vadd.f32 %v1225, %v2470
    %v2472 = vpop.f32.mrf.mxu0
    %v2473 = vadd.f32 %v1229, %v2472
    %2474 = vdwg.mxu0
    %2475 = vmatprep.subr.bf16.mxu0 0
    %2476 = vmatpush1.bf16.msra.mxu0 %v1340
    %2477 = vmatprep.subr.bf16.mxu0 0
    %2478 = vmatpush1.bf16.msra.mxu0 %v1337
    %2479 = vmatprep.subr.bf16.mxu0 0
    %2480 = vmatpush1.bf16.msra.mxu0 %v1334
    %2481 = vmatprep.subr.bf16.mxu0 0
    %2482 = vmatpush1.bf16.msra.mxu0 %v1331
    %2483 = vmatprep.subr.bf16.mxu0 0
    %2484 = vmatpush1.bf16.msra.mxu0 %v1328
    %2485 = vmatprep.subr.bf16.mxu0 0
    %2486 = vmatpush1.bf16.msra.mxu0 %v1325
    %2487 = vmatprep.subr.bf16.mxu0 0
    %2488 = vmatpush1.bf16.msra.mxu0 %v1322
    %2489 = vmatprep.subr.bf16.mxu0 0
    %2490 = vmatpush1.bf16.msra.mxu0 %v1319
    %2491 = vmatprep.subr.bf16.mxu0 0
    %2492 = vmatpush2.bf16.msra.mxu0 0
    %2493 = vmatprep.subr.bf16.mxu0 0
    %2494 = vmatpush2.bf16.msra.mxu0 0
    %2495 = vmatprep.subr.bf16.mxu0 0
    %2496 = vmatpush2.bf16.msra.mxu0 0
    %2497 = vmatprep.subr.bf16.mxu0 0
    %2498 = vmatpush2.bf16.msra.mxu0 0
    %2499 = vmatprep.subr.bf16.mxu0 0
    %2500 = vmatpush2.bf16.msra.mxu0 0
    %2501 = vmatprep.subr.bf16.mxu0 0
    %2502 = vmatpush2.bf16.msra.mxu0 0
    %2503 = vmatprep.subr.bf16.mxu0 0
    %2504 = vmatpush2.bf16.msra.mxu0 0
    %2505 = vmatprep.subr.bf16.mxu0 0
    %2506 = vmatpush2.bf16.msra.mxu0 0
    %2507 = vmatprep.mubr.bf16.mxu0 0
    %2508 = vmatmul.mubr.bf16.gmra.mxu0 %v2431
    %v2509 = vpop.f32.mrf.mxu0
    %v2510 = vadd.f32 %v1233, %v2509
    %v2511 = vpop.f32.mrf.mxu0
    %v2512 = vpop.f32.mrf.mxu0
    %v2513 = vadd.f32 %v1233, %v2512
    %v2514 = vpop.f32.mrf.mxu0
    %2515 = vdwg.mxu0
    %v2516 = vpack.c.bf16 %v2404, %v2403
    %2517 = vmatprep.subr.bf16.mxu0 %v1567
    %2518 = vmatpush1.bf16.msra.mxu0 %v1566
    %2519 = vmatprep.subr.bf16.mxu0 %v1564
    %2520 = vmatpush1.bf16.msra.mxu0 %v1563
    %2521 = vmatprep.subr.bf16.mxu0 %v1561
    %2522 = vmatpush1.bf16.msra.mxu0 %v1560
    %2523 = vmatprep.subr.bf16.mxu0 %v1558
    %2524 = vmatpush1.bf16.msra.mxu0 %v1557
    %2525 = vmatprep.subr.bf16.mxu0 %v1555
    %2526 = vmatpush1.bf16.msra.mxu0 %v1554
    %2527 = vmatprep.subr.bf16.mxu0 %v1552
    %2528 = vmatpush1.bf16.msra.mxu0 %v1551
    %2529 = vmatprep.subr.bf16.mxu0 %v1549
    %2530 = vmatpush1.bf16.msra.mxu0 %v1548
    %2531 = vmatprep.subr.bf16.mxu0 %v1546
    %2532 = vmatpush1.bf16.msra.mxu0 %v1545
    %2533 = vmatprep.subr.bf16.mxu0 0
    %2534 = vmatpush2.bf16.msra.mxu0 0
    %2535 = vmatprep.subr.bf16.mxu0 0
    %2536 = vmatpush2.bf16.msra.mxu0 0
    %2537 = vmatprep.subr.bf16.mxu0 0
    %2538 = vmatpush2.bf16.msra.mxu0 0
    %2539 = vmatprep.subr.bf16.mxu0 0
    %2540 = vmatpush2.bf16.msra.mxu0 0
    %2541 = vmatprep.subr.bf16.mxu0 0
    %2542 = vmatpush2.bf16.msra.mxu0 0
    %2543 = vmatprep.subr.bf16.mxu0 0
    %2544 = vmatpush2.bf16.msra.mxu0 0
    %2545 = vmatprep.subr.bf16.mxu0 0
    %2546 = vmatpush2.bf16.msra.mxu0 0
    %2547 = vmatprep.subr.bf16.mxu0 0
    %2548 = vmatpush2.bf16.msra.mxu0 0
    %2549 = vmatprep.mubr.bf16.mxu0 0
    %2550 = vmatmul.mubr.bf16.gmra.mxu0 %v2516
    %v2551 = vpop.f32.mrf.mxu0
    %v2552 = vadd.f32 %v1453, %v2551
    %v2553 = vpop.f32.mrf.mxu0
    %v2554 = vadd.f32 %v1457, %v2553
    %v2555 = vpop.f32.mrf.mxu0
    %v2556 = vadd.f32 %v1453, %v2555
    %v2557 = vpop.f32.mrf.mxu0
    %v2558 = vadd.f32 %v1457, %v2557
    %2559 = vdwg.mxu0
    %2560 = vmatprep.subr.bf16.mxu0 0
    %2561 = vmatpush1.bf16.msra.mxu0 %v1568
    %2562 = vmatprep.subr.bf16.mxu0 0
    %2563 = vmatpush1.bf16.msra.mxu0 %v1565
    %2564 = vmatprep.subr.bf16.mxu0 0
    %2565 = vmatpush1.bf16.msra.mxu0 %v1562
    %2566 = vmatprep.subr.bf16.mxu0 0
    %2567 = vmatpush1.bf16.msra.mxu0 %v1559
    %2568 = vmatprep.subr.bf16.mxu0 0
    %2569 = vmatpush1.bf16.msra.mxu0 %v1556
    %2570 = vmatprep.subr.bf16.mxu0 0
    %2571 = vmatpush1.bf16.msra.mxu0 %v1553
    %2572 = vmatprep.subr.bf16.mxu0 0
    %2573 = vmatpush1.bf16.msra.mxu0 %v1550
    %2574 = vmatprep.subr.bf16.mxu0 0
    %2575 = vmatpush1.bf16.msra.mxu0 %v1547
    %2576 = vmatprep.subr.bf16.mxu0 0
    %2577 = vmatpush2.bf16.msra.mxu0 0
    %2578 = vmatprep.subr.bf16.mxu0 0
    %2579 = vmatpush2.bf16.msra.mxu0 0
    %2580 = vmatprep.subr.bf16.mxu0 0
    %2581 = vmatpush2.bf16.msra.mxu0 0
    %2582 = vmatprep.subr.bf16.mxu0 0
    %2583 = vmatpush2.bf16.msra.mxu0 0
    %2584 = vmatprep.subr.bf16.mxu0 0
    %2585 = vmatpush2.bf16.msra.mxu0 0
    %2586 = vmatprep.subr.bf16.mxu0 0
    %2587 = vmatpush2.bf16.msra.mxu0 0
    %2588 = vmatprep.subr.bf16.mxu0 0
    %2589 = vmatpush2.bf16.msra.mxu0 0
    %2590 = vmatprep.subr.bf16.mxu0 0
    %2591 = vmatpush2.bf16.msra.mxu0 0
    %2592 = vmatprep.mubr.bf16.mxu0 0
    %2593 = vmatmul.mubr.bf16.gmra.mxu0 %v2516
    %v2594 = vpop.f32.mrf.mxu0
    %v2595 = vadd.f32 %v1461, %v2594
    %v2596 = vpop.f32.mrf.mxu0
    %v2597 = vpop.f32.mrf.mxu0
    %v2598 = vadd.f32 %v1461, %v2597
    %v2599 = vpop.f32.mrf.mxu0
    %2600 = vdwg.mxu0
    %v2601 = vadd.f32 %v2412, %v2467
    %v2602 = vadd.f32 %v2415, %v2471
    %v2603 = vxor.u32 %v2601, 2147483648
    %v2604 = vxor.u32 %v2602, 2147483648
    %v2605 = vmul.f32 %v2603, 1.442695
    %v2606 = vpow.pop %v2605
    %v2607 = vmul.f32 %v2604, 1.442695
    %v2608 = vpow.pop %v2607
    %v2609 = vadd.f32 %v2606, 1.0
    %v2610 = vadd.f32 %v2608, 1.0
    %v2611 = vrcp.pop %v2609
    %v2612 = vmul.f32 1.0, %v2611
    %v2613 = vrcp.pop %v2610
    %v2614 = vmul.f32 1.0, %v2613
    %v2615 = vadd.f32 %v2413, %v2469
    %v2616 = vadd.f32 %v2416, %v2473
    %v2617 = vxor.u32 %v2615, 2147483648
    %v2618 = vxor.u32 %v2616, 2147483648
    %v2619 = vmul.f32 %v2617, 1.442695
    %v2620 = vpow.pop %v2619
    %v2621 = vmul.f32 %v2618, 1.442695
    %v2622 = vpow.pop %v2621
    %v2623 = vadd.f32 %v2620, 1.0
    %v2624 = vadd.f32 %v2622, 1.0
    %v2625 = vrcp.pop %v2623
    %v2626 = vmul.f32 1.0, %v2625
    %v2627 = vrcp.pop %v2624
    %v2628 = vmul.f32 1.0, %v2627
    %v2629 = vmul.f32 %v2612, %v2510
    %v2630 = vmul.f32 %v2614, %v2513
    %v2631 = vadd.f32 %v2414, %v2629
    %v2632 = vadd.f32 %v2417, %v2630
    %v2633 = vtanh.pop %v2631
    %v2634 = vtanh.pop %v2632
    %v2635 = vsub.f32 1.0, %v2626
    %v2636 = vsub.f32 1.0, %v2628
    %v2637 = vmul.f32 %v2635, %v2633
    %v2638 = vmul.f32 %v2636, %v2634
    %v2639 = vmul.f32 %v2626, %v2389
    %v2640 = vmul.f32 %v2628, %v2390
    %v2641 = vadd.f32 %v2637, %v2639
    %v2642 = vadd.f32 %v2638, %v2640
    %v2643 = vadd.f32 %v2425, %v2552
    %v2644 = vadd.f32 %v2428, %v2556
    %v2645 = vxor.u32 %v2643, 2147483648
    %v2646 = vxor.u32 %v2644, 2147483648
    %v2647 = vmul.f32 %v2645, 1.442695
    %v2648 = vpow.pop %v2647
    %v2649 = vmul.f32 %v2646, 1.442695
    %v2650 = vpow.pop %v2649
    %v2651 = vadd.f32 %v2648, 1.0
    %v2652 = vadd.f32 %v2650, 1.0
    %v2653 = vrcp.pop %v2651
    %v2654 = vmul.f32 1.0, %v2653
    %v2655 = vrcp.pop %v2652
    %v2656 = vmul.f32 1.0, %v2655
    %v2657 = vadd.f32 %v2426, %v2554
    %v2658 = vadd.f32 %v2429, %v2558
    %v2659 = vxor.u32 %v2657, 2147483648
    %v2660 = vxor.u32 %v2658, 2147483648
    %v2661 = vmul.f32 %v2659, 1.442695
    %v2662 = vpow.pop %v2661
    %v2663 = vmul.f32 %v2660, 1.442695
    %v2664 = vpow.pop %v2663
    %v2665 = vadd.f32 %v2662, 1.0
    %v2666 = vadd.f32 %v2664, 1.0
    %v2667 = vrcp.pop %v2665
    %v2668 = vmul.f32 1.0, %v2667
    %v2669 = vrcp.pop %v2666
    %v2670 = vmul.f32 1.0, %v2669
    %v2671 = vmul.f32 %v2654, %v2595
    %v2672 = vmul.f32 %v2656, %v2598
    %v2673 = vadd.f32 %v2427, %v2671
    %v2674 = vadd.f32 %v2430, %v2672
    %v2675 = vtanh.pop %v2673
    %v2676 = vtanh.pop %v2674
    %v2677 = vsub.f32 1.0, %v2668
    %v2678 = vsub.f32 1.0, %v2670
    %v2679 = vmul.f32 %v2677, %v2675
    %v2680 = vmul.f32 %v2678, %v2676
    %v2681 = vmul.f32 %v2668, %v2403
    %v2682 = vmul.f32 %v2670, %v2404
    %v2683 = vadd.f32 %v2679, %v2681
    %v2684 = vadd.f32 %v2680, %v2682
    %vm2685 = vcmp.gt.s32.totalorder %v1125, 3
    %vm2686 = vcmp.gt.s32.totalorder %v1126, 3
    %v2687 = vsel %vm2685, 1, 0
    %v2688 = vsel %vm2686, 1, 0
    %2689 = vset.pattern.permute.xlu0 0
    %2690 = vperm.xlu0 %2689, %v2687
    %v2691 = vpop.permute.xlu0 %2690
    %2692 = vset.pattern.permute.xlu0 0
    %2693 = vperm.xlu0 %2692, %v2688
    %v2694 = vpop.permute.xlu0 %2693
    %vm2695 = vcmp.eq.s32.totalorder %v2691, 1
    %vm2696 = vcmp.eq.s32.totalorder %v2694, 1
    %v2697 = vsel %vm2695, %v2641, %v2389
    %v2698 = vsel %vm2696, %v2642, %v2390
    %vm2699 = vcmp.gt.s32.totalorder %v1125, 4
    %vm2700 = vcmp.gt.s32.totalorder %v1126, 4
    %v2701 = vsel %vm2699, 1, 0
    %v2702 = vsel %vm2700, 1, 0
    %2703 = vset.pattern.permute.xlu0 0
    %2704 = vperm.xlu0 %2703, %v2701
    %v2705 = vpop.permute.xlu0 %2704
    %2706 = vset.pattern.permute.xlu0 0
    %2707 = vperm.xlu0 %2706, %v2702
    %v2708 = vpop.permute.xlu0 %2707
    %vm2709 = vcmp.eq.s32.totalorder %v2705, 1
    %vm2710 = vcmp.eq.s32.totalorder %v2708, 1
    %v2711 = vsel %vm2709, %v2683, %v2403
    %v2712 = vsel %vm2710, %v2684, %v2404
    %v2713 = vld [vmem:[%s2420] sm:$0xff]
    %v2714 = vld [vmem:[%s2420 + $0x8] sm:$0xf]
    %v2715 = vld [vmem:[%s2420 + $0x18] sm:$0xff]
    %v2716 = vld [vmem:[%s2420 + $0x20] sm:$0xf]
    %v2717 = vunpack.c.l.bf16 %v2713
    %v2718 = vunpack.c.h.bf16 %v2713
    %v2719 = vunpack.c.l.bf16 %v2714
    %v2720 = vunpack.c.l.bf16 %v2715
    %v2721 = vunpack.c.h.bf16 %v2715
    %v2722 = vunpack.c.l.bf16 %v2716
    %v2723 = vld [vmem:[%s2407 + $0xc] sm:$0xff]
    %v2724 = vld [vmem:[%s2407 + $0x14] sm:$0xf]
    %v2725 = vld [vmem:[%s2407 + $0x24] sm:$0xff]
    %v2726 = vld [vmem:[%s2407 + $0x2c] sm:$0xf]
    %v2727 = vunpack.c.l.bf16 %v2723
    %v2728 = vunpack.c.h.bf16 %v2723
    %v2729 = vunpack.c.l.bf16 %v2724
    %v2730 = vunpack.c.l.bf16 %v2725
    %v2731 = vunpack.c.h.bf16 %v2725
    %v2732 = vunpack.c.l.bf16 %v2726
    %v2733 = vpack.c.bf16 %v2698, %v2697
    %2734 = vmatprep.subr.bf16.mxu0 %v1339
    %2735 = vmatpush1.bf16.msra.mxu0 %v1338
    %2736 = vmatprep.subr.bf16.mxu0 %v1336
    %2737 = vmatpush1.bf16.msra.mxu0 %v1335
    %2738 = vmatprep.subr.bf16.mxu0 %v1333
    %2739 = vmatpush1.bf16.msra.mxu0 %v1332
    %2740 = vmatprep.subr.bf16.mxu0 %v1330
    %2741 = vmatpush1.bf16.msra.mxu0 %v1329
    %2742 = vmatprep.subr.bf16.mxu0 %v1327
    %2743 = vmatpush1.bf16.msra.mxu0 %v1326
    %2744 = vmatprep.subr.bf16.mxu0 %v1324
    %2745 = vmatpush1.bf16.msra.mxu0 %v1323
    %2746 = vmatprep.subr.bf16.mxu0 %v1321
    %2747 = vmatpush1.bf16.msra.mxu0 %v1320
    %2748 = vmatprep.subr.bf16.mxu0 %v1318
    %2749 = vmatpush1.bf16.msra.mxu0 %v1317
    %2750 = vmatprep.subr.bf16.mxu0 0
    %2751 = vmatpush2.bf16.msra.mxu0 0
    %2752 = vmatprep.subr.bf16.mxu0 0
    %2753 = vmatpush2.bf16.msra.mxu0 0
    %2754 = vmatprep.subr.bf16.mxu0 0
    %2755 = vmatpush2.bf16.msra.mxu0 0
    %2756 = vmatprep.subr.bf16.mxu0 0
    %2757 = vmatpush2.bf16.msra.mxu0 0
    %2758 = vmatprep.subr.bf16.mxu0 0
    %2759 = vmatpush2.bf16.msra.mxu0 0
    %2760 = vmatprep.subr.bf16.mxu0 0
    %2761 = vmatpush2.bf16.msra.mxu0 0
    %2762 = vmatprep.subr.bf16.mxu0 0
    %2763 = vmatpush2.bf16.msra.mxu0 0
    %2764 = vmatprep.subr.bf16.mxu0 0
    %2765 = vmatpush2.bf16.msra.mxu0 0
    %2766 = vmatprep.mubr.bf16.mxu0 0
    %2767 = vmatmul.mubr.bf16.gmra.mxu0 %v2733
    %v2768 = vpop.f32.mrf.mxu0
    %v2769 = vadd.f32 %v1225, %v2768
    %v2770 = vpop.f32.mrf.mxu0
    %v2771 = vadd.f32 %v1229, %v2770
    %v2772 = vpop.f32.mrf.mxu0
    %v2773 = vadd.f32 %v1225, %v2772
    %v2774 = vpop.f32.mrf.mxu0
    %v2775 = vadd.f32 %v1229, %v2774
    %2776 = vdwg.mxu0
    %2777 = vmatprep.subr.bf16.mxu0 0
    %2778 = vmatpush1.bf16.msra.mxu0 %v1340
    %2779 = vmatprep.subr.bf16.mxu0 0
    %2780 = vmatpush1.bf16.msra.mxu0 %v1337
    %2781 = vmatprep.subr.bf16.mxu0 0
    %2782 = vmatpush1.bf16.msra.mxu0 %v1334
    %2783 = vmatprep.subr.bf16.mxu0 0
    %2784 = vmatpush1.bf16.msra.mxu0 %v1331
    %2785 = vmatprep.subr.bf16.mxu0 0
    %2786 = vmatpush1.bf16.msra.mxu0 %v1328
    %2787 = vmatprep.subr.bf16.mxu0 0
    %2788 = vmatpush1.bf16.msra.mxu0 %v1325
    %2789 = vmatprep.subr.bf16.mxu0 0
    %2790 = vmatpush1.bf16.msra.mxu0 %v1322
    %2791 = vmatprep.subr.bf16.mxu0 0
    %2792 = vmatpush1.bf16.msra.mxu0 %v1319
    %2793 = vmatprep.subr.bf16.mxu0 0
    %2794 = vmatpush2.bf16.msra.mxu0 0
    %2795 = vmatprep.subr.bf16.mxu0 0
    %2796 = vmatpush2.bf16.msra.mxu0 0
    %2797 = vmatprep.subr.bf16.mxu0 0
    %2798 = vmatpush2.bf16.msra.mxu0 0
    %2799 = vmatprep.subr.bf16.mxu0 0
    %2800 = vmatpush2.bf16.msra.mxu0 0
    %2801 = vmatprep.subr.bf16.mxu0 0
    %2802 = vmatpush2.bf16.msra.mxu0 0
    %2803 = vmatprep.subr.bf16.mxu0 0
    %2804 = vmatpush2.bf16.msra.mxu0 0
    %2805 = vmatprep.subr.bf16.mxu0 0
    %2806 = vmatpush2.bf16.msra.mxu0 0
    %2807 = vmatprep.subr.bf16.mxu0 0
    %2808 = vmatpush2.bf16.msra.mxu0 0
    %2809 = vmatprep.mubr.bf16.mxu0 0
    %2810 = vmatmul.mubr.bf16.gmra.mxu0 %v2733
    %v2811 = vpop.f32.mrf.mxu0
    %v2812 = vadd.f32 %v1233, %v2811
    %v2813 = vpop.f32.mrf.mxu0
    %v2814 = vpop.f32.mrf.mxu0
    %v2815 = vadd.f32 %v1233, %v2814
    %v2816 = vpop.f32.mrf.mxu0
    %2817 = vdwg.mxu0
    %v2818 = vpack.c.bf16 %v2712, %v2711
    %2819 = vmatprep.subr.bf16.mxu0 %v1567
    %2820 = vmatpush1.bf16.msra.mxu0 %v1566
    %2821 = vmatprep.subr.bf16.mxu0 %v1564
    %2822 = vmatpush1.bf16.msra.mxu0 %v1563
    %2823 = vmatprep.subr.bf16.mxu0 %v1561
    %2824 = vmatpush1.bf16.msra.mxu0 %v1560
    %2825 = vmatprep.subr.bf16.mxu0 %v1558
    %2826 = vmatpush1.bf16.msra.mxu0 %v1557
    %2827 = vmatprep.subr.bf16.mxu0 %v1555
    %2828 = vmatpush1.bf16.msra.mxu0 %v1554
    %2829 = vmatprep.subr.bf16.mxu0 %v1552
    %2830 = vmatpush1.bf16.msra.mxu0 %v1551
    %2831 = vmatprep.subr.bf16.mxu0 %v1549
    %2832 = vmatpush1.bf16.msra.mxu0 %v1548
    %2833 = vmatprep.subr.bf16.mxu0 %v1546
    %2834 = vmatpush1.bf16.msra.mxu0 %v1545
    %2835 = vmatprep.subr.bf16.mxu0 0
    %2836 = vmatpush2.bf16.msra.mxu0 0
    %2837 = vmatprep.subr.bf16.mxu0 0
    %2838 = vmatpush2.bf16.msra.mxu0 0
    %2839 = vmatprep.subr.bf16.mxu0 0
    %2840 = vmatpush2.bf16.msra.mxu0 0
    %2841 = vmatprep.subr.bf16.mxu0 0
    %2842 = vmatpush2.bf16.msra.mxu0 0
    %2843 = vmatprep.subr.bf16.mxu0 0
    %2844 = vmatpush2.bf16.msra.mxu0 0
    %2845 = vmatprep.subr.bf16.mxu0 0
    %2846 = vmatpush2.bf16.msra.mxu0 0
    %2847 = vmatprep.subr.bf16.mxu0 0
    %2848 = vmatpush2.bf16.msra.mxu0 0
    %2849 = vmatprep.subr.bf16.mxu0 0
    %2850 = vmatpush2.bf16.msra.mxu0 0
    %2851 = vmatprep.mubr.bf16.mxu0 0
    %2852 = vmatmul.mubr.bf16.gmra.mxu0 %v2818
    %v2853 = vpop.f32.mrf.mxu0
    %v2854 = vadd.f32 %v1453, %v2853
    %v2855 = vpop.f32.mrf.mxu0
    %v2856 = vadd.f32 %v1457, %v2855
    %v2857 = vpop.f32.mrf.mxu0
    %v2858 = vadd.f32 %v1453, %v2857
    %v2859 = vpop.f32.mrf.mxu0
    %v2860 = vadd.f32 %v1457, %v2859
    %2861 = vdwg.mxu0
    %2862 = vmatprep.subr.bf16.mxu0 0
    %2863 = vmatpush1.bf16.msra.mxu0 %v1568
    %2864 = vmatprep.subr.bf16.mxu0 0
    %2865 = vmatpush1.bf16.msra.mxu0 %v1565
    %2866 = vmatprep.subr.bf16.mxu0 0
    %2867 = vmatpush1.bf16.msra.mxu0 %v1562
    %2868 = vmatprep.subr.bf16.mxu0 0
    %2869 = vmatpush1.bf16.msra.mxu0 %v1559
    %2870 = vmatprep.subr.bf16.mxu0 0
    %2871 = vmatpush1.bf16.msra.mxu0 %v1556
    %2872 = vmatprep.subr.bf16.mxu0 0
    %2873 = vmatpush1.bf16.msra.mxu0 %v1553
    %2874 = vmatprep.subr.bf16.mxu0 0
    %2875 = vmatpush1.bf16.msra.mxu0 %v1550
    %2876 = vmatprep.subr.bf16.mxu0 0
    %2877 = vmatpush1.bf16.msra.mxu0 %v1547
    %2878 = vmatprep.subr.bf16.mxu0 0
    %2879 = vmatpush2.bf16.msra.mxu0 0
    %2880 = vmatprep.subr.bf16.mxu0 0
    %2881 = vmatpush2.bf16.msra.mxu0 0
    %2882 = vmatprep.subr.bf16.mxu0 0
    %2883 = vmatpush2.bf16.msra.mxu0 0
    %2884 = vmatprep.subr.bf16.mxu0 0
    %2885 = vmatpush2.bf16.msra.mxu0 0
    %2886 = vmatprep.subr.bf16.mxu0 0
    %2887 = vmatpush2.bf16.msra.mxu0 0
    %2888 = vmatprep.subr.bf16.mxu0 0
    %2889 = vmatpush2.bf16.msra.mxu0 0
    %2890 = vmatprep.subr.bf16.mxu0 0
    %2891 = vmatpush2.bf16.msra.mxu0 0
    %2892 = vmatprep.subr.bf16.mxu0 0
    %2893 = vmatpush2.bf16.msra.mxu0 0
    %2894 = vmatprep.mubr.bf16.mxu0 0
    %2895 = vmatmul.mubr.bf16.gmra.mxu0 %v2818
    %v2896 = vpop.f32.mrf.mxu0
    %v2897 = vadd.f32 %v1461, %v2896
    %v2898 = vpop.f32.mrf.mxu0
    %v2899 = vpop.f32.mrf.mxu0
    %v2900 = vadd.f32 %v1461, %v2899
    %v2901 = vpop.f32.mrf.mxu0
    %2902 = vdwg.mxu0
    %v2903 = vadd.f32 %v2717, %v2769
    %v2904 = vadd.f32 %v2720, %v2773
    %v2905 = vxor.u32 %v2903, 2147483648
    %v2906 = vxor.u32 %v2904, 2147483648
    %v2907 = vmul.f32 %v2905, 1.442695
    %v2908 = vpow.pop %v2907
    %v2909 = vmul.f32 %v2906, 1.442695
    %v2910 = vpow.pop %v2909
    %v2911 = vadd.f32 %v2908, 1.0
    %v2912 = vadd.f32 %v2910, 1.0
    %v2913 = vrcp.pop %v2911
    %v2914 = vmul.f32 1.0, %v2913
    %v2915 = vrcp.pop %v2912
    %v2916 = vmul.f32 1.0, %v2915
    %v2917 = vadd.f32 %v2718, %v2771
    %v2918 = vadd.f32 %v2721, %v2775
    %v2919 = vxor.u32 %v2917, 2147483648
    %v2920 = vxor.u32 %v2918, 2147483648
    %v2921 = vmul.f32 %v2919, 1.442695
    %v2922 = vpow.pop %v2921
    %v2923 = vmul.f32 %v2920, 1.442695
    %v2924 = vpow.pop %v2923
    %v2925 = vadd.f32 %v2922, 1.0
    %v2926 = vadd.f32 %v2924, 1.0
    %v2927 = vrcp.pop %v2925
    %v2928 = vmul.f32 1.0, %v2927
    %v2929 = vrcp.pop %v2926
    %v2930 = vmul.f32 1.0, %v2929
    %v2931 = vmul.f32 %v2914, %v2812
    %v2932 = vmul.f32 %v2916, %v2815
    %v2933 = vadd.f32 %v2719, %v2931
    %v2934 = vadd.f32 %v2722, %v2932
    %v2935 = vtanh.pop %v2933
    %v2936 = vtanh.pop %v2934
    %v2937 = vsub.f32 1.0, %v2928
    %v2938 = vsub.f32 1.0, %v2930
    %v2939 = vmul.f32 %v2937, %v2935
    %v2940 = vmul.f32 %v2938, %v2936
    %v2941 = vmul.f32 %v2928, %v2697
    %v2942 = vmul.f32 %v2930, %v2698
    %v2943 = vadd.f32 %v2939, %v2941
    %v2944 = vadd.f32 %v2940, %v2942
    %v2945 = vadd.f32 %v2727, %v2854
    %v2946 = vadd.f32 %v2730, %v2858
    %v2947 = vxor.u32 %v2945, 2147483648
    %v2948 = vxor.u32 %v2946, 2147483648
    %v2949 = vmul.f32 %v2947, 1.442695
    %v2950 = vpow.pop %v2949
    %v2951 = vmul.f32 %v2948, 1.442695
    %v2952 = vpow.pop %v2951
    %v2953 = vadd.f32 %v2950, 1.0
    %v2954 = vadd.f32 %v2952, 1.0
    %v2955 = vrcp.pop %v2953
    %v2956 = vmul.f32 1.0, %v2955
    %v2957 = vrcp.pop %v2954
    %v2958 = vmul.f32 1.0, %v2957
    %v2959 = vadd.f32 %v2728, %v2856
    %v2960 = vadd.f32 %v2731, %v2860
    %v2961 = vxor.u32 %v2959, 2147483648
    %v2962 = vxor.u32 %v2960, 2147483648
    %v2963 = vmul.f32 %v2961, 1.442695
    %v2964 = vpow.pop %v2963
    %v2965 = vmul.f32 %v2962, 1.442695
    %v2966 = vpow.pop %v2965
    %v2967 = vadd.f32 %v2964, 1.0
    %v2968 = vadd.f32 %v2966, 1.0
    %v2969 = vrcp.pop %v2967
    %v2970 = vmul.f32 1.0, %v2969
    %v2971 = vrcp.pop %v2968
    %v2972 = vmul.f32 1.0, %v2971
    %v2973 = vmul.f32 %v2956, %v2897
    %v2974 = vmul.f32 %v2958, %v2900
    %v2975 = vadd.f32 %v2729, %v2973
    %v2976 = vadd.f32 %v2732, %v2974
    %v2977 = vtanh.pop %v2975
    %v2978 = vtanh.pop %v2976
    %v2979 = vsub.f32 1.0, %v2970
    %v2980 = vsub.f32 1.0, %v2972
    %v2981 = vmul.f32 %v2979, %v2977
    %v2982 = vmul.f32 %v2980, %v2978
    %v2983 = vmul.f32 %v2970, %v2711
    %v2984 = vmul.f32 %v2972, %v2712
    %v2985 = vadd.f32 %v2981, %v2983
    %v2986 = vadd.f32 %v2982, %v2984
    %v2987 = vsel %vm2709, %v2943, %v2697
    %v2988 = vsel %vm2710, %v2944, %v2698
    %v2989 = vsel %vm2695, %v2985, %v2711
    %v2990 = vsel %vm2696, %v2986, %v2712
    %v2991 = vld [vmem:[%s2112] sm:$0xff]
    %v2992 = vld [vmem:[%s2112 + $0x8] sm:$0xf]
    %v2993 = vld [vmem:[%s2112 + $0x18] sm:$0xff]
    %v2994 = vld [vmem:[%s2112 + $0x20] sm:$0xf]
    %v2995 = vunpack.c.l.bf16 %v2991
    %v2996 = vunpack.c.h.bf16 %v2991
    %v2997 = vunpack.c.l.bf16 %v2992
    %v2998 = vunpack.c.l.bf16 %v2993
    %v2999 = vunpack.c.h.bf16 %v2993
    %v3000 = vunpack.c.l.bf16 %v2994
    %v3001 = vld [vmem:[%s2099 + $0xc] sm:$0xff]
    %v3002 = vld [vmem:[%s2099 + $0x14] sm:$0xf]
    %v3003 = vld [vmem:[%s2099 + $0x24] sm:$0xff]
    %v3004 = vld [vmem:[%s2099 + $0x2c] sm:$0xf]
    %v3005 = vunpack.c.l.bf16 %v3001
    %v3006 = vunpack.c.h.bf16 %v3001
    %v3007 = vunpack.c.l.bf16 %v3002
    %v3008 = vunpack.c.l.bf16 %v3003
    %v3009 = vunpack.c.h.bf16 %v3003
    %v3010 = vunpack.c.l.bf16 %v3004
    %v3011 = vpack.c.bf16 %v2988, %v2987
    %3012 = vmatprep.subr.bf16.mxu0 %v1339
    %3013 = vmatpush1.bf16.msra.mxu0 %v1338
    %3014 = vmatprep.subr.bf16.mxu0 %v1336
    %3015 = vmatpush1.bf16.msra.mxu0 %v1335
    %3016 = vmatprep.subr.bf16.mxu0 %v1333
    %3017 = vmatpush1.bf16.msra.mxu0 %v1332
    %3018 = vmatprep.subr.bf16.mxu0 %v1330
    %3019 = vmatpush1.bf16.msra.mxu0 %v1329
    %3020 = vmatprep.subr.bf16.mxu0 %v1327
    %3021 = vmatpush1.bf16.msra.mxu0 %v1326
    %3022 = vmatprep.subr.bf16.mxu0 %v1324
    %3023 = vmatpush1.bf16.msra.mxu0 %v1323
    %3024 = vmatprep.subr.bf16.mxu0 %v1321
    %3025 = vmatpush1.bf16.msra.mxu0 %v1320
    %3026 = vmatprep.subr.bf16.mxu0 %v1318
    %3027 = vmatpush1.bf16.msra.mxu0 %v1317
    %3028 = vmatprep.subr.bf16.mxu0 0
    %3029 = vmatpush2.bf16.msra.mxu0 0
    %3030 = vmatprep.subr.bf16.mxu0 0
    %3031 = vmatpush2.bf16.msra.mxu0 0
    %3032 = vmatprep.subr.bf16.mxu0 0
    %3033 = vmatpush2.bf16.msra.mxu0 0
    %3034 = vmatprep.subr.bf16.mxu0 0
    %3035 = vmatpush2.bf16.msra.mxu0 0
    %3036 = vmatprep.subr.bf16.mxu0 0
    %3037 = vmatpush2.bf16.msra.mxu0 0
    %3038 = vmatprep.subr.bf16.mxu0 0
    %3039 = vmatpush2.bf16.msra.mxu0 0
    %3040 = vmatprep.subr.bf16.mxu0 0
    %3041 = vmatpush2.bf16.msra.mxu0 0
    %3042 = vmatprep.subr.bf16.mxu0 0
    %3043 = vmatpush2.bf16.msra.mxu0 0
    %3044 = vmatprep.mubr.bf16.mxu0 0
    %3045 = vmatmul.mubr.bf16.gmra.mxu0 %v3011
    %v3046 = vpop.f32.mrf.mxu0
    %v3047 = vadd.f32 %v1225, %v3046
    %v3048 = vpop.f32.mrf.mxu0
    %v3049 = vadd.f32 %v1229, %v3048
    %v3050 = vpop.f32.mrf.mxu0
    %v3051 = vadd.f32 %v1225, %v3050
    %v3052 = vpop.f32.mrf.mxu0
    %v3053 = vadd.f32 %v1229, %v3052
    %3054 = vdwg.mxu0
    %3055 = vmatprep.subr.bf16.mxu0 0
    %3056 = vmatpush1.bf16.msra.mxu0 %v1340
    %3057 = vmatprep.subr.bf16.mxu0 0
    %3058 = vmatpush1.bf16.msra.mxu0 %v1337
    %3059 = vmatprep.subr.bf16.mxu0 0
    %3060 = vmatpush1.bf16.msra.mxu0 %v1334
    %3061 = vmatprep.subr.bf16.mxu0 0
    %3062 = vmatpush1.bf16.msra.mxu0 %v1331
    %3063 = vmatprep.subr.bf16.mxu0 0
    %3064 = vmatpush1.bf16.msra.mxu0 %v1328
    %3065 = vmatprep.subr.bf16.mxu0 0
    %3066 = vmatpush1.bf16.msra.mxu0 %v1325
    %3067 = vmatprep.subr.bf16.mxu0 0
    %3068 = vmatpush1.bf16.msra.mxu0 %v1322
    %3069 = vmatprep.subr.bf16.mxu0 0
    %3070 = vmatpush1.bf16.msra.mxu0 %v1319
    %3071 = vmatprep.subr.bf16.mxu0 0
    %3072 = vmatpush2.bf16.msra.mxu0 0
    %3073 = vmatprep.subr.bf16.mxu0 0
    %3074 = vmatpush2.bf16.msra.mxu0 0
    %3075 = vmatprep.subr.bf16.mxu0 0
    %3076 = vmatpush2.bf16.msra.mxu0 0
    %3077 = vmatprep.subr.bf16.mxu0 0
    %3078 = vmatpush2.bf16.msra.mxu0 0
    %3079 = vmatprep.subr.bf16.mxu0 0
    %3080 = vmatpush2.bf16.msra.mxu0 0
    %3081 = vmatprep.subr.bf16.mxu0 0
    %3082 = vmatpush2.bf16.msra.mxu0 0
    %3083 = vmatprep.subr.bf16.mxu0 0
    %3084 = vmatpush2.bf16.msra.mxu0 0
    %3085 = vmatprep.subr.bf16.mxu0 0
    %3086 = vmatpush2.bf16.msra.mxu0 0
    %3087 = vmatprep.mubr.bf16.mxu0 0
    %3088 = vmatmul.mubr.bf16.gmra.mxu0 %v3011
    %v3089 = vpop.f32.mrf.mxu0
    %v3090 = vadd.f32 %v1233, %v3089
    %v3091 = vpop.f32.mrf.mxu0
    %v3092 = vpop.f32.mrf.mxu0
    %v3093 = vadd.f32 %v1233, %v3092
    %v3094 = vpop.f32.mrf.mxu0
    %3095 = vdwg.mxu0
    %v3096 = vpack.c.bf16 %v2990, %v2989
    %3097 = vmatprep.subr.bf16.mxu0 %v1567
    %3098 = vmatpush1.bf16.msra.mxu0 %v1566
    %3099 = vmatprep.subr.bf16.mxu0 %v1564
    %3100 = vmatpush1.bf16.msra.mxu0 %v1563
    %3101 = vmatprep.subr.bf16.mxu0 %v1561
    %3102 = vmatpush1.bf16.msra.mxu0 %v1560
    %3103 = vmatprep.subr.bf16.mxu0 %v1558
    %3104 = vmatpush1.bf16.msra.mxu0 %v1557
    %3105 = vmatprep.subr.bf16.mxu0 %v1555
    %3106 = vmatpush1.bf16.msra.mxu0 %v1554
    %3107 = vmatprep.subr.bf16.mxu0 %v1552
    %3108 = vmatpush1.bf16.msra.mxu0 %v1551
    %3109 = vmatprep.subr.bf16.mxu0 %v1549
    %3110 = vmatpush1.bf16.msra.mxu0 %v1548
    %3111 = vmatprep.subr.bf16.mxu0 %v1546
    %3112 = vmatpush1.bf16.msra.mxu0 %v1545
    %3113 = vmatprep.subr.bf16.mxu0 0
    %3114 = vmatpush2.bf16.msra.mxu0 0
    %3115 = vmatprep.subr.bf16.mxu0 0
    %3116 = vmatpush2.bf16.msra.mxu0 0
    %3117 = vmatprep.subr.bf16.mxu0 0
    %3118 = vmatpush2.bf16.msra.mxu0 0
    %3119 = vmatprep.subr.bf16.mxu0 0
    %3120 = vmatpush2.bf16.msra.mxu0 0
    %3121 = vmatprep.subr.bf16.mxu0 0
    %3122 = vmatpush2.bf16.msra.mxu0 0
    %3123 = vmatprep.subr.bf16.mxu0 0
    %3124 = vmatpush2.bf16.msra.mxu0 0
    %3125 = vmatprep.subr.bf16.mxu0 0
    %3126 = vmatpush2.bf16.msra.mxu0 0
    %3127 = vmatprep.subr.bf16.mxu0 0
    %3128 = vmatpush2.bf16.msra.mxu0 0
    %3129 = vmatprep.mubr.bf16.mxu0 0
    %3130 = vmatmul.mubr.bf16.gmra.mxu0 %v3096
    %v3131 = vpop.f32.mrf.mxu0
    %v3132 = vadd.f32 %v1453, %v3131
    %v3133 = vpop.f32.mrf.mxu0
    %v3134 = vadd.f32 %v1457, %v3133
    %v3135 = vpop.f32.mrf.mxu0
    %v3136 = vadd.f32 %v1453, %v3135
    %v3137 = vpop.f32.mrf.mxu0
    %v3138 = vadd.f32 %v1457, %v3137
    %3139 = vdwg.mxu0
    %3140 = vmatprep.subr.bf16.mxu0 0
    %3141 = vmatpush1.bf16.msra.mxu0 %v1568
    %3142 = vmatprep.subr.bf16.mxu0 0
    %3143 = vmatpush1.bf16.msra.mxu0 %v1565
    %3144 = vmatprep.subr.bf16.mxu0 0
    %3145 = vmatpush1.bf16.msra.mxu0 %v1562
    %3146 = vmatprep.subr.bf16.mxu0 0
    %3147 = vmatpush1.bf16.msra.mxu0 %v1559
    %3148 = vmatprep.subr.bf16.mxu0 0
    %3149 = vmatpush1.bf16.msra.mxu0 %v1556
    %3150 = vmatprep.subr.bf16.mxu0 0
    %3151 = vmatpush1.bf16.msra.mxu0 %v1553
    %3152 = vmatprep.subr.bf16.mxu0 0
    %3153 = vmatpush1.bf16.msra.mxu0 %v1550
    %3154 = vmatprep.subr.bf16.mxu0 0
    %3155 = vmatpush1.bf16.msra.mxu0 %v1547
    %3156 = vmatprep.subr.bf16.mxu0 0
    %3157 = vmatpush2.bf16.msra.mxu0 0
    %3158 = vmatprep.subr.bf16.mxu0 0
    %3159 = vmatpush2.bf16.msra.mxu0 0
    %3160 = vmatprep.subr.bf16.mxu0 0
    %3161 = vmatpush2.bf16.msra.mxu0 0
    %3162 = vmatprep.subr.bf16.mxu0 0
    %3163 = vmatpush2.bf16.msra.mxu0 0
    %3164 = vmatprep.subr.bf16.mxu0 0
    %3165 = vmatpush2.bf16.msra.mxu0 0
    %3166 = vmatprep.subr.bf16.mxu0 0
    %3167 = vmatpush2.bf16.msra.mxu0 0
    %3168 = vmatprep.subr.bf16.mxu0 0
    %3169 = vmatpush2.bf16.msra.mxu0 0
    %3170 = vmatprep.subr.bf16.mxu0 0
    %3171 = vmatpush2.bf16.msra.mxu0 0
    %3172 = vmatprep.mubr.bf16.mxu0 0
    %3173 = vmatmul.mubr.bf16.gmra.mxu0 %v3096
    %v3174 = vpop.f32.mrf.mxu0
    %v3175 = vadd.f32 %v1461, %v3174
    %v3176 = vpop.f32.mrf.mxu0
    %v3177 = vpop.f32.mrf.mxu0
    %v3178 = vadd.f32 %v1461, %v3177
    %v3179 = vpop.f32.mrf.mxu0
    %3180 = vdwg.mxu0
    %v3181 = vadd.f32 %v2995, %v3047
    %v3182 = vadd.f32 %v2998, %v3051
    %v3183 = vxor.u32 %v3181, 2147483648
    %v3184 = vxor.u32 %v3182, 2147483648
    %v3185 = vmul.f32 %v3183, 1.442695
    %v3186 = vpow.pop %v3185
    %v3187 = vmul.f32 %v3184, 1.442695
    %v3188 = vpow.pop %v3187
    %v3189 = vadd.f32 %v3186, 1.0
    %v3190 = vadd.f32 %v3188, 1.0
    %v3191 = vrcp.pop %v3189
    %v3192 = vmul.f32 1.0, %v3191
    %v3193 = vrcp.pop %v3190
    %v3194 = vmul.f32 1.0, %v3193
    %v3195 = vadd.f32 %v2996, %v3049
    %v3196 = vadd.f32 %v2999, %v3053
    %v3197 = vxor.u32 %v3195, 2147483648
    %v3198 = vxor.u32 %v3196, 2147483648
    %v3199 = vmul.f32 %v3197, 1.442695
    %v3200 = vpow.pop %v3199
    %v3201 = vmul.f32 %v3198, 1.442695
    %v3202 = vpow.pop %v3201
    %v3203 = vadd.f32 %v3200, 1.0
    %v3204 = vadd.f32 %v3202, 1.0
    %v3205 = vrcp.pop %v3203
    %v3206 = vmul.f32 1.0, %v3205
    %v3207 = vrcp.pop %v3204
    %v3208 = vmul.f32 1.0, %v3207
    %v3209 = vmul.f32 %v3192, %v3090
    %v3210 = vmul.f32 %v3194, %v3093
    %v3211 = vadd.f32 %v2997, %v3209
    %v3212 = vadd.f32 %v3000, %v3210
    %v3213 = vtanh.pop %v3211
    %v3214 = vtanh.pop %v3212
    %v3215 = vsub.f32 1.0, %v3206
    %v3216 = vsub.f32 1.0, %v3208
    %v3217 = vmul.f32 %v3215, %v3213
    %v3218 = vmul.f32 %v3216, %v3214
    %v3219 = vmul.f32 %v3206, %v2987
    %v3220 = vmul.f32 %v3208, %v2988
    %v3221 = vadd.f32 %v3217, %v3219
    %v3222 = vadd.f32 %v3218, %v3220
    %v3223 = vadd.f32 %v3005, %v3132
    %v3224 = vadd.f32 %v3008, %v3136
    %v3225 = vxor.u32 %v3223, 2147483648
    %v3226 = vxor.u32 %v3224, 2147483648
    %v3227 = vmul.f32 %v3225, 1.442695
    %v3228 = vpow.pop %v3227
    %v3229 = vmul.f32 %v3226, 1.442695
    %v3230 = vpow.pop %v3229
    %v3231 = vadd.f32 %v3228, 1.0
    %v3232 = vadd.f32 %v3230, 1.0
    %v3233 = vrcp.pop %v3231
    %v3234 = vmul.f32 1.0, %v3233
    %v3235 = vrcp.pop %v3232
    %v3236 = vmul.f32 1.0, %v3235
    %v3237 = vadd.f32 %v3006, %v3134
    %v3238 = vadd.f32 %v3009, %v3138
    %v3239 = vxor.u32 %v3237, 2147483648
    %v3240 = vxor.u32 %v3238, 2147483648
    %v3241 = vmul.f32 %v3239, 1.442695
    %v3242 = vpow.pop %v3241
    %v3243 = vmul.f32 %v3240, 1.442695
    %v3244 = vpow.pop %v3243
    %v3245 = vadd.f32 %v3242, 1.0
    %v3246 = vadd.f32 %v3244, 1.0
    %v3247 = vrcp.pop %v3245
    %v3248 = vmul.f32 1.0, %v3247
    %v3249 = vrcp.pop %v3246
    %v3250 = vmul.f32 1.0, %v3249
    %v3251 = vmul.f32 %v3234, %v3175
    %v3252 = vmul.f32 %v3236, %v3178
    %v3253 = vadd.f32 %v3007, %v3251
    %v3254 = vadd.f32 %v3010, %v3252
    %v3255 = vtanh.pop %v3253
    %v3256 = vtanh.pop %v3254
    %v3257 = vsub.f32 1.0, %v3248
    %v3258 = vsub.f32 1.0, %v3250
    %v3259 = vmul.f32 %v3257, %v3255
    %v3260 = vmul.f32 %v3258, %v3256
    %v3261 = vmul.f32 %v3248, %v2989
    %v3262 = vmul.f32 %v3250, %v2990
    %v3263 = vadd.f32 %v3259, %v3261
    %v3264 = vadd.f32 %v3260, %v3262
    %v3265 = vsel %vm2401, %v3221, %v2987
    %v3266 = vsel %vm2402, %v3222, %v2988
    %v3267 = vsel %vm2387, %v3263, %v2989
    %v3268 = vsel %vm2388, %v3264, %v2990
    %v3269 = vld [vmem:[%s1804] sm:$0xff]
    %v3270 = vld [vmem:[%s1804 + $0x8] sm:$0xf]
    %v3271 = vld [vmem:[%s1804 + $0x18] sm:$0xff]
    %v3272 = vld [vmem:[%s1804 + $0x20] sm:$0xf]
    %v3273 = vunpack.c.l.bf16 %v3269
    %v3274 = vunpack.c.h.bf16 %v3269
    %v3275 = vunpack.c.l.bf16 %v3270
    %v3276 = vunpack.c.l.bf16 %v3271
    %v3277 = vunpack.c.h.bf16 %v3271
    %v3278 = vunpack.c.l.bf16 %v3272
    %v3279 = vld [vmem:[%s1791 + $0xc] sm:$0xff]
    %v3280 = vld [vmem:[%s1791 + $0x14] sm:$0xf]
    %v3281 = vld [vmem:[%s1791 + $0x24] sm:$0xff]
    %v3282 = vld [vmem:[%s1791 + $0x2c] sm:$0xf]
    %v3283 = vunpack.c.l.bf16 %v3279
    %v3284 = vunpack.c.h.bf16 %v3279
    %v3285 = vunpack.c.l.bf16 %v3280
    %v3286 = vunpack.c.l.bf16 %v3281
    %v3287 = vunpack.c.h.bf16 %v3281
    %v3288 = vunpack.c.l.bf16 %v3282
    %v3289 = vpack.c.bf16 %v3266, %v3265
    %3290 = vmatprep.subr.bf16.mxu0 %v1339
    %3291 = vmatpush1.bf16.msra.mxu0 %v1338
    %3292 = vmatprep.subr.bf16.mxu0 %v1336
    %3293 = vmatpush1.bf16.msra.mxu0 %v1335
    %3294 = vmatprep.subr.bf16.mxu0 %v1333
    %3295 = vmatpush1.bf16.msra.mxu0 %v1332
    %3296 = vmatprep.subr.bf16.mxu0 %v1330
    %3297 = vmatpush1.bf16.msra.mxu0 %v1329
    %3298 = vmatprep.subr.bf16.mxu0 %v1327
    %3299 = vmatpush1.bf16.msra.mxu0 %v1326
    %3300 = vmatprep.subr.bf16.mxu0 %v1324
    %3301 = vmatpush1.bf16.msra.mxu0 %v1323
    %3302 = vmatprep.subr.bf16.mxu0 %v1321
    %3303 = vmatpush1.bf16.msra.mxu0 %v1320
    %3304 = vmatprep.subr.bf16.mxu0 %v1318
    %3305 = vmatpush1.bf16.msra.mxu0 %v1317
    %3306 = vmatprep.subr.bf16.mxu0 0
    %3307 = vmatpush2.bf16.msra.mxu0 0
    %3308 = vmatprep.subr.bf16.mxu0 0
    %3309 = vmatpush2.bf16.msra.mxu0 0
    %3310 = vmatprep.subr.bf16.mxu0 0
    %3311 = vmatpush2.bf16.msra.mxu0 0
    %3312 = vmatprep.subr.bf16.mxu0 0
    %3313 = vmatpush2.bf16.msra.mxu0 0
    %3314 = vmatprep.subr.bf16.mxu0 0
    %3315 = vmatpush2.bf16.msra.mxu0 0
    %3316 = vmatprep.subr.bf16.mxu0 0
    %3317 = vmatpush2.bf16.msra.mxu0 0
    %3318 = vmatprep.subr.bf16.mxu0 0
    %3319 = vmatpush2.bf16.msra.mxu0 0
    %3320 = vmatprep.subr.bf16.mxu0 0
    %3321 = vmatpush2.bf16.msra.mxu0 0
    %3322 = vmatprep.mubr.bf16.mxu0 0
    %3323 = vmatmul.mubr.bf16.gmra.mxu0 %v3289
    %v3324 = vpop.f32.mrf.mxu0
    %v3325 = vadd.f32 %v1225, %v3324
    %v3326 = vpop.f32.mrf.mxu0
    %v3327 = vadd.f32 %v1229, %v3326
    %v3328 = vpop.f32.mrf.mxu0
    %v3329 = vadd.f32 %v1225, %v3328
    %v3330 = vpop.f32.mrf.mxu0
    %v3331 = vadd.f32 %v1229, %v3330
    %3332 = vdwg.mxu0
    %3333 = vmatprep.subr.bf16.mxu0 0
    %3334 = vmatpush1.bf16.msra.mxu0 %v1340
    %3335 = vmatprep.subr.bf16.mxu0 0
    %3336 = vmatpush1.bf16.msra.mxu0 %v1337
    %3337 = vmatprep.subr.bf16.mxu0 0
    %3338 = vmatpush1.bf16.msra.mxu0 %v1334
    %3339 = vmatprep.subr.bf16.mxu0 0
    %3340 = vmatpush1.bf16.msra.mxu0 %v1331
    %3341 = vmatprep.subr.bf16.mxu0 0
    %3342 = vmatpush1.bf16.msra.mxu0 %v1328
    %3343 = vmatprep.subr.bf16.mxu0 0
    %3344 = vmatpush1.bf16.msra.mxu0 %v1325
    %3345 = vmatprep.subr.bf16.mxu0 0
    %3346 = vmatpush1.bf16.msra.mxu0 %v1322
    %3347 = vmatprep.subr.bf16.mxu0 0
    %3348 = vmatpush1.bf16.msra.mxu0 %v1319
    %3349 = vmatprep.subr.bf16.mxu0 0
    %3350 = vmatpush2.bf16.msra.mxu0 0
    %3351 = vmatprep.subr.bf16.mxu0 0
    %3352 = vmatpush2.bf16.msra.mxu0 0
    %3353 = vmatprep.subr.bf16.mxu0 0
    %3354 = vmatpush2.bf16.msra.mxu0 0
    %3355 = vmatprep.subr.bf16.mxu0 0
    %3356 = vmatpush2.bf16.msra.mxu0 0
    %3357 = vmatprep.subr.bf16.mxu0 0
    %3358 = vmatpush2.bf16.msra.mxu0 0
    %3359 = vmatprep.subr.bf16.mxu0 0
    %3360 = vmatpush2.bf16.msra.mxu0 0
    %3361 = vmatprep.subr.bf16.mxu0 0
    %3362 = vmatpush2.bf16.msra.mxu0 0
    %3363 = vmatprep.subr.bf16.mxu0 0
    %3364 = vmatpush2.bf16.msra.mxu0 0
    %3365 = vmatprep.mubr.bf16.mxu0 0
    %3366 = vmatmul.mubr.bf16.gmra.mxu0 %v3289
    %v3367 = vpop.f32.mrf.mxu0
    %v3368 = vadd.f32 %v1233, %v3367
    %v3369 = vpop.f32.mrf.mxu0
    %v3370 = vpop.f32.mrf.mxu0
    %v3371 = vadd.f32 %v1233, %v3370
    %v3372 = vpop.f32.mrf.mxu0
    %3373 = vdwg.mxu0
    %v3374 = vpack.c.bf16 %v3268, %v3267
    %3375 = vmatprep.subr.bf16.mxu0 %v1567
    %3376 = vmatpush1.bf16.msra.mxu0 %v1566
    %3377 = vmatprep.subr.bf16.mxu0 %v1564
    %3378 = vmatpush1.bf16.msra.mxu0 %v1563
    %3379 = vmatprep.subr.bf16.mxu0 %v1561
    %3380 = vmatpush1.bf16.msra.mxu0 %v1560
    %3381 = vmatprep.subr.bf16.mxu0 %v1558
    %3382 = vmatpush1.bf16.msra.mxu0 %v1557
    %3383 = vmatprep.subr.bf16.mxu0 %v1555
    %3384 = vmatpush1.bf16.msra.mxu0 %v1554
    %3385 = vmatprep.subr.bf16.mxu0 %v1552
    %3386 = vmatpush1.bf16.msra.mxu0 %v1551
    %3387 = vmatprep.subr.bf16.mxu0 %v1549
    %3388 = vmatpush1.bf16.msra.mxu0 %v1548
    %3389 = vmatprep.subr.bf16.mxu0 %v1546
    %3390 = vmatpush1.bf16.msra.mxu0 %v1545
    %3391 = vmatprep.subr.bf16.mxu0 0
    %3392 = vmatpush2.bf16.msra.mxu0 0
    %3393 = vmatprep.subr.bf16.mxu0 0
    %3394 = vmatpush2.bf16.msra.mxu0 0
    %3395 = vmatprep.subr.bf16.mxu0 0
    %3396 = vmatpush2.bf16.msra.mxu0 0
    %3397 = vmatprep.subr.bf16.mxu0 0
    %3398 = vmatpush2.bf16.msra.mxu0 0
    %3399 = vmatprep.subr.bf16.mxu0 0
    %3400 = vmatpush2.bf16.msra.mxu0 0
    %3401 = vmatprep.subr.bf16.mxu0 0
    %3402 = vmatpush2.bf16.msra.mxu0 0
    %3403 = vmatprep.subr.bf16.mxu0 0
    %3404 = vmatpush2.bf16.msra.mxu0 0
    %3405 = vmatprep.subr.bf16.mxu0 0
    %3406 = vmatpush2.bf16.msra.mxu0 0
    %3407 = vmatprep.mubr.bf16.mxu0 0
    %3408 = vmatmul.mubr.bf16.gmra.mxu0 %v3374
    %v3409 = vpop.f32.mrf.mxu0
    %v3410 = vadd.f32 %v1453, %v3409
    %v3411 = vpop.f32.mrf.mxu0
    %v3412 = vadd.f32 %v1457, %v3411
    %v3413 = vpop.f32.mrf.mxu0
    %v3414 = vadd.f32 %v1453, %v3413
    %v3415 = vpop.f32.mrf.mxu0
    %v3416 = vadd.f32 %v1457, %v3415
    %3417 = vdwg.mxu0
    %3418 = vmatprep.subr.bf16.mxu0 0
    %3419 = vmatpush1.bf16.msra.mxu0 %v1568
    %3420 = vmatprep.subr.bf16.mxu0 0
    %3421 = vmatpush1.bf16.msra.mxu0 %v1565
    %3422 = vmatprep.subr.bf16.mxu0 0
    %3423 = vmatpush1.bf16.msra.mxu0 %v1562
    %3424 = vmatprep.subr.bf16.mxu0 0
    %3425 = vmatpush1.bf16.msra.mxu0 %v1559
    %3426 = vmatprep.subr.bf16.mxu0 0
    %3427 = vmatpush1.bf16.msra.mxu0 %v1556
    %3428 = vmatprep.subr.bf16.mxu0 0
    %3429 = vmatpush1.bf16.msra.mxu0 %v1553
    %3430 = vmatprep.subr.bf16.mxu0 0
    %3431 = vmatpush1.bf16.msra.mxu0 %v1550
    %3432 = vmatprep.subr.bf16.mxu0 0
    %3433 = vmatpush1.bf16.msra.mxu0 %v1547
    %3434 = vmatprep.subr.bf16.mxu0 0
    %3435 = vmatpush2.bf16.msra.mxu0 0
    %3436 = vmatprep.subr.bf16.mxu0 0
    %3437 = vmatpush2.bf16.msra.mxu0 0
    %3438 = vmatprep.subr.bf16.mxu0 0
    %3439 = vmatpush2.bf16.msra.mxu0 0
    %3440 = vmatprep.subr.bf16.mxu0 0
    %3441 = vmatpush2.bf16.msra.mxu0 0
    %3442 = vmatprep.subr.bf16.mxu0 0
    %3443 = vmatpush2.bf16.msra.mxu0 0
    %3444 = vmatprep.subr.bf16.mxu0 0
    %3445 = vmatpush2.bf16.msra.mxu0 0
    %3446 = vmatprep.subr.bf16.mxu0 0
    %3447 = vmatpush2.bf16.msra.mxu0 0
    %3448 = vmatprep.subr.bf16.mxu0 0
    %3449 = vmatpush2.bf16.msra.mxu0 0
    %3450 = vmatprep.mubr.bf16.mxu0 0
    %3451 = vmatmul.mubr.bf16.gmra.mxu0 %v3374
    %v3452 = vpop.f32.mrf.mxu0
    %v3453 = vadd.f32 %v1461, %v3452
    %v3454 = vpop.f32.mrf.mxu0
    %v3455 = vpop.f32.mrf.mxu0
    %v3456 = vadd.f32 %v1461, %v3455
    %v3457 = vpop.f32.mrf.mxu0
    %3458 = vdwg.mxu0
    %v3459 = vadd.f32 %v3273, %v3325
    %v3460 = vadd.f32 %v3276, %v3329
    %v3461 = vxor.u32 %v3459, 2147483648
    %v3462 = vxor.u32 %v3460, 2147483648
    %v3463 = vmul.f32 %v3461, 1.442695
    %v3464 = vpow.pop %v3463
    %v3465 = vmul.f32 %v3462, 1.442695
    %v3466 = vpow.pop %v3465
    %v3467 = vadd.f32 %v3464, 1.0
    %v3468 = vadd.f32 %v3466, 1.0
    %v3469 = vrcp.pop %v3467
    %v3470 = vmul.f32 1.0, %v3469
    %v3471 = vrcp.pop %v3468
    %v3472 = vmul.f32 1.0, %v3471
    %v3473 = vadd.f32 %v3274, %v3327
    %v3474 = vadd.f32 %v3277, %v3331
    %v3475 = vxor.u32 %v3473, 2147483648
    %v3476 = vxor.u32 %v3474, 2147483648
    %v3477 = vmul.f32 %v3475, 1.442695
    %v3478 = vpow.pop %v3477
    %v3479 = vmul.f32 %v3476, 1.442695
    %v3480 = vpow.pop %v3479
    %v3481 = vadd.f32 %v3478, 1.0
    %v3482 = vadd.f32 %v3480, 1.0
    %v3483 = vrcp.pop %v3481
    %v3484 = vmul.f32 1.0, %v3483
    %v3485 = vrcp.pop %v3482
    %v3486 = vmul.f32 1.0, %v3485
    %v3487 = vmul.f32 %v3470, %v3368
    %v3488 = vmul.f32 %v3472, %v3371
    %v3489 = vadd.f32 %v3275, %v3487
    %v3490 = vadd.f32 %v3278, %v3488
    %v3491 = vtanh.pop %v3489
    %v3492 = vtanh.pop %v3490
    %v3493 = vsub.f32 1.0, %v3484
    %v3494 = vsub.f32 1.0, %v3486
    %v3495 = vmul.f32 %v3493, %v3491
    %v3496 = vmul.f32 %v3494, %v3492
    %v3497 = vmul.f32 %v3484, %v3265
    %v3498 = vmul.f32 %v3486, %v3266
    %v3499 = vadd.f32 %v3495, %v3497
    %v3500 = vadd.f32 %v3496, %v3498
    %v3501 = vadd.f32 %v3283, %v3410
    %v3502 = vadd.f32 %v3286, %v3414
    %v3503 = vxor.u32 %v3501, 2147483648
    %v3504 = vxor.u32 %v3502, 2147483648
    %v3505 = vmul.f32 %v3503, 1.442695
    %v3506 = vpow.pop %v3505
    %v3507 = vmul.f32 %v3504, 1.442695
    %v3508 = vpow.pop %v3507
    %v3509 = vadd.f32 %v3506, 1.0
    %v3510 = vadd.f32 %v3508, 1.0
    %v3511 = vrcp.pop %v3509
    %v3512 = vmul.f32 1.0, %v3511
    %v3513 = vrcp.pop %v3510
    %v3514 = vmul.f32 1.0, %v3513
    %v3515 = vadd.f32 %v3284, %v3412
    %v3516 = vadd.f32 %v3287, %v3416
    %v3517 = vxor.u32 %v3515, 2147483648
    %v3518 = vxor.u32 %v3516, 2147483648
    %v3519 = vmul.f32 %v3517, 1.442695
    %v3520 = vpow.pop %v3519
    %v3521 = vmul.f32 %v3518, 1.442695
    %v3522 = vpow.pop %v3521
    %v3523 = vadd.f32 %v3520, 1.0
    %v3524 = vadd.f32 %v3522, 1.0
    %v3525 = vrcp.pop %v3523
    %v3526 = vmul.f32 1.0, %v3525
    %v3527 = vrcp.pop %v3524
    %v3528 = vmul.f32 1.0, %v3527
    %v3529 = vmul.f32 %v3512, %v3453
    %v3530 = vmul.f32 %v3514, %v3456
    %v3531 = vadd.f32 %v3285, %v3529
    %v3532 = vadd.f32 %v3288, %v3530
    %v3533 = vtanh.pop %v3531
    %v3534 = vtanh.pop %v3532
    %v3535 = vsub.f32 1.0, %v3526
    %v3536 = vsub.f32 1.0, %v3528
    %v3537 = vmul.f32 %v3535, %v3533
    %v3538 = vmul.f32 %v3536, %v3534
    %v3539 = vmul.f32 %v3526, %v3267
    %v3540 = vmul.f32 %v3528, %v3268
    %v3541 = vadd.f32 %v3537, %v3539
    %v3542 = vadd.f32 %v3538, %v3540
    %v3543 = vsel %vm2093, %v3499, %v3265
    %v3544 = vsel %vm2094, %v3500, %v3266
    %v3545 = vsel %vm2079, %v3541, %v3267
    %v3546 = vsel %vm2080, %v3542, %v3268
    %v3547 = vld [vmem:[%s1210] sm:$0xff]
    %v3548 = vld [vmem:[%s1210 + $0x8] sm:$0xf]
    %v3549 = vld [vmem:[%s1210 + $0x18] sm:$0xff]
    %v3550 = vld [vmem:[%s1210 + $0x20] sm:$0xf]
    %v3551 = vunpack.c.l.bf16 %v3547
    %v3552 = vunpack.c.h.bf16 %v3547
    %v3553 = vunpack.c.l.bf16 %v3548
    %v3554 = vunpack.c.l.bf16 %v3549
    %v3555 = vunpack.c.h.bf16 %v3549
    %v3556 = vunpack.c.l.bf16 %v3550
    %v3557 = vld [vmem:[%s1197 + $0xc] sm:$0xff]
    %v3558 = vld [vmem:[%s1197 + $0x14] sm:$0xf]
    %v3559 = vld [vmem:[%s1197 + $0x24] sm:$0xff]
    %v3560 = vld [vmem:[%s1197 + $0x2c] sm:$0xf]
    %v3561 = vunpack.c.l.bf16 %v3557
    %v3562 = vunpack.c.h.bf16 %v3557
    %v3563 = vunpack.c.l.bf16 %v3558
    %v3564 = vunpack.c.l.bf16 %v3559
    %v3565 = vunpack.c.h.bf16 %v3559
    %v3566 = vunpack.c.l.bf16 %v3560
    %v3567 = vpack.c.bf16 %v3544, %v3543
    %3568 = vmatprep.subr.bf16.mxu0 %v1339
    %3569 = vmatpush1.bf16.msra.mxu0 %v1338
    %3570 = vmatprep.subr.bf16.mxu0 %v1336
    %3571 = vmatpush1.bf16.msra.mxu0 %v1335
    %3572 = vmatprep.subr.bf16.mxu0 %v1333
    %3573 = vmatpush1.bf16.msra.mxu0 %v1332
    %3574 = vmatprep.subr.bf16.mxu0 %v1330
    %3575 = vmatpush1.bf16.msra.mxu0 %v1329
    %3576 = vmatprep.subr.bf16.mxu0 %v1327
    %3577 = vmatpush1.bf16.msra.mxu0 %v1326
    %3578 = vmatprep.subr.bf16.mxu0 %v1324
    %3579 = vmatpush1.bf16.msra.mxu0 %v1323
    %3580 = vmatprep.subr.bf16.mxu0 %v1321
    %3581 = vmatpush1.bf16.msra.mxu0 %v1320
    %3582 = vmatprep.subr.bf16.mxu0 %v1318
    %3583 = vmatpush1.bf16.msra.mxu0 %v1317
    %3584 = vmatprep.subr.bf16.mxu0 0
    %3585 = vmatpush2.bf16.msra.mxu0 0
    %3586 = vmatprep.subr.bf16.mxu0 0
    %3587 = vmatpush2.bf16.msra.mxu0 0
    %3588 = vmatprep.subr.bf16.mxu0 0
    %3589 = vmatpush2.bf16.msra.mxu0 0
    %3590 = vmatprep.subr.bf16.mxu0 0
    %3591 = vmatpush2.bf16.msra.mxu0 0
    %3592 = vmatprep.subr.bf16.mxu0 0
    %3593 = vmatpush2.bf16.msra.mxu0 0
    %3594 = vmatprep.subr.bf16.mxu0 0
    %3595 = vmatpush2.bf16.msra.mxu0 0
    %3596 = vmatprep.subr.bf16.mxu0 0
    %3597 = vmatpush2.bf16.msra.mxu0 0
    %3598 = vmatprep.subr.bf16.mxu0 0
    %3599 = vmatpush2.bf16.msra.mxu0 0
    %3600 = vmatprep.mubr.bf16.mxu0 0
    %3601 = vmatmul.mubr.bf16.gmra.mxu0 %v3567
    %v3602 = vpop.f32.mrf.mxu0
    %v3603 = vadd.f32 %v1225, %v3602
    %v3604 = vpop.f32.mrf.mxu0
    %v3605 = vadd.f32 %v1229, %v3604
    %v3606 = vpop.f32.mrf.mxu0
    %v3607 = vadd.f32 %v1225, %v3606
    %v3608 = vpop.f32.mrf.mxu0
    %v3609 = vadd.f32 %v1229, %v3608
    %3610 = vdwg.mxu0
    %3611 = vmatprep.subr.bf16.mxu0 0
    %3612 = vmatpush1.bf16.msra.mxu0 %v1340
    %3613 = vmatprep.subr.bf16.mxu0 0
    %3614 = vmatpush1.bf16.msra.mxu0 %v1337
    %3615 = vmatprep.subr.bf16.mxu0 0
    %3616 = vmatpush1.bf16.msra.mxu0 %v1334
    %3617 = vmatprep.subr.bf16.mxu0 0
    %3618 = vmatpush1.bf16.msra.mxu0 %v1331
    %3619 = vmatprep.subr.bf16.mxu0 0
    %3620 = vmatpush1.bf16.msra.mxu0 %v1328
    %3621 = vmatprep.subr.bf16.mxu0 0
    %3622 = vmatpush1.bf16.msra.mxu0 %v1325
    %3623 = vmatprep.subr.bf16.mxu0 0
    %3624 = vmatpush1.bf16.msra.mxu0 %v1322
    %3625 = vmatprep.subr.bf16.mxu0 0
    %3626 = vmatpush1.bf16.msra.mxu0 %v1319
    %3627 = vmatprep.subr.bf16.mxu0 0
    %3628 = vmatpush2.bf16.msra.mxu0 0
    %3629 = vmatprep.subr.bf16.mxu0 0
    %3630 = vmatpush2.bf16.msra.mxu0 0
    %3631 = vmatprep.subr.bf16.mxu0 0
    %3632 = vmatpush2.bf16.msra.mxu0 0
    %3633 = vmatprep.subr.bf16.mxu0 0
    %3634 = vmatpush2.bf16.msra.mxu0 0
    %3635 = vmatprep.subr.bf16.mxu0 0
    %3636 = vmatpush2.bf16.msra.mxu0 0
    %3637 = vmatprep.subr.bf16.mxu0 0
    %3638 = vmatpush2.bf16.msra.mxu0 0
    %3639 = vmatprep.subr.bf16.mxu0 0
    %3640 = vmatpush2.bf16.msra.mxu0 0
    %3641 = vmatprep.subr.bf16.mxu0 0
    %3642 = vmatpush2.bf16.msra.mxu0 0
    %3643 = vmatprep.mubr.bf16.mxu0 0
    %3644 = vmatmul.mubr.bf16.gmra.mxu0 %v3567
    %v3645 = vpop.f32.mrf.mxu0
    %v3646 = vadd.f32 %v1233, %v3645
    %v3647 = vpop.f32.mrf.mxu0
    %v3648 = vpop.f32.mrf.mxu0
    %v3649 = vadd.f32 %v1233, %v3648
    %v3650 = vpop.f32.mrf.mxu0
    %3651 = vdwg.mxu0
    %v3652 = vpack.c.bf16 %v3546, %v3545
    %3653 = vmatprep.subr.bf16.mxu0 %v1567
    %3654 = vmatpush1.bf16.msra.mxu0 %v1566
    %3655 = vmatprep.subr.bf16.mxu0 %v1564
    %3656 = vmatpush1.bf16.msra.mxu0 %v1563
    %3657 = vmatprep.subr.bf16.mxu0 %v1561
    %3658 = vmatpush1.bf16.msra.mxu0 %v1560
    %3659 = vmatprep.subr.bf16.mxu0 %v1558
    %3660 = vmatpush1.bf16.msra.mxu0 %v1557
    %3661 = vmatprep.subr.bf16.mxu0 %v1555
    %3662 = vmatpush1.bf16.msra.mxu0 %v1554
    %3663 = vmatprep.subr.bf16.mxu0 %v1552
    %3664 = vmatpush1.bf16.msra.mxu0 %v1551
    %3665 = vmatprep.subr.bf16.mxu0 %v1549
    %3666 = vmatpush1.bf16.msra.mxu0 %v1548
    %3667 = vmatprep.subr.bf16.mxu0 %v1546
    %3668 = vmatpush1.bf16.msra.mxu0 %v1545
    %3669 = vmatprep.subr.bf16.mxu0 0
    %3670 = vmatpush2.bf16.msra.mxu0 0
    %3671 = vmatprep.subr.bf16.mxu0 0
    %3672 = vmatpush2.bf16.msra.mxu0 0
    %3673 = vmatprep.subr.bf16.mxu0 0
    %3674 = vmatpush2.bf16.msra.mxu0 0
    %3675 = vmatprep.subr.bf16.mxu0 0
    %3676 = vmatpush2.bf16.msra.mxu0 0
    %3677 = vmatprep.subr.bf16.mxu0 0
    %3678 = vmatpush2.bf16.msra.mxu0 0
    %3679 = vmatprep.subr.bf16.mxu0 0
    %3680 = vmatpush2.bf16.msra.mxu0 0
    %3681 = vmatprep.subr.bf16.mxu0 0
    %3682 = vmatpush2.bf16.msra.mxu0 0
    %3683 = vmatprep.subr.bf16.mxu0 0
    %3684 = vmatpush2.bf16.msra.mxu0 0
    %3685 = vmatprep.mubr.bf16.mxu0 0
    %3686 = vmatmul.mubr.bf16.gmra.mxu0 %v3652
    %v3687 = vpop.f32.mrf.mxu0
    %v3688 = vadd.f32 %v1453, %v3687
    %v3689 = vpop.f32.mrf.mxu0
    %v3690 = vadd.f32 %v1457, %v3689
    %v3691 = vpop.f32.mrf.mxu0
    %v3692 = vadd.f32 %v1453, %v3691
    %v3693 = vpop.f32.mrf.mxu0
    %v3694 = vadd.f32 %v1457, %v3693
    %3695 = vdwg.mxu0
    %3696 = vmatprep.subr.bf16.mxu0 0
    %3697 = vmatpush1.bf16.msra.mxu0 %v1568
    %3698 = vmatprep.subr.bf16.mxu0 0
    %3699 = vmatpush1.bf16.msra.mxu0 %v1565
    %3700 = vmatprep.subr.bf16.mxu0 0
    %3701 = vmatpush1.bf16.msra.mxu0 %v1562
    %3702 = vmatprep.subr.bf16.mxu0 0
    %3703 = vmatpush1.bf16.msra.mxu0 %v1559
    %3704 = vmatprep.subr.bf16.mxu0 0
    %3705 = vmatpush1.bf16.msra.mxu0 %v1556
    %3706 = vmatprep.subr.bf16.mxu0 0
    %3707 = vmatpush1.bf16.msra.mxu0 %v1553
    %3708 = vmatprep.subr.bf16.mxu0 0
    %3709 = vmatpush1.bf16.msra.mxu0 %v1550
    %3710 = vmatprep.subr.bf16.mxu0 0
    %3711 = vmatpush1.bf16.msra.mxu0 %v1547
    %3712 = vmatprep.subr.bf16.mxu0 0
    %3713 = vmatpush2.bf16.msra.mxu0 0
    %3714 = vmatprep.subr.bf16.mxu0 0
    %3715 = vmatpush2.bf16.msra.mxu0 0
    %3716 = vmatprep.subr.bf16.mxu0 0
    %3717 = vmatpush2.bf16.msra.mxu0 0
    %3718 = vmatprep.subr.bf16.mxu0 0
    %3719 = vmatpush2.bf16.msra.mxu0 0
    %3720 = vmatprep.subr.bf16.mxu0 0
    %3721 = vmatpush2.bf16.msra.mxu0 0
    %3722 = vmatprep.subr.bf16.mxu0 0
    %3723 = vmatpush2.bf16.msra.mxu0 0
    %3724 = vmatprep.subr.bf16.mxu0 0
    %3725 = vmatpush2.bf16.msra.mxu0 0
    %3726 = vmatprep.subr.bf16.mxu0 0
    %3727 = vmatpush2.bf16.msra.mxu0 0
    %3728 = vmatprep.mubr.bf16.mxu0 0
    %3729 = vmatmul.mubr.bf16.gmra.mxu0 %v3652
    %v3730 = vpop.f32.mrf.mxu0
    %v3731 = vadd.f32 %v1461, %v3730
    %v3732 = vpop.f32.mrf.mxu0
    %v3733 = vpop.f32.mrf.mxu0
    %v3734 = vadd.f32 %v1461, %v3733
    %v3735 = vpop.f32.mrf.mxu0
    %3736 = vdwg.mxu0
    %v3737 = vadd.f32 %v3551, %v3603
    %v3738 = vadd.f32 %v3554, %v3607
    %v3739 = vxor.u32 %v3737, 2147483648
    %v3740 = vxor.u32 %v3738, 2147483648
    %v3741 = vmul.f32 %v3739, 1.442695
    %v3742 = vpow.pop %v3741
    %v3743 = vmul.f32 %v3740, 1.442695
    %v3744 = vpow.pop %v3743
    %v3745 = vadd.f32 %v3742, 1.0
    %v3746 = vadd.f32 %v3744, 1.0
    %v3747 = vrcp.pop %v3745
    %v3748 = vmul.f32 1.0, %v3747
    %v3749 = vrcp.pop %v3746
    %v3750 = vmul.f32 1.0, %v3749
    %v3751 = vadd.f32 %v3552, %v3605
    %v3752 = vadd.f32 %v3555, %v3609
    %v3753 = vxor.u32 %v3751, 2147483648
    %v3754 = vxor.u32 %v3752, 2147483648
    %v3755 = vmul.f32 %v3753, 1.442695
    %v3756 = vpow.pop %v3755
    %v3757 = vmul.f32 %v3754, 1.442695
    %v3758 = vpow.pop %v3757
    %v3759 = vadd.f32 %v3756, 1.0
    %v3760 = vadd.f32 %v3758, 1.0
    %v3761 = vrcp.pop %v3759
    %v3762 = vmul.f32 1.0, %v3761
    %v3763 = vrcp.pop %v3760
    %v3764 = vmul.f32 1.0, %v3763
    %v3765 = vmul.f32 %v3748, %v3646
    %v3766 = vmul.f32 %v3750, %v3649
    %v3767 = vadd.f32 %v3553, %v3765
    %v3768 = vadd.f32 %v3556, %v3766
    %v3769 = vtanh.pop %v3767
    %v3770 = vtanh.pop %v3768
    %v3771 = vsub.f32 1.0, %v3762
    %v3772 = vsub.f32 1.0, %v3764
    %v3773 = vmul.f32 %v3771, %v3769
    %v3774 = vmul.f32 %v3772, %v3770
    %v3775 = vmul.f32 %v3762, %v3543
    %v3776 = vmul.f32 %v3764, %v3544
    %v3777 = vadd.f32 %v3773, %v3775
    %v3778 = vadd.f32 %v3774, %v3776
    %v3779 = vadd.f32 %v3561, %v3688
    %v3780 = vadd.f32 %v3564, %v3692
    %v3781 = vxor.u32 %v3779, 2147483648
    %v3782 = vxor.u32 %v3780, 2147483648
    %v3783 = vmul.f32 %v3781, 1.442695
    %v3784 = vpow.pop %v3783
    %v3785 = vmul.f32 %v3782, 1.442695
    %v3786 = vpow.pop %v3785
    %v3787 = vadd.f32 %v3784, 1.0
    %v3788 = vadd.f32 %v3786, 1.0
    %v3789 = vrcp.pop %v3787
    %v3790 = vmul.f32 1.0, %v3789
    %v3791 = vrcp.pop %v3788
    %v3792 = vmul.f32 1.0, %v3791
    %v3793 = vadd.f32 %v3562, %v3690
    %v3794 = vadd.f32 %v3565, %v3694
    %v3795 = vxor.u32 %v3793, 2147483648
    %v3796 = vxor.u32 %v3794, 2147483648
    %v3797 = vmul.f32 %v3795, 1.442695
    %v3798 = vpow.pop %v3797
    %v3799 = vmul.f32 %v3796, 1.442695
    %v3800 = vpow.pop %v3799
    %v3801 = vadd.f32 %v3798, 1.0
    %v3802 = vadd.f32 %v3800, 1.0
    %v3803 = vrcp.pop %v3801
    %v3804 = vmul.f32 1.0, %v3803
    %v3805 = vrcp.pop %v3802
    %v3806 = vmul.f32 1.0, %v3805
    %v3807 = vmul.f32 %v3790, %v3731
    %v3808 = vmul.f32 %v3792, %v3734
    %v3809 = vadd.f32 %v3563, %v3807
    %v3810 = vadd.f32 %v3566, %v3808
    %v3811 = vtanh.pop %v3809
    %v3812 = vtanh.pop %v3810
    %v3813 = vsub.f32 1.0, %v3804
    %v3814 = vsub.f32 1.0, %v3806
    %v3815 = vmul.f32 %v3813, %v3811
    %v3816 = vmul.f32 %v3814, %v3812
    %v3817 = vmul.f32 %v3804, %v3545
    %v3818 = vmul.f32 %v3806, %v3546
    %v3819 = vadd.f32 %v3815, %v3817
    %v3820 = vadd.f32 %v3816, %v3818
    %v3821 = vsel %vm1785, %v3777, %v3543
    %v3822 = vsel %vm1786, %v3778, %v3544
    %v3823 = vsel %vm1771, %v3819, %v3545
    %v3824 = vsel %vm1772, %v3820, %v3546
    %3825 = vst [vmem:[#allocation9] sm:$0xff] %v3821
    %3826 = vst [vmem:[#allocation9 + $0x8] sm:$0xff] %v3822
    %s3827 = scalar_lea.vmem [#allocation9], 16
    %3828 = vst [vmem:[%s3827] sm:$0xff] %v3823
    %3829 = vst [vmem:[%s3827 + $0x8] sm:$0xff] %v3824
    // Predicated region
    $region38: #{tpu_custom_call.1} parent=1 // pred_check
      _
    $region39: #{tpu_custom_call.1} parent=1 // pred_check_branch
      %3831 = sbr.rel (0) target = $region41
    $region40: #{tpu_custom_call.1} parent=1 // pred_region
      %s3833 = ssub.s32 512, 512
      %3834 = vsyncadd [#allocation5], %s3833
      %s3835 = sshll.u32 [#allocation9], 4
      %s3836 = int_to_ptr.vmem [resolvable:$true] %s3835
      %3841 = dma.vmem_to_hbm [thread:$0]  %s3836, 512, %s6, [#allocation5], 128, 128, 8
    $region41: #{tpu_custom_call.1} parent=1 // pred_fallthru
      _
    // Predicated region
    $region42: #{tpu_custom_call.1} parent=1 // pred_check
      _
    $region43: #{tpu_custom_call.1} parent=1 // pred_check_branch
      %3843 = sbr.rel (0) target = $region45
    $region44: #{tpu_custom_call.1} parent=1 // pred_region
      %3844 = dma.done [#allocation5], 512
    $region45: #{tpu_custom_call.1} parent=1 // pred_fallthru
      _
    %3845 = vsyncpa [#allocation4], 1
    %3846 = vsyncpa [#allocation7], 1
    %3847 = vsyncpa [#allocation5], 1

</llo_original>
